<compile_context>
chip_gen: v7x
topology: tpu7x:2x2x1
jax: 0.10.0
libtpu: 0.0.40
codegen_flags: <defaults>
</compile_context>

<pallas_src>
import math

import jax
import jax.numpy as jnp
import numpy as np
from jax.experimental import pallas as pl
from jax.experimental.pallas import tpu as pltpu


# ---------------------------------------------------------------------------
# Pallas kernel
# ---------------------------------------------------------------------------

def _bessel_kernel(r_ref, expand_ref, freqs_ref, o_ref):
    """One row-tile of the Bessel radial basis.

    r_ref      : (TM, G)      distances, G consecutive distances per output row
    expand_ref : (G, W)       0/1 expansion matrix, E[g, g*n_rbf + j] = 1
    freqs_ref  : (1, W)       freqs tiled G times along the lane axis
    o_ref      : (TM, W)      lane-dense output block, W = G * n_rbf
    """
    r = r_ref[...]                                               # (TM, G) f32
    # Narrow-width safe reciprocal (review item 1): compare/select/divide done at
    # width G, not W = G*n_rbf.
    inv_r = 1.0 / jnp.where(r == 0.0, 1.0, r)                    # (TM, G)

    e = expand_ref[...]                                          # (G, W) 0/1
    # MXU-based lane expansion (exact for a 0/1 matrix, MXU otherwise idle).
    rr = jnp.dot(r, e, preferred_element_type=jnp.float32)       # (TM, W)
    inv_rr = jnp.dot(inv_r, e, preferred_element_type=jnp.float32)

    ax = rr * freqs_ref[...]                                     # (1, W) sublane bcast
    # TODO(synk): v7x-only bounded-range sine (range-reduce + minimax) left out;
    # jnp.sin keeps comfortable margin against the 1e-5 tolerance.
    o_ref[...] = jnp.sin(ax) * inv_rr


# ---------------------------------------------------------------------------
# Wrapper
# ---------------------------------------------------------------------------

def _round_up(x, m):
    return (x + m - 1) // m * m


def bessel_basis(r, freqs, *, tile_rows=256):
    """y[..., j] = sin(r * freqs[j]) / where(r == 0, 1, r).

    r: distances, any shape.  freqs: (n_rbf,).  Returns r.shape + (n_rbf,) in f32.
    """
    n_rbf = int(freqs.shape[0])
    orig_shape = r.shape
    r_flat = jnp.reshape(r, (-1,)).astype(jnp.float32)
    M = int(r_flat.shape[0])

    # ---- Lane-fold factor G (review item 3) -------------------------------
    # g_min is the smallest G making W = G*n_rbf a multiple of 128 (lane-dense
    # output for ANY n_rbf, no masked-store fallback).  Then widen G toward 128
    # (lane-dense input block + full MXU contraction) while capping W so the
    # output block stays modest in VMEM.
    g_min = 128 // math.gcd(n_rbf, 128)
    G = g_min
    while G < 128 and 2 * G * n_rbf <= 2048:
        G *= 2
    W = G * n_rbf

    rows = max(1, -(-M // G))

    # ---- Row tile tm -------------------------------------------------------
    # (a) cap so grid >= 2 when there are >= 2 row tiles of work (v7x megacore),
    # (b) cap so the f32 output block stays <= ~2 MiB (v7x 64 MiB physical /
    #     32 MiB scoped VMEM budget, double-buffered in/out + temporaries).
    tm = min(int(tile_rows), max(8, _round_up(-(-rows // 2), 8)))
    tm = min(tm, max(8, ((2 << 20) // (W * 4)) // 8 * 8))

    rows_p = _round_up(rows, tm)
    pad = rows_p * G - M
    if pad:
        r_flat = jnp.pad(r_flat, (0, pad))   # pad value 0 -> sin(0)*1 = 0, sliced off
    r_rows = r_flat.reshape(rows_p, G)

    # Constant operands: 0/1 expansion matrix and lane-tiled frequencies.
    expand = jnp.asarray(
        np.kron(np.eye(G, dtype=np.float32), np.ones((1, n_rbf), dtype=np.float32))
    )                                                                    # (G, W)
    freqs_tiled = jnp.tile(freqs.astype(jnp.float32), G).reshape(1, W)   # (1, W)

    grid = (rows_p // tm,)
    out = pl.pallas_call(
        _bessel_kernel,
        grid=grid,
        in_specs=[
            pl.BlockSpec((tm, G), lambda i: (i, 0)),
            pl.BlockSpec((G, W), lambda i: (0, 0)),
            pl.BlockSpec((1, W), lambda i: (0, 0)),
        ],
        out_specs=pl.BlockSpec((tm, W), lambda i: (i, 0)),
        out_shape=jax.ShapeDtypeStruct((rows_p, W), jnp.float32),
        compiler_params=pltpu.CompilerParams(
            dimension_semantics=("parallel",),
            vmem_limit_bytes=32 * 1024 * 1024,   # lift v5e's 16 MiB scoped default
        ),
    )(r_rows, expand, freqs_tiled)

    # Contiguous reshapes only (no transpose): (rows_p, G*n_rbf) -> (rows_p*G, n_rbf).
    y = out.reshape(rows_p * G, n_rbf)[:M].reshape(*orig_shape, n_rbf)
    return y


# ---------------------------------------------------------------------------
# Pure-JAX reference (mirrors the torch math literally)
# ---------------------------------------------------------------------------

def bessel_reference(r, freqs):
    r32 = r.astype(jnp.float32)
    ax = r32[..., None] * freqs.astype(jnp.float32)
    norm = jnp.where(r32 == 0.0, 1.0, r32)
    return jnp.sin(ax) / norm[..., None]


# ---------------------------------------------------------------------------
# Main
# ---------------------------------------------------------------------------

if __name__ == "__main__":
    cutoff, n_rbf = 5.0, 16
    freqs = jnp.arange(1, n_rbf + 1, dtype=jnp.float32) * math.pi / cutoff
    # `widths` buffer of the module is unused in forward; omitted on purpose.

    key = jax.random.PRNGKey(0)
    k1, k2 = jax.random.split(key)

    # Edge distances r_ij: (batch, nodes, neighbors).
    r_a = jax.random.uniform(k1, (2, 64, 16), jnp.float32, 0.0, 6.0)
    r_a = r_a.at[0, 0, 0].set(0.0)   # exercise the r == 0 safe-divide path
    # Non-aligned size to exercise the padding / slicing path.
    r_b = jax.random.uniform(k2, (2, 7, 5), jnp.float32, 0.0, 6.0)

    cases = [
        ("r_a", r_a, dict()),   # rows=16 -> grid of 2 "parallel" row tiles
        ("r_b", r_b, dict()),   # single padded tile
    ]
    for name, r_in, kw in cases:
        y = bessel_basis(r_in, freqs, **kw)
        jax.block_until_ready(y)
        y_ref = bessel_reference(r_in, freqs)
        err = float(jnp.max(jnp.abs(y - y_ref)))
        if not (err <= 1e-5):
            raise AssertionError(f"{name}: max abs err {err}")

    print("KERNEL_OK")
</pallas_src>

<mosaic_0001>
module attributes {stable_mosaic.version = 11 : i64} {
  func.func @_bessel_kernel(%arg0: i32, %arg1: memref<8x128xf32, #tpu.memory_space<vmem>>, %arg2: memref<128x2048xf32, #tpu.memory_space<vmem>>, %arg3: memref<1x2048xf32, #tpu.memory_space<vmem>>, %arg4: memref<8x2048xf32, #tpu.memory_space<vmem>>) attributes {dimension_semantics = [#tpu.dimension_semantics<parallel>], iteration_bounds = array<i64: 2>, scalar_prefetch = 0 : i64, scratch_operands = 0 : i64, tpu.core_type = #tpu.core_type<tc>, window_params = [{transform_indices = @transform_0, window_bounds = array<i64: 8, 128>}, {pipeline_mode = #tpu.pipeline_mode<synchronous>, transform_indices = @transform_1, window_bounds = array<i64: 128, 2048>}, {pipeline_mode = #tpu.pipeline_mode<synchronous>, transform_indices = @transform_2, window_bounds = array<i64: 1, 2048>}, {transform_indices = @transform_3, window_bounds = array<i64: 8, 2048>}]} {
    %c0 = arith.constant 0 : index
    %c0_0 = arith.constant 0 : index
    %0 = vector.load %arg1[%c0, %c0_0] : memref<8x128xf32, #tpu.memory_space<vmem>>, vector<8x128xf32>
    %cst = arith.constant 0.000000e+00 : f32
    %1 = vector.broadcast %cst : f32 to vector<8x128xf32>
    %2 = arith.cmpf oeq, %0, %1 : vector<8x128xf32>
    %cst_1 = arith.constant 1.000000e+00 : f32
    %3 = vector.broadcast %cst_1 : f32 to vector<8x128xf32>
    %4 = arith.select %2, %3, %0 : vector<8x128xi1>, vector<8x128xf32>
    %cst_2 = arith.constant 1.000000e+00 : f32
    %5 = vector.broadcast %cst_2 : f32 to vector<8x128xf32>
    %6 = arith.divf %5, %4 : vector<8x128xf32>
    %c0_3 = arith.constant 0 : index
    %c0_4 = arith.constant 0 : index
    %7 = vector.load %arg2[%c0_3, %c0_4] : memref<128x2048xf32, #tpu.memory_space<vmem>>, vector<128x2048xf32>
    %cst_5 = arith.constant dense<0.000000e+00> : vector<8x2048xf32>
    %8 = tpu.matmul %0, %7, %cst_5 {dimension_numbers = #tpu.dot_dimension_numbers<[1], [0], [0], [1], [0, 0, 1, 1], [], []>} : vector<8x128xf32>, vector<128x2048xf32>, vector<8x2048xf32> -> vector<8x2048xf32>
    %cst_6 = arith.constant dense<0.000000e+00> : vector<8x2048xf32>
    %9 = tpu.matmul %6, %7, %cst_6 {dimension_numbers = #tpu.dot_dimension_numbers<[1], [0], [0], [1], [0, 0, 1, 1], [], []>} : vector<8x128xf32>, vector<128x2048xf32>, vector<8x2048xf32> -> vector<8x2048xf32>
    %c0_7 = arith.constant 0 : index
    %c0_8 = arith.constant 0 : index
    %10 = vector.load %arg3[%c0_7, %c0_8] : memref<1x2048xf32, #tpu.memory_space<vmem>>, vector<1x2048xf32>
    %11 = vector.broadcast %10 : vector<1x2048xf32> to vector<8x2048xf32>
    %12 = arith.mulf %8, %11 : vector<8x2048xf32>
    %13 = math.sin %12 : vector<8x2048xf32>
    %14 = arith.mulf %13, %9 : vector<8x2048xf32>
    %c0_9 = arith.constant 0 : index
    %c0_10 = arith.constant 0 : index
    %15 = vector.load %arg4[%c0_9, %c0_10] : memref<8x2048xf32, #tpu.memory_space<vmem>>, vector<8x2048xf32>
    tpu.vector_store %arg4[%c0_9, %c0_10], %14 {strides = array<i32>} : memref<8x2048xf32, #tpu.memory_space<vmem>>, vector<8x2048xf32>,
    return
  }
  func.func @transform_0(%arg0: i32) -> (i32, i32) {
    %c0_i32 = arith.constant 0 : i32
    %c0_i32_0 = arith.constant 0 : i32
    return %arg0, %c0_i32 : i32, i32
  }
  func.func @transform_1(%arg0: i32) -> (i32, i32) {
    %c0_i32 = arith.constant 0 : i32
    %c0_i32_0 = arith.constant 0 : i32
    %c0_i32_1 = arith.constant 0 : i32
    return %c0_i32, %c0_i32_0 : i32, i32
  }
  func.func @transform_2(%arg0: i32) -> (i32, i32) {
    %c0_i32 = arith.constant 0 : i32
    %c0_i32_0 = arith.constant 0 : i32
    %c0_i32_1 = arith.constant 0 : i32
    return %c0_i32, %c0_i32_0 : i32, i32
  }
  func.func @transform_3(%arg0: i32) -> (i32, i32) {
    %c0_i32 = arith.constant 0 : i32
    %c0_i32_0 = arith.constant 0 : i32
    return %arg0, %c0_i32 : i32, i32
  }
}

</mosaic_0001>

<llo_original>
// kernel: tpu_custom_call.1
$region0: #{tpu_custom_call.1}
  #allocation0 [shape = 'u32[]', space=smem, size = 0x4, offset = 0x4, fixed_abs, tag = 'smem constant byte address 0x4 - core index']
  #allocation1 [shape = 'u32[144,128]{1,0:T(1,128)}', space=vmem, size = 0x12000, scoped, tag = 'internal scratch']
  %s0 = inlined_call_operand.hbm [shape: f32[16,128], index: 0, kind: input, shape index: {}]
  %s1 = inlined_call_operand.hbm [shape: f32[128,2048], index: 1, kind: input, shape index: {}]
  %s2 = inlined_call_operand.hbm [shape: f32[1,2048], index: 2, kind: input, shape index: {}]
  %s3 = inlined_call_operand.hbm [shape: f32[16,2048], index: 3, kind: output, shape index: {}]
  %s4 = sld [smem:[#allocation0]]
  $region57: #{tpu_custom_call.1} parent=0
    _
  %s6 = ssub.s32 1, %s4
  %s7 = scalar_select 0, %s6, %s4
  $region1: #{tpu_custom_call.1} parent=0
    #allocation2 [shape = 'u8[8192]{0}', space=vmem, size = 0x2000, scoped, tag = 'input window, operand 0']
    #allocation3 [shape = 's32[2]{0}', space=sflag, size = 0x8, scoped, tag = 'scoped memory for tpu_custom_call.1']
    #allocation4 [shape = 's32[2]{0}', space=sflag, size = 0x8, scoped, tag = 'scoped memory for tpu_custom_call.1']
    #allocation5 [shape = 'u8[1048576]{0}', space=vmem, size = 0x100000, scoped, tag = 'input window, operand 1, single buffered']
    #allocation6 [shape = 's32[1]{0}', space=sflag, size = 0x4, scoped, tag = 'scoped memory for tpu_custom_call.1']
    #allocation7 [shape = 'u8[8192]{0}', space=vmem, size = 0x2000, scoped, tag = 'input window, operand 2, single buffered']
    #allocation8 [shape = 'u8[131072]{0}', space=vmem, size = 0x20000, scoped, tag = 'output window, operand 0']
    %8 = vsyncpa [#allocation3], 0
    %s9 = scalar_lea.sflag [#allocation3], 1
    %10 = vsyncpa %s9, 0
    %11 = vsyncpa [#allocation6], 0
    %12 = vsyncpa [#allocation4], 0
    %s13 = scalar_lea.sflag [#allocation4], 1
    %14 = vsyncpa %s13, 0
    loop: start=0, step=1, limit=4
    $region2: #{tpu_custom_call.1} parent=1 // loop_pre_header
      _
    $region3: #{tpu_custom_call.1} parent=1 // loop_header
      %s16 = sphi 0, %s20
      %p17 = scmp.ge.s32.totalorder %s16, 4
      %s26 = sphi 0, %s28
      %s29 = sphi 0, %s26
      %s30 = sphi 0, %s29
      %s46 = sphi 0, %s30
      %s50 = sphi 0, %s50
      %s52 = sphi 0, %s50
      %s53 = sphi 0, %s52
      %s67 = sphi 0, %s53
      %s71 = sphi 0, %s71
      %s73 = sphi 0, %s71
      %s74 = sphi 0, %s73
      %s88 = sphi 0, %s74
      %s94 = sphi 0, %s96
      %s97 = sphi 0, %s94
      %s98 = sphi 0, %s97
      %s114 = sphi 0, %s98
    $region4: #{tpu_custom_call.1} parent=1 // loop_header_branch
      %19 = sbr.rel (%p17) target = $region8
    $region5: #{tpu_custom_call.1} parent=1 // loop_body
      %s21 = ssub.s32 %s16, 1
      %s22 = ssub.s32 %s16, 2
      %s23 = sadd.s32 %s16, 1
      %s24 = ssub.s32 %s16, %s23
      %p25 = scmp.eq.s32.totalorder %s24, 0
      %s27 = sadd.s32 %s26, 1
      %s28 = scalar_select %p25, %s26, %s27
      %p31 = pneg %p25
      %p32 = scmp.eq.s32.totalorder %s16, 1
      %p33 = por %p31, %p32
      %p34 = scmp.ne.s32.totalorder %s26, %s29
      %p35 = scmp.eq.s32.totalorder %s16, 0
      %p36 = por %p34, %p35
      %p37 = scmp.ne.s32.totalorder %s26, %s29
      %p38 = scmp.eq.s32.totalorder %s21, 1
      %p39 = por %p37, %p38
      %p40 = scmp.ne.s32.totalorder %s29, %s30
      %p41 = scmp.eq.s32.totalorder %s21, 0
      %p42 = por %p40, %p41
      %p43 = scmp.ne.s32.totalorder %s29, %s30
      %p44 = scmp.eq.s32.totalorder %s22, 1
      %p45 = por %p43, %p44
      %p47 = scmp.ne.s32.totalorder %s30, %s46
      %p48 = scmp.eq.s32.totalorder %s22, 0
      %p49 = por %p47, %p48
      %s51 = sadd.s32 %s50, 1
      %p54 = scmp.eq.s32.totalorder %s16, 1
      %p55 = scmp.ne.s32.totalorder %s50, %s52
      %p56 = scmp.eq.s32.totalorder %s16, 0
      %p57 = por %p55, %p56
      %p58 = scmp.ne.s32.totalorder %s50, %s52
      %p59 = scmp.eq.s32.totalorder %s21, 1
      %p60 = por %p58, %p59
      %p61 = scmp.ne.s32.totalorder %s52, %s53
      %p62 = scmp.eq.s32.totalorder %s21, 0
      %p63 = por %p61, %p62
      %p64 = scmp.ne.s32.totalorder %s52, %s53
      %p65 = scmp.eq.s32.totalorder %s22, 1
      %p66 = por %p64, %p65
      %p68 = scmp.ne.s32.totalorder %s53, %s67
      %p69 = scmp.eq.s32.totalorder %s22, 0
      %p70 = por %p68, %p69
      %s72 = sadd.s32 %s71, 1
      %p75 = scmp.eq.s32.totalorder %s16, 1
      %p76 = scmp.ne.s32.totalorder %s71, %s73
      %p77 = scmp.eq.s32.totalorder %s16, 0
      %p78 = por %p76, %p77
      %p79 = scmp.ne.s32.totalorder %s71, %s73
      %p80 = scmp.eq.s32.totalorder %s21, 1
      %p81 = por %p79, %p80
      %p82 = scmp.ne.s32.totalorder %s73, %s74
      %p83 = scmp.eq.s32.totalorder %s21, 0
      %p84 = por %p82, %p83
      %p85 = scmp.ne.s32.totalorder %s73, %s74
      %p86 = scmp.eq.s32.totalorder %s22, 1
      %p87 = por %p85, %p86
      %p89 = scmp.ne.s32.totalorder %s74, %s88
      %p90 = scmp.eq.s32.totalorder %s22, 0
      %p91 = por %p89, %p90
      %s92 = ssub.s32 %s16, %s23
      %p93 = scmp.eq.s32.totalorder %s92, 0
      %s95 = sadd.s32 %s94, 1
      %s96 = scalar_select %p93, %s94, %s95
      %p99 = pneg %p93
      %p100 = scmp.eq.s32.totalorder %s16, 1
      %p101 = por %p99, %p100
      %p102 = scmp.ne.s32.totalorder %s94, %s97
      %p103 = scmp.eq.s32.totalorder %s16, 0
      %p104 = por %p102, %p103
      %p105 = scmp.ne.s32.totalorder %s94, %s97
      %p106 = scmp.eq.s32.totalorder %s21, 1
      %p107 = por %p105, %p106
      %p108 = scmp.ne.s32.totalorder %s97, %s98
      %p109 = scmp.eq.s32.totalorder %s21, 0
      %p110 = por %p108, %p109
      %p111 = scmp.ne.s32.totalorder %s97, %s98
      %p112 = scmp.eq.s32.totalorder %s22, 1
      %p113 = por %p111, %p112
      %p115 = scmp.ne.s32.totalorder %s98, %s114
      %p116 = scmp.eq.s32.totalorder %s22, 0
      %p117 = por %p115, %p116
      %p118 = scmp.le.s32.totalorder 1, %s16
      %p119 = scmp.lt.s32.totalorder %s16, 3
      %p120 = pnand %p118, %p119
      %p121 = pneg %p120
      // Predicated region
      $region9: #{tpu_custom_call.1} parent=5 // pred_check
        _
      $region10: #{tpu_custom_call.1} parent=5 // pred_check_branch
        %123 = sbr.rel (%p120) target = $region12
      $region11: #{tpu_custom_call.1} parent=5 // pred_region
        %s124 = ssub.s32 %s16, 1
        // Predicated region
        $region13: #{tpu_custom_call.1} parent=11 // pred_check
          %p125 = pneg %p63
        $region14: #{tpu_custom_call.1} parent=11 // pred_check_branch
          %127 = sbr.rel (%p125) target = $region16
        $region15: #{tpu_custom_call.1} parent=11 // pred_region
          %s129 = ssub.s32 32768, 32768
          %130 = vsyncadd [#allocation6], %s129
          %s131 = sshll.u32 [#allocation5], 4
          %s132 = int_to_ptr.vmem [resolvable:$true] %s131
          %137 = dma.hbm_to_vmem [thread:$0]  %s1, 32768, %s132, [#allocation6], 2048, 2048, 128
        $region16: #{tpu_custom_call.1} parent=11 // pred_fallthru
          _
        // Predicated region
        $region17: #{tpu_custom_call.1} parent=11 // pred_check
          %p138 = pneg %p84
        $region18: #{tpu_custom_call.1} parent=11 // pred_check_branch
          %140 = sbr.rel (%p138) target = $region20
        $region19: #{tpu_custom_call.1} parent=11 // pred_region
          %s142 = ssub.s32 256, 256
          %143 = vsyncadd [#allocation6], %s142
          %s145 = sshll.u32 [#allocation7], 4
          %s146 = int_to_ptr.vmem [resolvable:$true] %s145
          %148 = dma.hbm_to_vmem [thread:$0]  %s2, 256, %s146, [#allocation6]
        $region20: #{tpu_custom_call.1} parent=11 // pred_fallthru
          _
      $region12: #{tpu_custom_call.1} parent=5 // pred_fallthru
        _
      %p149 = scmp.lt.s32.totalorder %s16, 2
      // Predicated region
      $region21: #{tpu_custom_call.1} parent=5 // pred_check
        %p150 = pneg %p149
      $region22: #{tpu_custom_call.1} parent=5 // pred_check_branch
        %152 = sbr.rel (%p150) target = $region24
      $region23: #{tpu_custom_call.1} parent=5 // pred_region
        // Predicated region
        $region25: #{tpu_custom_call.1} parent=23 // pred_check
          %p153 = pneg %p36
        $region26: #{tpu_custom_call.1} parent=23 // pred_check_branch
          %155 = sbr.rel (%p153) target = $region28
        $region27: #{tpu_custom_call.1} parent=23 // pred_region
          %s156 = sand.u32 %s26, 1
          %s157 = scalar_lea.sflag [#allocation3], %s156
          %s158 = sand.u32 %s26, 1
          %s159 = smul.addr %s158, 8
          %s160 = scalar_lea.vmem [#allocation2], %s159
          %s162 = ssub.s32 128, 128
          %163 = vsyncadd %s157, %s162
          %s164 = smul.addr %s16, 128
          %s165 = scalar_lea.hbm %s0, %s164
          %s167 = sshll.u32 %s160, 4
          %s168 = int_to_ptr.vmem [resolvable:$true] %s167
          %170 = dma.hbm_to_vmem [thread:$0]  %s165, 128, %s168, %s157
        $region28: #{tpu_custom_call.1} parent=23 // pred_fallthru
          _
      $region24: #{tpu_custom_call.1} parent=5 // pred_fallthru
        _
      %p171 = scmp.le.s32.totalorder 1, %s16
      %p172 = scmp.lt.s32.totalorder %s16, 3
      %p173 = pnand %p171, %p172
      %p174 = pneg %p173
      // Predicated region
      $region29: #{tpu_custom_call.1} parent=5 // pred_check
        _
      $region30: #{tpu_custom_call.1} parent=5 // pred_check_branch
        %176 = sbr.rel (%p173) target = $region32
      $region31: #{tpu_custom_call.1} parent=5 // pred_region
        %s177 = ssub.s32 %s16, 1
        %s178 = sand.u32 %s29, 1
        %s179 = scalar_lea.sflag [#allocation3], %s178
        %s180 = sand.u32 %s29, 1
        %s181 = smul.addr %s180, 8
        %s182 = scalar_lea.vmem [#allocation2], %s181
        // Predicated region
        $region33: #{tpu_custom_call.1} parent=31 // pred_check
          %p183 = pneg %p42
        $region34: #{tpu_custom_call.1} parent=31 // pred_check_branch
          %185 = sbr.rel (%p183) target = $region36
        $region35: #{tpu_custom_call.1} parent=31 // pred_region
          %186 = dma.done %s179, 128
        $region36: #{tpu_custom_call.1} parent=31 // pred_fallthru
          _
        // Predicated region
        $region37: #{tpu_custom_call.1} parent=31 // pred_check
          %p187 = pneg %p63
        $region38: #{tpu_custom_call.1} parent=31 // pred_check_branch
          %189 = sbr.rel (%p187) target = $region40
        $region39: #{tpu_custom_call.1} parent=31 // pred_region
          %190 = dma.done [#allocation6], 32768
        $region40: #{tpu_custom_call.1} parent=31 // pred_fallthru
          _
        // Predicated region
        $region41: #{tpu_custom_call.1} parent=31 // pred_check
          %p191 = pneg %p84
        $region42: #{tpu_custom_call.1} parent=31 // pred_check_branch
          %193 = sbr.rel (%p191) target = $region44
        $region43: #{tpu_custom_call.1} parent=31 // pred_region
          %194 = dma.done [#allocation6], 256
        $region44: #{tpu_custom_call.1} parent=31 // pred_fallthru
          _
        %s195 = sand.u32 %s29, 1
        %s196 = scalar_lea.sflag [#allocation3], %s195
        %s197 = sand.u32 %s29, 1
        %s198 = smul.addr %s197, 8
        %s199 = scalar_lea.vmem [#allocation2], %s198
        %p200 = pneg %p42
        %p201 = pneg %p39
        %p202 = pneg %p63
        %p203 = pneg %p60
        %p204 = pneg %p84
        %p205 = pneg %p81
        %p206 = pneg %p110
        %p207 = pneg %p107
        %s208 = sand.u32 %s97, 1
        %s209 = scalar_lea.sflag [#allocation4], %s208
        %s210 = sand.u32 %s97, 1
        %s211 = smul.addr %s210, 128
        %s212 = scalar_lea.vmem [#allocation8], %s211
        %v213 = vld [vmem:[%s182] sm:$0xff]
        %vm214 = vcmp.eq.f32.partialorder %v213, 0.0
        %v215 = vsel %vm214, 1.0, %v213
        %v216 = vrcp.pop %v215
        %v217 = vmul.f32 1.0, %v216
        %v218 = vld [vmem:[#allocation5] sm:$0xff]
        %v219 = vld [vmem:[#allocation5 + $0x8] sm:$0xff]
        %v220 = vld [vmem:[#allocation5 + $0x10] sm:$0xff]
        %v221 = vld [vmem:[#allocation5 + $0x18] sm:$0xff]
        %v222 = vld [vmem:[#allocation5 + $0x20] sm:$0xff]
        %v223 = vld [vmem:[#allocation5 + $0x28] sm:$0xff]
        %v224 = vld [vmem:[#allocation5 + $0x30] sm:$0xff]
        %v225 = vld [vmem:[#allocation5 + $0x38] sm:$0xff]
        %v226 = vld [vmem:[#allocation5 + $0x40] sm:$0xff]
        %v227 = vld [vmem:[#allocation5 + $0x48] sm:$0xff]
        %v228 = vld [vmem:[#allocation5 + $0x50] sm:$0xff]
        %v229 = vld [vmem:[#allocation5 + $0x58] sm:$0xff]
        %v230 = vld [vmem:[#allocation5 + $0x60] sm:$0xff]
        %v231 = vld [vmem:[#allocation5 + $0x68] sm:$0xff]
        %v232 = vld [vmem:[#allocation5 + $0x70] sm:$0xff]
        %v233 = vld [vmem:[#allocation5 + $0x78] sm:$0xff]
        %v234 = vld [vmem:[#allocation5 + $0x80] sm:$0xff]
        %v235 = vld [vmem:[#allocation5 + $0x88] sm:$0xff]
        %v236 = vld [vmem:[#allocation5 + $0x90] sm:$0xff]
        %v237 = vld [vmem:[#allocation5 + $0x98] sm:$0xff]
        %v238 = vld [vmem:[#allocation5 + $0xa0] sm:$0xff]
        %v239 = vld [vmem:[#allocation5 + $0xa8] sm:$0xff]
        %v240 = vld [vmem:[#allocation5 + $0xb0] sm:$0xff]
        %v241 = vld [vmem:[#allocation5 + $0xb8] sm:$0xff]
        %v242 = vld [vmem:[#allocation5 + $0xc0] sm:$0xff]
        %v243 = vld [vmem:[#allocation5 + $0xc8] sm:$0xff]
        %v244 = vld [vmem:[#allocation5 + $0xd0] sm:$0xff]
        %v245 = vld [vmem:[#allocation5 + $0xd8] sm:$0xff]
        %v246 = vld [vmem:[#allocation5 + $0xe0] sm:$0xff]
        %v247 = vld [vmem:[#allocation5 + $0xe8] sm:$0xff]
        %v248 = vld [vmem:[#allocation5 + $0xf0] sm:$0xff]
        %v249 = vld [vmem:[#allocation5 + $0xf8] sm:$0xff]
        %v250 = vld [vmem:[#allocation5 + $0x100] sm:$0xff]
        %v251 = vld [vmem:[#allocation5 + $0x108] sm:$0xff]
        %v252 = vld [vmem:[#allocation5 + $0x110] sm:$0xff]
        %v253 = vld [vmem:[#allocation5 + $0x118] sm:$0xff]
        %v254 = vld [vmem:[#allocation5 + $0x120] sm:$0xff]
        %v255 = vld [vmem:[#allocation5 + $0x128] sm:$0xff]
        %v256 = vld [vmem:[#allocation5 + $0x130] sm:$0xff]
        %v257 = vld [vmem:[#allocation5 + $0x138] sm:$0xff]
        %v258 = vld [vmem:[#allocation5 + $0x140] sm:$0xff]
        %v259 = vld [vmem:[#allocation5 + $0x148] sm:$0xff]
        %v260 = vld [vmem:[#allocation5 + $0x150] sm:$0xff]
        %v261 = vld [vmem:[#allocation5 + $0x158] sm:$0xff]
        %v262 = vld [vmem:[#allocation5 + $0x160] sm:$0xff]
        %v263 = vld [vmem:[#allocation5 + $0x168] sm:$0xff]
        %v264 = vld [vmem:[#allocation5 + $0x170] sm:$0xff]
        %v265 = vld [vmem:[#allocation5 + $0x178] sm:$0xff]
        %v266 = vld [vmem:[#allocation5 + $0x180] sm:$0xff]
        %v267 = vld [vmem:[#allocation5 + $0x188] sm:$0xff]
        %v268 = vld [vmem:[#allocation5 + $0x190] sm:$0xff]
        %v269 = vld [vmem:[#allocation5 + $0x198] sm:$0xff]
        %v270 = vld [vmem:[#allocation5 + $0x1a0] sm:$0xff]
        %v271 = vld [vmem:[#allocation5 + $0x1a8] sm:$0xff]
        %v272 = vld [vmem:[#allocation5 + $0x1b0] sm:$0xff]
        %v273 = vld [vmem:[#allocation5 + $0x1b8] sm:$0xff]
        %v274 = vld [vmem:[#allocation5 + $0x1c0] sm:$0xff]
        %v275 = vld [vmem:[#allocation5 + $0x1c8] sm:$0xff]
        %v276 = vld [vmem:[#allocation5 + $0x1d0] sm:$0xff]
        %v277 = vld [vmem:[#allocation5 + $0x1d8] sm:$0xff]
        %v278 = vld [vmem:[#allocation5 + $0x1e0] sm:$0xff]
        %v279 = vld [vmem:[#allocation5 + $0x1e8] sm:$0xff]
        %v280 = vld [vmem:[#allocation5 + $0x1f0] sm:$0xff]
        %v281 = vld [vmem:[#allocation5 + $0x1f8] sm:$0xff]
        %v282 = vld [vmem:[#allocation5 + $0x200] sm:$0xff]
        %v283 = vld [vmem:[#allocation5 + $0x208] sm:$0xff]
        %v284 = vld [vmem:[#allocation5 + $0x210] sm:$0xff]
        %v285 = vld [vmem:[#allocation5 + $0x218] sm:$0xff]
        %v286 = vld [vmem:[#allocation5 + $0x220] sm:$0xff]
        %v287 = vld [vmem:[#allocation5 + $0x228] sm:$0xff]
        %v288 = vld [vmem:[#allocation5 + $0x230] sm:$0xff]
        %v289 = vld [vmem:[#allocation5 + $0x238] sm:$0xff]
        %v290 = vld [vmem:[#allocation5 + $0x240] sm:$0xff]
        %v291 = vld [vmem:[#allocation5 + $0x248] sm:$0xff]
        %v292 = vld [vmem:[#allocation5 + $0x250] sm:$0xff]
        %v293 = vld [vmem:[#allocation5 + $0x258] sm:$0xff]
        %v294 = vld [vmem:[#allocation5 + $0x260] sm:$0xff]
        %v295 = vld [vmem:[#allocation5 + $0x268] sm:$0xff]
        %v296 = vld [vmem:[#allocation5 + $0x270] sm:$0xff]
        %v297 = vld [vmem:[#allocation5 + $0x278] sm:$0xff]
        %v298 = vld [vmem:[#allocation5 + $0x280] sm:$0xff]
        %v299 = vld [vmem:[#allocation5 + $0x288] sm:$0xff]
        %v300 = vld [vmem:[#allocation5 + $0x290] sm:$0xff]
        %v301 = vld [vmem:[#allocation5 + $0x298] sm:$0xff]
        %v302 = vld [vmem:[#allocation5 + $0x2a0] sm:$0xff]
        %v303 = vld [vmem:[#allocation5 + $0x2a8] sm:$0xff]
        %v304 = vld [vmem:[#allocation5 + $0x2b0] sm:$0xff]
        %v305 = vld [vmem:[#allocation5 + $0x2b8] sm:$0xff]
        %v306 = vld [vmem:[#allocation5 + $0x2c0] sm:$0xff]
        %v307 = vld [vmem:[#allocation5 + $0x2c8] sm:$0xff]
        %v308 = vld [vmem:[#allocation5 + $0x2d0] sm:$0xff]
        %v309 = vld [vmem:[#allocation5 + $0x2d8] sm:$0xff]
        %v310 = vld [vmem:[#allocation5 + $0x2e0] sm:$0xff]
        %v311 = vld [vmem:[#allocation5 + $0x2e8] sm:$0xff]
        %v312 = vld [vmem:[#allocation5 + $0x2f0] sm:$0xff]
        %v313 = vld [vmem:[#allocation5 + $0x2f8] sm:$0xff]
        %v314 = vld [vmem:[#allocation5 + $0x300] sm:$0xff]
        %v315 = vld [vmem:[#allocation5 + $0x308] sm:$0xff]
        %v316 = vld [vmem:[#allocation5 + $0x310] sm:$0xff]
        %v317 = vld [vmem:[#allocation5 + $0x318] sm:$0xff]
        %v318 = vld [vmem:[#allocation5 + $0x320] sm:$0xff]
        %v319 = vld [vmem:[#allocation5 + $0x328] sm:$0xff]
        %v320 = vld [vmem:[#allocation5 + $0x330] sm:$0xff]
        %v321 = vld [vmem:[#allocation5 + $0x338] sm:$0xff]
        %v322 = vld [vmem:[#allocation5 + $0x340] sm:$0xff]
        %v323 = vld [vmem:[#allocation5 + $0x348] sm:$0xff]
        %v324 = vld [vmem:[#allocation5 + $0x350] sm:$0xff]
        %v325 = vld [vmem:[#allocation5 + $0x358] sm:$0xff]
        %v326 = vld [vmem:[#allocation5 + $0x360] sm:$0xff]
        %v327 = vld [vmem:[#allocation5 + $0x368] sm:$0xff]
        %v328 = vld [vmem:[#allocation5 + $0x370] sm:$0xff]
        %v329 = vld [vmem:[#allocation5 + $0x378] sm:$0xff]
        %v330 = vld [vmem:[#allocation5 + $0x380] sm:$0xff]
        %v331 = vld [vmem:[#allocation5 + $0x388] sm:$0xff]
        %v332 = vld [vmem:[#allocation5 + $0x390] sm:$0xff]
        %v333 = vld [vmem:[#allocation5 + $0x398] sm:$0xff]
        %v334 = vld [vmem:[#allocation5 + $0x3a0] sm:$0xff]
        %v335 = vld [vmem:[#allocation5 + $0x3a8] sm:$0xff]
        %v336 = vld [vmem:[#allocation5 + $0x3b0] sm:$0xff]
        %v337 = vld [vmem:[#allocation5 + $0x3b8] sm:$0xff]
        %v338 = vld [vmem:[#allocation5 + $0x3c0] sm:$0xff]
        %v339 = vld [vmem:[#allocation5 + $0x3c8] sm:$0xff]
        %v340 = vld [vmem:[#allocation5 + $0x3d0] sm:$0xff]
        %v341 = vld [vmem:[#allocation5 + $0x3d8] sm:$0xff]
        %v342 = vld [vmem:[#allocation5 + $0x3e0] sm:$0xff]
        %v343 = vld [vmem:[#allocation5 + $0x3e8] sm:$0xff]
        %v344 = vld [vmem:[#allocation5 + $0x3f0] sm:$0xff]
        %v345 = vld [vmem:[#allocation5 + $0x3f8] sm:$0xff]
        %v346 = vld [vmem:[#allocation5 + $0x400] sm:$0xff]
        %v347 = vld [vmem:[#allocation5 + $0x408] sm:$0xff]
        %v348 = vld [vmem:[#allocation5 + $0x410] sm:$0xff]
        %v349 = vld [vmem:[#allocation5 + $0x418] sm:$0xff]
        %v350 = vld [vmem:[#allocation5 + $0x420] sm:$0xff]
        %v351 = vld [vmem:[#allocation5 + $0x428] sm:$0xff]
        %v352 = vld [vmem:[#allocation5 + $0x430] sm:$0xff]
        %v353 = vld [vmem:[#allocation5 + $0x438] sm:$0xff]
        %v354 = vld [vmem:[#allocation5 + $0x440] sm:$0xff]
        %v355 = vld [vmem:[#allocation5 + $0x448] sm:$0xff]
        %v356 = vld [vmem:[#allocation5 + $0x450] sm:$0xff]
        %v357 = vld [vmem:[#allocation5 + $0x458] sm:$0xff]
        %v358 = vld [vmem:[#allocation5 + $0x460] sm:$0xff]
        %v359 = vld [vmem:[#allocation5 + $0x468] sm:$0xff]
        %v360 = vld [vmem:[#allocation5 + $0x470] sm:$0xff]
        %v361 = vld [vmem:[#allocation5 + $0x478] sm:$0xff]
        %v362 = vld [vmem:[#allocation5 + $0x480] sm:$0xff]
        %v363 = vld [vmem:[#allocation5 + $0x488] sm:$0xff]
        %v364 = vld [vmem:[#allocation5 + $0x490] sm:$0xff]
        %v365 = vld [vmem:[#allocation5 + $0x498] sm:$0xff]
        %v366 = vld [vmem:[#allocation5 + $0x4a0] sm:$0xff]
        %v367 = vld [vmem:[#allocation5 + $0x4a8] sm:$0xff]
        %v368 = vld [vmem:[#allocation5 + $0x4b0] sm:$0xff]
        %v369 = vld [vmem:[#allocation5 + $0x4b8] sm:$0xff]
        %v370 = vld [vmem:[#allocation5 + $0x4c0] sm:$0xff]
        %v371 = vld [vmem:[#allocation5 + $0x4c8] sm:$0xff]
        %v372 = vld [vmem:[#allocation5 + $0x4d0] sm:$0xff]
        %v373 = vld [vmem:[#allocation5 + $0x4d8] sm:$0xff]
        %v374 = vld [vmem:[#allocation5 + $0x4e0] sm:$0xff]
        %v375 = vld [vmem:[#allocation5 + $0x4e8] sm:$0xff]
        %v376 = vld [vmem:[#allocation5 + $0x4f0] sm:$0xff]
        %v377 = vld [vmem:[#allocation5 + $0x4f8] sm:$0xff]
        %v378 = vld [vmem:[#allocation5 + $0x500] sm:$0xff]
        %v379 = vld [vmem:[#allocation5 + $0x508] sm:$0xff]
        %v380 = vld [vmem:[#allocation5 + $0x510] sm:$0xff]
        %v381 = vld [vmem:[#allocation5 + $0x518] sm:$0xff]
        %v382 = vld [vmem:[#allocation5 + $0x520] sm:$0xff]
        %v383 = vld [vmem:[#allocation5 + $0x528] sm:$0xff]
        %v384 = vld [vmem:[#allocation5 + $0x530] sm:$0xff]
        %v385 = vld [vmem:[#allocation5 + $0x538] sm:$0xff]
        %v386 = vld [vmem:[#allocation5 + $0x540] sm:$0xff]
        %v387 = vld [vmem:[#allocation5 + $0x548] sm:$0xff]
        %v388 = vld [vmem:[#allocation5 + $0x550] sm:$0xff]
        %v389 = vld [vmem:[#allocation5 + $0x558] sm:$0xff]
        %v390 = vld [vmem:[#allocation5 + $0x560] sm:$0xff]
        %v391 = vld [vmem:[#allocation5 + $0x568] sm:$0xff]
        %v392 = vld [vmem:[#allocation5 + $0x570] sm:$0xff]
        %v393 = vld [vmem:[#allocation5 + $0x578] sm:$0xff]
        %v394 = vld [vmem:[#allocation5 + $0x580] sm:$0xff]
        %v395 = vld [vmem:[#allocation5 + $0x588] sm:$0xff]
        %v396 = vld [vmem:[#allocation5 + $0x590] sm:$0xff]
        %v397 = vld [vmem:[#allocation5 + $0x598] sm:$0xff]
        %v398 = vld [vmem:[#allocation5 + $0x5a0] sm:$0xff]
        %v399 = vld [vmem:[#allocation5 + $0x5a8] sm:$0xff]
        %v400 = vld [vmem:[#allocation5 + $0x5b0] sm:$0xff]
        %v401 = vld [vmem:[#allocation5 + $0x5b8] sm:$0xff]
        %v402 = vld [vmem:[#allocation5 + $0x5c0] sm:$0xff]
        %v403 = vld [vmem:[#allocation5 + $0x5c8] sm:$0xff]
        %v404 = vld [vmem:[#allocation5 + $0x5d0] sm:$0xff]
        %v405 = vld [vmem:[#allocation5 + $0x5d8] sm:$0xff]
        %v406 = vld [vmem:[#allocation5 + $0x5e0] sm:$0xff]
        %v407 = vld [vmem:[#allocation5 + $0x5e8] sm:$0xff]
        %v408 = vld [vmem:[#allocation5 + $0x5f0] sm:$0xff]
        %v409 = vld [vmem:[#allocation5 + $0x5f8] sm:$0xff]
        %v410 = vld [vmem:[#allocation5 + $0x600] sm:$0xff]
        %v411 = vld [vmem:[#allocation5 + $0x608] sm:$0xff]
        %v412 = vld [vmem:[#allocation5 + $0x610] sm:$0xff]
        %v413 = vld [vmem:[#allocation5 + $0x618] sm:$0xff]
        %v414 = vld [vmem:[#allocation5 + $0x620] sm:$0xff]
        %v415 = vld [vmem:[#allocation5 + $0x628] sm:$0xff]
        %v416 = vld [vmem:[#allocation5 + $0x630] sm:$0xff]
        %v417 = vld [vmem:[#allocation5 + $0x638] sm:$0xff]
        %v418 = vld [vmem:[#allocation5 + $0x640] sm:$0xff]
        %v419 = vld [vmem:[#allocation5 + $0x648] sm:$0xff]
        %v420 = vld [vmem:[#allocation5 + $0x650] sm:$0xff]
        %v421 = vld [vmem:[#allocation5 + $0x658] sm:$0xff]
        %v422 = vld [vmem:[#allocation5 + $0x660] sm:$0xff]
        %v423 = vld [vmem:[#allocation5 + $0x668] sm:$0xff]
        %v424 = vld [vmem:[#allocation5 + $0x670] sm:$0xff]
        %v425 = vld [vmem:[#allocation5 + $0x678] sm:$0xff]
        %v426 = vld [vmem:[#allocation5 + $0x680] sm:$0xff]
        %v427 = vld [vmem:[#allocation5 + $0x688] sm:$0xff]
        %v428 = vld [vmem:[#allocation5 + $0x690] sm:$0xff]
        %v429 = vld [vmem:[#allocation5 + $0x698] sm:$0xff]
        %v430 = vld [vmem:[#allocation5 + $0x6a0] sm:$0xff]
        %v431 = vld [vmem:[#allocation5 + $0x6a8] sm:$0xff]
        %v432 = vld [vmem:[#allocation5 + $0x6b0] sm:$0xff]
        %v433 = vld [vmem:[#allocation5 + $0x6b8] sm:$0xff]
        %v434 = vld [vmem:[#allocation5 + $0x6c0] sm:$0xff]
        %v435 = vld [vmem:[#allocation5 + $0x6c8] sm:$0xff]
        %v436 = vld [vmem:[#allocation5 + $0x6d0] sm:$0xff]
        %v437 = vld [vmem:[#allocation5 + $0x6d8] sm:$0xff]
        %v438 = vld [vmem:[#allocation5 + $0x6e0] sm:$0xff]
        %v439 = vld [vmem:[#allocation5 + $0x6e8] sm:$0xff]
        %v440 = vld [vmem:[#allocation5 + $0x6f0] sm:$0xff]
        %v441 = vld [vmem:[#allocation5 + $0x6f8] sm:$0xff]
        %v442 = vld [vmem:[#allocation5 + $0x700] sm:$0xff]
        %v443 = vld [vmem:[#allocation5 + $0x708] sm:$0xff]
        %v444 = vld [vmem:[#allocation5 + $0x710] sm:$0xff]
        %v445 = vld [vmem:[#allocation5 + $0x718] sm:$0xff]
        %v446 = vld [vmem:[#allocation5 + $0x720] sm:$0xff]
        %v447 = vld [vmem:[#allocation5 + $0x728] sm:$0xff]
        %v448 = vld [vmem:[#allocation5 + $0x730] sm:$0xff]
        %v449 = vld [vmem:[#allocation5 + $0x738] sm:$0xff]
        %v450 = vld [vmem:[#allocation5 + $0x740] sm:$0xff]
        %v451 = vld [vmem:[#allocation5 + $0x748] sm:$0xff]
        %v452 = vld [vmem:[#allocation5 + $0x750] sm:$0xff]
        %v453 = vld [vmem:[#allocation5 + $0x758] sm:$0xff]
        %v454 = vld [vmem:[#allocation5 + $0x760] sm:$0xff]
        %v455 = vld [vmem:[#allocation5 + $0x768] sm:$0xff]
        %v456 = vld [vmem:[#allocation5 + $0x770] sm:$0xff]
        %v457 = vld [vmem:[#allocation5 + $0x778] sm:$0xff]
        %v458 = vld [vmem:[#allocation5 + $0x780] sm:$0xff]
        %v459 = vld [vmem:[#allocation5 + $0x788] sm:$0xff]
        %v460 = vld [vmem:[#allocation5 + $0x790] sm:$0xff]
        %v461 = vld [vmem:[#allocation5 + $0x798] sm:$0xff]
        %v462 = vld [vmem:[#allocation5 + $0x7a0] sm:$0xff]
        %v463 = vld [vmem:[#allocation5 + $0x7a8] sm:$0xff]
        %v464 = vld [vmem:[#allocation5 + $0x7b0] sm:$0xff]
        %v465 = vld [vmem:[#allocation5 + $0x7b8] sm:$0xff]
        %v466 = vld [vmem:[#allocation5 + $0x7c0] sm:$0xff]
        %v467 = vld [vmem:[#allocation5 + $0x7c8] sm:$0xff]
        %v468 = vld [vmem:[#allocation5 + $0x7d0] sm:$0xff]
        %v469 = vld [vmem:[#allocation5 + $0x7d8] sm:$0xff]
        %v470 = vld [vmem:[#allocation5 + $0x7e0] sm:$0xff]
        %v471 = vld [vmem:[#allocation5 + $0x7e8] sm:$0xff]
        %v472 = vld [vmem:[#allocation5 + $0x7f0] sm:$0xff]
        %v473 = vld [vmem:[#allocation5 + $0x7f8] sm:$0xff]
        %474 = vmatprep.subr.mxu0 %v219
        %475 = vmatpush1.msra.mxu0 %v218
        %476 = vmatprep.subr.mxu0 %v235
        %477 = vmatpush1.msra.mxu0 %v234
        %478 = vmatprep.subr.mxu0 %v251
        %479 = vmatpush1.msra.mxu0 %v250
        %480 = vmatprep.subr.mxu0 %v267
        %481 = vmatpush1.msra.mxu0 %v266
        %482 = vmatprep.subr.mxu0 %v283
        %483 = vmatpush1.msra.mxu0 %v282
        %484 = vmatprep.subr.mxu0 %v299
        %485 = vmatpush1.msra.mxu0 %v298
        %486 = vmatprep.subr.mxu0 %v315
        %487 = vmatpush1.msra.mxu0 %v314
        %488 = vmatprep.subr.mxu0 %v331
        %489 = vmatpush1.msra.mxu0 %v330
        %490 = vmatprep.subr.mxu0 %v347
        %491 = vmatpush1.msra.mxu0 %v346
        %492 = vmatprep.subr.mxu0 %v363
        %493 = vmatpush1.msra.mxu0 %v362
        %494 = vmatprep.subr.mxu0 %v379
        %495 = vmatpush1.msra.mxu0 %v378
        %496 = vmatprep.subr.mxu0 %v395
        %497 = vmatpush1.msra.mxu0 %v394
        %498 = vmatprep.subr.mxu0 %v411
        %499 = vmatpush1.msra.mxu0 %v410
        %500 = vmatprep.subr.mxu0 %v427
        %501 = vmatpush1.msra.mxu0 %v426
        %502 = vmatprep.subr.mxu0 %v443
        %503 = vmatpush1.msra.mxu0 %v442
        %504 = vmatprep.subr.mxu0 %v459
        %505 = vmatpush1.msra.mxu0 %v458
        %506 = vmatprep.subr.mxu0 0.0
        %507 = vmatpush1.msra.mxu0 0.0
        %508 = vmatprep.subr.mxu0 0.0
        %509 = vmatpush1.msra.mxu0 0.0
        %510 = vmatprep.subr.mxu0 0.0
        %511 = vmatpush1.msra.mxu0 0.0
        %512 = vmatprep.subr.mxu0 0.0
        %513 = vmatpush1.msra.mxu0 0.0
        %514 = vmatprep.subr.mxu0 0.0
        %515 = vmatpush1.msra.mxu0 0.0
        %516 = vmatprep.subr.mxu0 0.0
        %517 = vmatpush1.msra.mxu0 0.0
        %518 = vmatprep.subr.mxu0 0.0
        %519 = vmatpush1.msra.mxu0 0.0
        %520 = vmatprep.subr.mxu0 0.0
        %521 = vmatpush1.msra.mxu0 0.0
        %522 = vmatprep.subr.mxu0 0.0
        %523 = vmatpush1.msra.mxu0 0.0
        %524 = vmatprep.subr.mxu0 0.0
        %525 = vmatpush1.msra.mxu0 0.0
        %526 = vmatprep.subr.mxu0 0.0
        %527 = vmatpush1.msra.mxu0 0.0
        %528 = vmatprep.subr.mxu0 0.0
        %529 = vmatpush1.msra.mxu0 0.0
        %530 = vmatprep.subr.mxu0 0.0
        %531 = vmatpush1.msra.mxu0 0.0
        %532 = vmatprep.subr.mxu0 0.0
        %533 = vmatpush1.msra.mxu0 0.0
        %534 = vmatprep.subr.mxu0 0.0
        %535 = vmatpush1.msra.mxu0 0.0
        %536 = vmatprep.subr.mxu0 0.0
        %537 = vmatpush1.msra.mxu0 0.0
        %538 = vmatprep.mubr.f32.mxu0 0.0
        %539 = vmatmul.mubr.f32.gmra.mrb[0].mxu0 %v213
        %v540 = vpop.f32.mrb[0].mxu0
        %v541 = vadd.f32 0.0, %v540
        %v542 = vpop.f32.mrb[0].mxu0
        %v543 = vadd.f32 0.0, %v542
        %544 = vdwg.mxu0
        %545 = vmatprep.subr.mxu0 %v221
        %546 = vmatpush1.msra.mxu0 %v220
        %547 = vmatprep.subr.mxu0 %v237
        %548 = vmatpush1.msra.mxu0 %v236
        %549 = vmatprep.subr.mxu0 %v253
        %550 = vmatpush1.msra.mxu0 %v252
        %551 = vmatprep.subr.mxu0 %v269
        %552 = vmatpush1.msra.mxu0 %v268
        %553 = vmatprep.subr.mxu0 %v285
        %554 = vmatpush1.msra.mxu0 %v284
        %555 = vmatprep.subr.mxu0 %v301
        %556 = vmatpush1.msra.mxu0 %v300
        %557 = vmatprep.subr.mxu0 %v317
        %558 = vmatpush1.msra.mxu0 %v316
        %559 = vmatprep.subr.mxu0 %v333
        %560 = vmatpush1.msra.mxu0 %v332
        %561 = vmatprep.subr.mxu0 %v349
        %562 = vmatpush1.msra.mxu0 %v348
        %563 = vmatprep.subr.mxu0 %v365
        %564 = vmatpush1.msra.mxu0 %v364
        %565 = vmatprep.subr.mxu0 %v381
        %566 = vmatpush1.msra.mxu0 %v380
        %567 = vmatprep.subr.mxu0 %v397
        %568 = vmatpush1.msra.mxu0 %v396
        %569 = vmatprep.subr.mxu0 %v413
        %570 = vmatpush1.msra.mxu0 %v412
        %571 = vmatprep.subr.mxu0 %v429
        %572 = vmatpush1.msra.mxu0 %v428
        %573 = vmatprep.subr.mxu0 %v445
        %574 = vmatpush1.msra.mxu0 %v444
        %575 = vmatprep.subr.mxu0 %v461
        %576 = vmatpush1.msra.mxu0 %v460
        %577 = vmatprep.subr.mxu0 0.0
        %578 = vmatpush1.msra.mxu0 0.0
        %579 = vmatprep.subr.mxu0 0.0
        %580 = vmatpush1.msra.mxu0 0.0
        %581 = vmatprep.subr.mxu0 0.0
        %582 = vmatpush1.msra.mxu0 0.0
        %583 = vmatprep.subr.mxu0 0.0
        %584 = vmatpush1.msra.mxu0 0.0
        %585 = vmatprep.subr.mxu0 0.0
        %586 = vmatpush1.msra.mxu0 0.0
        %587 = vmatprep.subr.mxu0 0.0
        %588 = vmatpush1.msra.mxu0 0.0
        %589 = vmatprep.subr.mxu0 0.0
        %590 = vmatpush1.msra.mxu0 0.0
        %591 = vmatprep.subr.mxu0 0.0
        %592 = vmatpush1.msra.mxu0 0.0
        %593 = vmatprep.subr.mxu0 0.0
        %594 = vmatpush1.msra.mxu0 0.0
        %595 = vmatprep.subr.mxu0 0.0
        %596 = vmatpush1.msra.mxu0 0.0
        %597 = vmatprep.subr.mxu0 0.0
        %598 = vmatpush1.msra.mxu0 0.0
        %599 = vmatprep.subr.mxu0 0.0
        %600 = vmatpush1.msra.mxu0 0.0
        %601 = vmatprep.subr.mxu0 0.0
        %602 = vmatpush1.msra.mxu0 0.0
        %603 = vmatprep.subr.mxu0 0.0
        %604 = vmatpush1.msra.mxu0 0.0
        %605 = vmatprep.subr.mxu0 0.0
        %606 = vmatpush1.msra.mxu0 0.0
        %607 = vmatprep.subr.mxu0 0.0
        %608 = vmatpush1.msra.mxu0 0.0
        %609 = vmatprep.mubr.f32.mxu0 0.0
        %610 = vmatmul.mubr.f32.gmra.mrb[0].mxu0 %v213
        %v611 = vpop.f32.mrb[0].mxu0
        %v612 = vadd.f32 0.0, %v611
        %v613 = vpop.f32.mrb[0].mxu0
        %v614 = vadd.f32 0.0, %v613
        %615 = vdwg.mxu0
        %616 = vmatprep.subr.mxu0 %v223
        %617 = vmatpush1.msra.mxu0 %v222
        %618 = vmatprep.subr.mxu0 %v239
        %619 = vmatpush1.msra.mxu0 %v238
        %620 = vmatprep.subr.mxu0 %v255
        %621 = vmatpush1.msra.mxu0 %v254
        %622 = vmatprep.subr.mxu0 %v271
        %623 = vmatpush1.msra.mxu0 %v270
        %624 = vmatprep.subr.mxu0 %v287
        %625 = vmatpush1.msra.mxu0 %v286
        %626 = vmatprep.subr.mxu0 %v303
        %627 = vmatpush1.msra.mxu0 %v302
        %628 = vmatprep.subr.mxu0 %v319
        %629 = vmatpush1.msra.mxu0 %v318
        %630 = vmatprep.subr.mxu0 %v335
        %631 = vmatpush1.msra.mxu0 %v334
        %632 = vmatprep.subr.mxu0 %v351
        %633 = vmatpush1.msra.mxu0 %v350
        %634 = vmatprep.subr.mxu0 %v367
        %635 = vmatpush1.msra.mxu0 %v366
        %636 = vmatprep.subr.mxu0 %v383
        %637 = vmatpush1.msra.mxu0 %v382
        %638 = vmatprep.subr.mxu0 %v399
        %639 = vmatpush1.msra.mxu0 %v398
        %640 = vmatprep.subr.mxu0 %v415
        %641 = vmatpush1.msra.mxu0 %v414
        %642 = vmatprep.subr.mxu0 %v431
        %643 = vmatpush1.msra.mxu0 %v430
        %644 = vmatprep.subr.mxu0 %v447
        %645 = vmatpush1.msra.mxu0 %v446
        %646 = vmatprep.subr.mxu0 %v463
        %647 = vmatpush1.msra.mxu0 %v462
        %648 = vmatprep.subr.mxu0 0.0
        %649 = vmatpush1.msra.mxu0 0.0
        %650 = vmatprep.subr.mxu0 0.0
        %651 = vmatpush1.msra.mxu0 0.0
        %652 = vmatprep.subr.mxu0 0.0
        %653 = vmatpush1.msra.mxu0 0.0
        %654 = vmatprep.subr.mxu0 0.0
        %655 = vmatpush1.msra.mxu0 0.0
        %656 = vmatprep.subr.mxu0 0.0
        %657 = vmatpush1.msra.mxu0 0.0
        %658 = vmatprep.subr.mxu0 0.0
        %659 = vmatpush1.msra.mxu0 0.0
        %660 = vmatprep.subr.mxu0 0.0
        %661 = vmatpush1.msra.mxu0 0.0
        %662 = vmatprep.subr.mxu0 0.0
        %663 = vmatpush1.msra.mxu0 0.0
        %664 = vmatprep.subr.mxu0 0.0
        %665 = vmatpush1.msra.mxu0 0.0
        %666 = vmatprep.subr.mxu0 0.0
        %667 = vmatpush1.msra.mxu0 0.0
        %668 = vmatprep.subr.mxu0 0.0
        %669 = vmatpush1.msra.mxu0 0.0
        %670 = vmatprep.subr.mxu0 0.0
        %671 = vmatpush1.msra.mxu0 0.0
        %672 = vmatprep.subr.mxu0 0.0
        %673 = vmatpush1.msra.mxu0 0.0
        %674 = vmatprep.subr.mxu0 0.0
        %675 = vmatpush1.msra.mxu0 0.0
        %676 = vmatprep.subr.mxu0 0.0
        %677 = vmatpush1.msra.mxu0 0.0
        %678 = vmatprep.subr.mxu0 0.0
        %679 = vmatpush1.msra.mxu0 0.0
        %680 = vmatprep.mubr.f32.mxu0 0.0
        %681 = vmatmul.mubr.f32.gmra.mrb[0].mxu0 %v213
        %v682 = vpop.f32.mrb[0].mxu0
        %v683 = vadd.f32 0.0, %v682
        %v684 = vpop.f32.mrb[0].mxu0
        %v685 = vadd.f32 0.0, %v684
        %686 = vdwg.mxu0
        %687 = vmatprep.subr.mxu0 %v225
        %688 = vmatpush1.msra.mxu0 %v224
        %689 = vmatprep.subr.mxu0 %v241
        %690 = vmatpush1.msra.mxu0 %v240
        %691 = vmatprep.subr.mxu0 %v257
        %692 = vmatpush1.msra.mxu0 %v256
        %693 = vmatprep.subr.mxu0 %v273
        %694 = vmatpush1.msra.mxu0 %v272
        %695 = vmatprep.subr.mxu0 %v289
        %696 = vmatpush1.msra.mxu0 %v288
        %697 = vmatprep.subr.mxu0 %v305
        %698 = vmatpush1.msra.mxu0 %v304
        %699 = vmatprep.subr.mxu0 %v321
        %700 = vmatpush1.msra.mxu0 %v320
        %701 = vmatprep.subr.mxu0 %v337
        %702 = vmatpush1.msra.mxu0 %v336
        %703 = vmatprep.subr.mxu0 %v353
        %704 = vmatpush1.msra.mxu0 %v352
        %705 = vmatprep.subr.mxu0 %v369
        %706 = vmatpush1.msra.mxu0 %v368
        %707 = vmatprep.subr.mxu0 %v385
        %708 = vmatpush1.msra.mxu0 %v384
        %709 = vmatprep.subr.mxu0 %v401
        %710 = vmatpush1.msra.mxu0 %v400
        %711 = vmatprep.subr.mxu0 %v417
        %712 = vmatpush1.msra.mxu0 %v416
        %713 = vmatprep.subr.mxu0 %v433
        %714 = vmatpush1.msra.mxu0 %v432
        %715 = vmatprep.subr.mxu0 %v449
        %716 = vmatpush1.msra.mxu0 %v448
        %717 = vmatprep.subr.mxu0 %v465
        %718 = vmatpush1.msra.mxu0 %v464
        %719 = vmatprep.subr.mxu0 0.0
        %720 = vmatpush1.msra.mxu0 0.0
        %721 = vmatprep.subr.mxu0 0.0
        %722 = vmatpush1.msra.mxu0 0.0
        %723 = vmatprep.subr.mxu0 0.0
        %724 = vmatpush1.msra.mxu0 0.0
        %725 = vmatprep.subr.mxu0 0.0
        %726 = vmatpush1.msra.mxu0 0.0
        %727 = vmatprep.subr.mxu0 0.0
        %728 = vmatpush1.msra.mxu0 0.0
        %729 = vmatprep.subr.mxu0 0.0
        %730 = vmatpush1.msra.mxu0 0.0
        %731 = vmatprep.subr.mxu0 0.0
        %732 = vmatpush1.msra.mxu0 0.0
        %733 = vmatprep.subr.mxu0 0.0
        %734 = vmatpush1.msra.mxu0 0.0
        %735 = vmatprep.subr.mxu0 0.0
        %736 = vmatpush1.msra.mxu0 0.0
        %737 = vmatprep.subr.mxu0 0.0
        %738 = vmatpush1.msra.mxu0 0.0
        %739 = vmatprep.subr.mxu0 0.0
        %740 = vmatpush1.msra.mxu0 0.0
        %741 = vmatprep.subr.mxu0 0.0
        %742 = vmatpush1.msra.mxu0 0.0
        %743 = vmatprep.subr.mxu0 0.0
        %744 = vmatpush1.msra.mxu0 0.0
        %745 = vmatprep.subr.mxu0 0.0
        %746 = vmatpush1.msra.mxu0 0.0
        %747 = vmatprep.subr.mxu0 0.0
        %748 = vmatpush1.msra.mxu0 0.0
        %749 = vmatprep.subr.mxu0 0.0
        %750 = vmatpush1.msra.mxu0 0.0
        %751 = vmatprep.mubr.f32.mxu0 0.0
        %752 = vmatmul.mubr.f32.gmra.mrb[0].mxu0 %v213
        %v753 = vpop.f32.mrb[0].mxu0
        %v754 = vadd.f32 0.0, %v753
        %v755 = vpop.f32.mrb[0].mxu0
        %v756 = vadd.f32 0.0, %v755
        %757 = vdwg.mxu0
        %758 = vmatprep.subr.mxu0 %v227
        %759 = vmatpush1.msra.mxu0 %v226
        %760 = vmatprep.subr.mxu0 %v243
        %761 = vmatpush1.msra.mxu0 %v242
        %762 = vmatprep.subr.mxu0 %v259
        %763 = vmatpush1.msra.mxu0 %v258
        %764 = vmatprep.subr.mxu0 %v275
        %765 = vmatpush1.msra.mxu0 %v274
        %766 = vmatprep.subr.mxu0 %v291
        %767 = vmatpush1.msra.mxu0 %v290
        %768 = vmatprep.subr.mxu0 %v307
        %769 = vmatpush1.msra.mxu0 %v306
        %770 = vmatprep.subr.mxu0 %v323
        %771 = vmatpush1.msra.mxu0 %v322
        %772 = vmatprep.subr.mxu0 %v339
        %773 = vmatpush1.msra.mxu0 %v338
        %774 = vmatprep.subr.mxu0 %v355
        %775 = vmatpush1.msra.mxu0 %v354
        %776 = vmatprep.subr.mxu0 %v371
        %777 = vmatpush1.msra.mxu0 %v370
        %778 = vmatprep.subr.mxu0 %v387
        %779 = vmatpush1.msra.mxu0 %v386
        %780 = vmatprep.subr.mxu0 %v403
        %781 = vmatpush1.msra.mxu0 %v402
        %782 = vmatprep.subr.mxu0 %v419
        %783 = vmatpush1.msra.mxu0 %v418
        %784 = vmatprep.subr.mxu0 %v435
        %785 = vmatpush1.msra.mxu0 %v434
        %786 = vmatprep.subr.mxu0 %v451
        %787 = vmatpush1.msra.mxu0 %v450
        %788 = vmatprep.subr.mxu0 %v467
        %789 = vmatpush1.msra.mxu0 %v466
        %790 = vmatprep.subr.mxu0 0.0
        %791 = vmatpush1.msra.mxu0 0.0
        %792 = vmatprep.subr.mxu0 0.0
        %793 = vmatpush1.msra.mxu0 0.0
        %794 = vmatprep.subr.mxu0 0.0
        %795 = vmatpush1.msra.mxu0 0.0
        %796 = vmatprep.subr.mxu0 0.0
        %797 = vmatpush1.msra.mxu0 0.0
        %798 = vmatprep.subr.mxu0 0.0
        %799 = vmatpush1.msra.mxu0 0.0
        %800 = vmatprep.subr.mxu0 0.0
        %801 = vmatpush1.msra.mxu0 0.0
        %802 = vmatprep.subr.mxu0 0.0
        %803 = vmatpush1.msra.mxu0 0.0
        %804 = vmatprep.subr.mxu0 0.0
        %805 = vmatpush1.msra.mxu0 0.0
        %806 = vmatprep.subr.mxu0 0.0
        %807 = vmatpush1.msra.mxu0 0.0
        %808 = vmatprep.subr.mxu0 0.0
        %809 = vmatpush1.msra.mxu0 0.0
        %810 = vmatprep.subr.mxu0 0.0
        %811 = vmatpush1.msra.mxu0 0.0
        %812 = vmatprep.subr.mxu0 0.0
        %813 = vmatpush1.msra.mxu0 0.0
        %814 = vmatprep.subr.mxu0 0.0
        %815 = vmatpush1.msra.mxu0 0.0
        %816 = vmatprep.subr.mxu0 0.0
        %817 = vmatpush1.msra.mxu0 0.0
        %818 = vmatprep.subr.mxu0 0.0
        %819 = vmatpush1.msra.mxu0 0.0
        %820 = vmatprep.subr.mxu0 0.0
        %821 = vmatpush1.msra.mxu0 0.0
        %822 = vmatprep.mubr.f32.mxu0 0.0
        %823 = vmatmul.mubr.f32.gmra.mrb[0].mxu0 %v213
        %v824 = vpop.f32.mrb[0].mxu0
        %v825 = vadd.f32 0.0, %v824
        %v826 = vpop.f32.mrb[0].mxu0
        %v827 = vadd.f32 0.0, %v826
        %828 = vdwg.mxu0
        %829 = vmatprep.subr.mxu0 %v229
        %830 = vmatpush1.msra.mxu0 %v228
        %831 = vmatprep.subr.mxu0 %v245
        %832 = vmatpush1.msra.mxu0 %v244
        %833 = vmatprep.subr.mxu0 %v261
        %834 = vmatpush1.msra.mxu0 %v260
        %835 = vmatprep.subr.mxu0 %v277
        %836 = vmatpush1.msra.mxu0 %v276
        %837 = vmatprep.subr.mxu0 %v293
        %838 = vmatpush1.msra.mxu0 %v292
        %839 = vmatprep.subr.mxu0 %v309
        %840 = vmatpush1.msra.mxu0 %v308
        %841 = vmatprep.subr.mxu0 %v325
        %842 = vmatpush1.msra.mxu0 %v324
        %843 = vmatprep.subr.mxu0 %v341
        %844 = vmatpush1.msra.mxu0 %v340
        %845 = vmatprep.subr.mxu0 %v357
        %846 = vmatpush1.msra.mxu0 %v356
        %847 = vmatprep.subr.mxu0 %v373
        %848 = vmatpush1.msra.mxu0 %v372
        %849 = vmatprep.subr.mxu0 %v389
        %850 = vmatpush1.msra.mxu0 %v388
        %851 = vmatprep.subr.mxu0 %v405
        %852 = vmatpush1.msra.mxu0 %v404
        %853 = vmatprep.subr.mxu0 %v421
        %854 = vmatpush1.msra.mxu0 %v420
        %855 = vmatprep.subr.mxu0 %v437
        %856 = vmatpush1.msra.mxu0 %v436
        %857 = vmatprep.subr.mxu0 %v453
        %858 = vmatpush1.msra.mxu0 %v452
        %859 = vmatprep.subr.mxu0 %v469
        %860 = vmatpush1.msra.mxu0 %v468
        %861 = vmatprep.subr.mxu0 0.0
        %862 = vmatpush1.msra.mxu0 0.0
        %863 = vmatprep.subr.mxu0 0.0
        %864 = vmatpush1.msra.mxu0 0.0
        %865 = vmatprep.subr.mxu0 0.0
        %866 = vmatpush1.msra.mxu0 0.0
        %867 = vmatprep.subr.mxu0 0.0
        %868 = vmatpush1.msra.mxu0 0.0
        %869 = vmatprep.subr.mxu0 0.0
        %870 = vmatpush1.msra.mxu0 0.0
        %871 = vmatprep.subr.mxu0 0.0
        %872 = vmatpush1.msra.mxu0 0.0
        %873 = vmatprep.subr.mxu0 0.0
        %874 = vmatpush1.msra.mxu0 0.0
        %875 = vmatprep.subr.mxu0 0.0
        %876 = vmatpush1.msra.mxu0 0.0
        %877 = vmatprep.subr.mxu0 0.0
        %878 = vmatpush1.msra.mxu0 0.0
        %879 = vmatprep.subr.mxu0 0.0
        %880 = vmatpush1.msra.mxu0 0.0
        %881 = vmatprep.subr.mxu0 0.0
        %882 = vmatpush1.msra.mxu0 0.0
        %883 = vmatprep.subr.mxu0 0.0
        %884 = vmatpush1.msra.mxu0 0.0
        %885 = vmatprep.subr.mxu0 0.0
        %886 = vmatpush1.msra.mxu0 0.0
        %887 = vmatprep.subr.mxu0 0.0
        %888 = vmatpush1.msra.mxu0 0.0
        %889 = vmatprep.subr.mxu0 0.0
        %890 = vmatpush1.msra.mxu0 0.0
        %891 = vmatprep.subr.mxu0 0.0
        %892 = vmatpush1.msra.mxu0 0.0
        %893 = vmatprep.mubr.f32.mxu0 0.0
        %894 = vmatmul.mubr.f32.gmra.mrb[0].mxu0 %v213
        %v895 = vpop.f32.mrb[0].mxu0
        %v896 = vadd.f32 0.0, %v895
        %v897 = vpop.f32.mrb[0].mxu0
        %v898 = vadd.f32 0.0, %v897
        %899 = vdwg.mxu0
        %900 = vmatprep.subr.mxu0 %v231
        %901 = vmatpush1.msra.mxu0 %v230
        %902 = vmatprep.subr.mxu0 %v247
        %903 = vmatpush1.msra.mxu0 %v246
        %904 = vmatprep.subr.mxu0 %v263
        %905 = vmatpush1.msra.mxu0 %v262
        %906 = vmatprep.subr.mxu0 %v279
        %907 = vmatpush1.msra.mxu0 %v278
        %908 = vmatprep.subr.mxu0 %v295
        %909 = vmatpush1.msra.mxu0 %v294
        %910 = vmatprep.subr.mxu0 %v311
        %911 = vmatpush1.msra.mxu0 %v310
        %912 = vmatprep.subr.mxu0 %v327
        %913 = vmatpush1.msra.mxu0 %v326
        %914 = vmatprep.subr.mxu0 %v343
        %915 = vmatpush1.msra.mxu0 %v342
        %916 = vmatprep.subr.mxu0 %v359
        %917 = vmatpush1.msra.mxu0 %v358
        %918 = vmatprep.subr.mxu0 %v375
        %919 = vmatpush1.msra.mxu0 %v374
        %920 = vmatprep.subr.mxu0 %v391
        %921 = vmatpush1.msra.mxu0 %v390
        %922 = vmatprep.subr.mxu0 %v407
        %923 = vmatpush1.msra.mxu0 %v406
        %924 = vmatprep.subr.mxu0 %v423
        %925 = vmatpush1.msra.mxu0 %v422
        %926 = vmatprep.subr.mxu0 %v439
        %927 = vmatpush1.msra.mxu0 %v438
        %928 = vmatprep.subr.mxu0 %v455
        %929 = vmatpush1.msra.mxu0 %v454
        %930 = vmatprep.subr.mxu0 %v471
        %931 = vmatpush1.msra.mxu0 %v470
        %932 = vmatprep.subr.mxu0 0.0
        %933 = vmatpush1.msra.mxu0 0.0
        %934 = vmatprep.subr.mxu0 0.0
        %935 = vmatpush1.msra.mxu0 0.0
        %936 = vmatprep.subr.mxu0 0.0
        %937 = vmatpush1.msra.mxu0 0.0
        %938 = vmatprep.subr.mxu0 0.0
        %939 = vmatpush1.msra.mxu0 0.0
        %940 = vmatprep.subr.mxu0 0.0
        %941 = vmatpush1.msra.mxu0 0.0
        %942 = vmatprep.subr.mxu0 0.0
        %943 = vmatpush1.msra.mxu0 0.0
        %944 = vmatprep.subr.mxu0 0.0
        %945 = vmatpush1.msra.mxu0 0.0
        %946 = vmatprep.subr.mxu0 0.0
        %947 = vmatpush1.msra.mxu0 0.0
        %948 = vmatprep.subr.mxu0 0.0
        %949 = vmatpush1.msra.mxu0 0.0
        %950 = vmatprep.subr.mxu0 0.0
        %951 = vmatpush1.msra.mxu0 0.0
        %952 = vmatprep.subr.mxu0 0.0
        %953 = vmatpush1.msra.mxu0 0.0
        %954 = vmatprep.subr.mxu0 0.0
        %955 = vmatpush1.msra.mxu0 0.0
        %956 = vmatprep.subr.mxu0 0.0
        %957 = vmatpush1.msra.mxu0 0.0
        %958 = vmatprep.subr.mxu0 0.0
        %959 = vmatpush1.msra.mxu0 0.0
        %960 = vmatprep.subr.mxu0 0.0
        %961 = vmatpush1.msra.mxu0 0.0
        %962 = vmatprep.subr.mxu0 0.0
        %963 = vmatpush1.msra.mxu0 0.0
        %964 = vmatprep.mubr.f32.mxu0 0.0
        %965 = vmatmul.mubr.f32.gmra.mrb[0].mxu0 %v213
        %v966 = vpop.f32.mrb[0].mxu0
        %v967 = vadd.f32 0.0, %v966
        %v968 = vpop.f32.mrb[0].mxu0
        %v969 = vadd.f32 0.0, %v968
        %970 = vdwg.mxu0
        %971 = vmatprep.subr.mxu0 %v233
        %972 = vmatpush1.msra.mxu0 %v232
        %973 = vmatprep.subr.mxu0 %v249
        %974 = vmatpush1.msra.mxu0 %v248
        %975 = vmatprep.subr.mxu0 %v265
        %976 = vmatpush1.msra.mxu0 %v264
        %977 = vmatprep.subr.mxu0 %v281
        %978 = vmatpush1.msra.mxu0 %v280
        %979 = vmatprep.subr.mxu0 %v297
        %980 = vmatpush1.msra.mxu0 %v296
        %981 = vmatprep.subr.mxu0 %v313
        %982 = vmatpush1.msra.mxu0 %v312
        %983 = vmatprep.subr.mxu0 %v329
        %984 = vmatpush1.msra.mxu0 %v328
        %985 = vmatprep.subr.mxu0 %v345
        %986 = vmatpush1.msra.mxu0 %v344
        %987 = vmatprep.subr.mxu0 %v361
        %988 = vmatpush1.msra.mxu0 %v360
        %989 = vmatprep.subr.mxu0 %v377
        %990 = vmatpush1.msra.mxu0 %v376
        %991 = vmatprep.subr.mxu0 %v393
        %992 = vmatpush1.msra.mxu0 %v392
        %993 = vmatprep.subr.mxu0 %v409
        %994 = vmatpush1.msra.mxu0 %v408
        %995 = vmatprep.subr.mxu0 %v425
        %996 = vmatpush1.msra.mxu0 %v424
        %997 = vmatprep.subr.mxu0 %v441
        %998 = vmatpush1.msra.mxu0 %v440
        %999 = vmatprep.subr.mxu0 %v457
        %1000 = vmatpush1.msra.mxu0 %v456
        %1001 = vmatprep.subr.mxu0 %v473
        %1002 = vmatpush1.msra.mxu0 %v472
        %1003 = vmatprep.subr.mxu0 0.0
        %1004 = vmatpush1.msra.mxu0 0.0
        %1005 = vmatprep.subr.mxu0 0.0
        %1006 = vmatpush1.msra.mxu0 0.0
        %1007 = vmatprep.subr.mxu0 0.0
        %1008 = vmatpush1.msra.mxu0 0.0
        %1009 = vmatprep.subr.mxu0 0.0
        %1010 = vmatpush1.msra.mxu0 0.0
        %1011 = vmatprep.subr.mxu0 0.0
        %1012 = vmatpush1.msra.mxu0 0.0
        %1013 = vmatprep.subr.mxu0 0.0
        %1014 = vmatpush1.msra.mxu0 0.0
        %1015 = vmatprep.subr.mxu0 0.0
        %1016 = vmatpush1.msra.mxu0 0.0
        %1017 = vmatprep.subr.mxu0 0.0
        %1018 = vmatpush1.msra.mxu0 0.0
        %1019 = vmatprep.subr.mxu0 0.0
        %1020 = vmatpush1.msra.mxu0 0.0
        %1021 = vmatprep.subr.mxu0 0.0
        %1022 = vmatpush1.msra.mxu0 0.0
        %1023 = vmatprep.subr.mxu0 0.0
        %1024 = vmatpush1.msra.mxu0 0.0
        %1025 = vmatprep.subr.mxu0 0.0
        %1026 = vmatpush1.msra.mxu0 0.0
        %1027 = vmatprep.subr.mxu0 0.0
        %1028 = vmatpush1.msra.mxu0 0.0
        %1029 = vmatprep.subr.mxu0 0.0
        %1030 = vmatpush1.msra.mxu0 0.0
        %1031 = vmatprep.subr.mxu0 0.0
        %1032 = vmatpush1.msra.mxu0 0.0
        %1033 = vmatprep.subr.mxu0 0.0
        %1034 = vmatpush1.msra.mxu0 0.0
        %1035 = vmatprep.mubr.f32.mxu0 0.0
        %1036 = vmatmul.mubr.f32.gmra.mrb[0].mxu0 %v213
        %v1037 = vpop.f32.mrb[0].mxu0
        %v1038 = vadd.f32 0.0, %v1037
        %v1039 = vpop.f32.mrb[0].mxu0
        %v1040 = vadd.f32 0.0, %v1039
        %1041 = vdwg.mxu0
        %1042 = vmatprep.subr.mxu0 %v219
        %1043 = vmatpush1.msra.mxu0 %v218
        %1044 = vmatprep.subr.mxu0 %v235
        %1045 = vmatpush1.msra.mxu0 %v234
        %1046 = vmatprep.subr.mxu0 %v251
        %1047 = vmatpush1.msra.mxu0 %v250
        %1048 = vmatprep.subr.mxu0 %v267
        %1049 = vmatpush1.msra.mxu0 %v266
        %1050 = vmatprep.subr.mxu0 %v283
        %1051 = vmatpush1.msra.mxu0 %v282
        %1052 = vmatprep.subr.mxu0 %v299
        %1053 = vmatpush1.msra.mxu0 %v298
        %1054 = vmatprep.subr.mxu0 %v315
        %1055 = vmatpush1.msra.mxu0 %v314
        %1056 = vmatprep.subr.mxu0 %v331
        %1057 = vmatpush1.msra.mxu0 %v330
        %1058 = vmatprep.subr.mxu0 %v347
        %1059 = vmatpush1.msra.mxu0 %v346
        %1060 = vmatprep.subr.mxu0 %v363
        %1061 = vmatpush1.msra.mxu0 %v362
        %1062 = vmatprep.subr.mxu0 %v379
        %1063 = vmatpush1.msra.mxu0 %v378
        %1064 = vmatprep.subr.mxu0 %v395
        %1065 = vmatpush1.msra.mxu0 %v394
        %1066 = vmatprep.subr.mxu0 %v411
        %1067 = vmatpush1.msra.mxu0 %v410
        %1068 = vmatprep.subr.mxu0 %v427
        %1069 = vmatpush1.msra.mxu0 %v426
        %1070 = vmatprep.subr.mxu0 %v443
        %1071 = vmatpush1.msra.mxu0 %v442
        %1072 = vmatprep.subr.mxu0 %v459
        %1073 = vmatpush1.msra.mxu0 %v458
        %1074 = vmatprep.subr.mxu0 0.0
        %1075 = vmatpush1.msra.mxu0 0.0
        %1076 = vmatprep.subr.mxu0 0.0
        %1077 = vmatpush1.msra.mxu0 0.0
        %1078 = vmatprep.subr.mxu0 0.0
        %1079 = vmatpush1.msra.mxu0 0.0
        %1080 = vmatprep.subr.mxu0 0.0
        %1081 = vmatpush1.msra.mxu0 0.0
        %1082 = vmatprep.subr.mxu0 0.0
        %1083 = vmatpush1.msra.mxu0 0.0
        %1084 = vmatprep.subr.mxu0 0.0
        %1085 = vmatpush1.msra.mxu0 0.0
        %1086 = vmatprep.subr.mxu0 0.0
        %1087 = vmatpush1.msra.mxu0 0.0
        %1088 = vmatprep.subr.mxu0 0.0
        %1089 = vmatpush1.msra.mxu0 0.0
        %1090 = vmatprep.subr.mxu0 0.0
        %1091 = vmatpush1.msra.mxu0 0.0
        %1092 = vmatprep.subr.mxu0 0.0
        %1093 = vmatpush1.msra.mxu0 0.0
        %1094 = vmatprep.subr.mxu0 0.0
        %1095 = vmatpush1.msra.mxu0 0.0
        %1096 = vmatprep.subr.mxu0 0.0
        %1097 = vmatpush1.msra.mxu0 0.0
        %1098 = vmatprep.subr.mxu0 0.0
        %1099 = vmatpush1.msra.mxu0 0.0
        %1100 = vmatprep.subr.mxu0 0.0
        %1101 = vmatpush1.msra.mxu0 0.0
        %1102 = vmatprep.subr.mxu0 0.0
        %1103 = vmatpush1.msra.mxu0 0.0
        %1104 = vmatprep.subr.mxu0 0.0
        %1105 = vmatpush1.msra.mxu0 0.0
        %1106 = vmatprep.mubr.f32.mxu0 0.0
        %1107 = vmatmul.mubr.f32.gmra.mrb[0].mxu0 %v217
        %v1108 = vpop.f32.mrb[0].mxu0
        %v1109 = vadd.f32 0.0, %v1108
        %v1110 = vpop.f32.mrb[0].mxu0
        %v1111 = vadd.f32 0.0, %v1110
        %1112 = vdwg.mxu0
        %1113 = vmatprep.subr.mxu0 %v221
        %1114 = vmatpush1.msra.mxu0 %v220
        %1115 = vmatprep.subr.mxu0 %v237
        %1116 = vmatpush1.msra.mxu0 %v236
        %1117 = vmatprep.subr.mxu0 %v253
        %1118 = vmatpush1.msra.mxu0 %v252
        %1119 = vmatprep.subr.mxu0 %v269
        %1120 = vmatpush1.msra.mxu0 %v268
        %1121 = vmatprep.subr.mxu0 %v285
        %1122 = vmatpush1.msra.mxu0 %v284
        %1123 = vmatprep.subr.mxu0 %v301
        %1124 = vmatpush1.msra.mxu0 %v300
        %1125 = vmatprep.subr.mxu0 %v317
        %1126 = vmatpush1.msra.mxu0 %v316
        %1127 = vmatprep.subr.mxu0 %v333
        %1128 = vmatpush1.msra.mxu0 %v332
        %1129 = vmatprep.subr.mxu0 %v349
        %1130 = vmatpush1.msra.mxu0 %v348
        %1131 = vmatprep.subr.mxu0 %v365
        %1132 = vmatpush1.msra.mxu0 %v364
        %1133 = vmatprep.subr.mxu0 %v381
        %1134 = vmatpush1.msra.mxu0 %v380
        %1135 = vmatprep.subr.mxu0 %v397
        %1136 = vmatpush1.msra.mxu0 %v396
        %1137 = vmatprep.subr.mxu0 %v413
        %1138 = vmatpush1.msra.mxu0 %v412
        %1139 = vmatprep.subr.mxu0 %v429
        %1140 = vmatpush1.msra.mxu0 %v428
        %1141 = vmatprep.subr.mxu0 %v445
        %1142 = vmatpush1.msra.mxu0 %v444
        %1143 = vmatprep.subr.mxu0 %v461
        %1144 = vmatpush1.msra.mxu0 %v460
        %1145 = vmatprep.subr.mxu0 0.0
        %1146 = vmatpush1.msra.mxu0 0.0
        %1147 = vmatprep.subr.mxu0 0.0
        %1148 = vmatpush1.msra.mxu0 0.0
        %1149 = vmatprep.subr.mxu0 0.0
        %1150 = vmatpush1.msra.mxu0 0.0
        %1151 = vmatprep.subr.mxu0 0.0
        %1152 = vmatpush1.msra.mxu0 0.0
        %1153 = vmatprep.subr.mxu0 0.0
        %1154 = vmatpush1.msra.mxu0 0.0
        %1155 = vmatprep.subr.mxu0 0.0
        %1156 = vmatpush1.msra.mxu0 0.0
        %1157 = vmatprep.subr.mxu0 0.0
        %1158 = vmatpush1.msra.mxu0 0.0
        %1159 = vmatprep.subr.mxu0 0.0
        %1160 = vmatpush1.msra.mxu0 0.0
        %1161 = vmatprep.subr.mxu0 0.0
        %1162 = vmatpush1.msra.mxu0 0.0
        %1163 = vmatprep.subr.mxu0 0.0
        %1164 = vmatpush1.msra.mxu0 0.0
        %1165 = vmatprep.subr.mxu0 0.0
        %1166 = vmatpush1.msra.mxu0 0.0
        %1167 = vmatprep.subr.mxu0 0.0
        %1168 = vmatpush1.msra.mxu0 0.0
        %1169 = vmatprep.subr.mxu0 0.0
        %1170 = vmatpush1.msra.mxu0 0.0
        %1171 = vmatprep.subr.mxu0 0.0
        %1172 = vmatpush1.msra.mxu0 0.0
        %1173 = vmatprep.subr.mxu0 0.0
        %1174 = vmatpush1.msra.mxu0 0.0
        %1175 = vmatprep.subr.mxu0 0.0
        %1176 = vmatpush1.msra.mxu0 0.0
        %1177 = vmatprep.mubr.f32.mxu0 0.0
        %1178 = vmatmul.mubr.f32.gmra.mrb[0].mxu0 %v217
        %v1179 = vpop.f32.mrb[0].mxu0
        %v1180 = vadd.f32 0.0, %v1179
        %v1181 = vpop.f32.mrb[0].mxu0
        %v1182 = vadd.f32 0.0, %v1181
        %1183 = vdwg.mxu0
        %1184 = vmatprep.subr.mxu0 %v223
        %1185 = vmatpush1.msra.mxu0 %v222
        %1186 = vmatprep.subr.mxu0 %v239
        %1187 = vmatpush1.msra.mxu0 %v238
        %1188 = vmatprep.subr.mxu0 %v255
        %1189 = vmatpush1.msra.mxu0 %v254
        %1190 = vmatprep.subr.mxu0 %v271
        %1191 = vmatpush1.msra.mxu0 %v270
        %1192 = vmatprep.subr.mxu0 %v287
        %1193 = vmatpush1.msra.mxu0 %v286
        %1194 = vmatprep.subr.mxu0 %v303
        %1195 = vmatpush1.msra.mxu0 %v302
        %1196 = vmatprep.subr.mxu0 %v319
        %1197 = vmatpush1.msra.mxu0 %v318
        %1198 = vmatprep.subr.mxu0 %v335
        %1199 = vmatpush1.msra.mxu0 %v334
        %1200 = vmatprep.subr.mxu0 %v351
        %1201 = vmatpush1.msra.mxu0 %v350
        %1202 = vmatprep.subr.mxu0 %v367
        %1203 = vmatpush1.msra.mxu0 %v366
        %1204 = vmatprep.subr.mxu0 %v383
        %1205 = vmatpush1.msra.mxu0 %v382
        %1206 = vmatprep.subr.mxu0 %v399
        %1207 = vmatpush1.msra.mxu0 %v398
        %1208 = vmatprep.subr.mxu0 %v415
        %1209 = vmatpush1.msra.mxu0 %v414
        %1210 = vmatprep.subr.mxu0 %v431
        %1211 = vmatpush1.msra.mxu0 %v430
        %1212 = vmatprep.subr.mxu0 %v447
        %1213 = vmatpush1.msra.mxu0 %v446
        %1214 = vmatprep.subr.mxu0 %v463
        %1215 = vmatpush1.msra.mxu0 %v462
        %1216 = vmatprep.subr.mxu0 0.0
        %1217 = vmatpush1.msra.mxu0 0.0
        %1218 = vmatprep.subr.mxu0 0.0
        %1219 = vmatpush1.msra.mxu0 0.0
        %1220 = vmatprep.subr.mxu0 0.0
        %1221 = vmatpush1.msra.mxu0 0.0
        %1222 = vmatprep.subr.mxu0 0.0
        %1223 = vmatpush1.msra.mxu0 0.0
        %1224 = vmatprep.subr.mxu0 0.0
        %1225 = vmatpush1.msra.mxu0 0.0
        %1226 = vmatprep.subr.mxu0 0.0
        %1227 = vmatpush1.msra.mxu0 0.0
        %1228 = vmatprep.subr.mxu0 0.0
        %1229 = vmatpush1.msra.mxu0 0.0
        %1230 = vmatprep.subr.mxu0 0.0
        %1231 = vmatpush1.msra.mxu0 0.0
        %1232 = vmatprep.subr.mxu0 0.0
        %1233 = vmatpush1.msra.mxu0 0.0
        %1234 = vmatprep.subr.mxu0 0.0
        %1235 = vmatpush1.msra.mxu0 0.0
        %1236 = vmatprep.subr.mxu0 0.0
        %1237 = vmatpush1.msra.mxu0 0.0
        %1238 = vmatprep.subr.mxu0 0.0
        %1239 = vmatpush1.msra.mxu0 0.0
        %1240 = vmatprep.subr.mxu0 0.0
        %1241 = vmatpush1.msra.mxu0 0.0
        %1242 = vmatprep.subr.mxu0 0.0
        %1243 = vmatpush1.msra.mxu0 0.0
        %1244 = vmatprep.subr.mxu0 0.0
        %1245 = vmatpush1.msra.mxu0 0.0
        %1246 = vmatprep.subr.mxu0 0.0
        %1247 = vmatpush1.msra.mxu0 0.0
        %1248 = vmatprep.mubr.f32.mxu0 0.0
        %1249 = vmatmul.mubr.f32.gmra.mrb[0].mxu0 %v217
        %v1250 = vpop.f32.mrb[0].mxu0
        %v1251 = vadd.f32 0.0, %v1250
        %v1252 = vpop.f32.mrb[0].mxu0
        %v1253 = vadd.f32 0.0, %v1252
        %1254 = vdwg.mxu0
        %1255 = vmatprep.subr.mxu0 %v225
        %1256 = vmatpush1.msra.mxu0 %v224
        %1257 = vmatprep.subr.mxu0 %v241
        %1258 = vmatpush1.msra.mxu0 %v240
        %1259 = vmatprep.subr.mxu0 %v257
        %1260 = vmatpush1.msra.mxu0 %v256
        %1261 = vmatprep.subr.mxu0 %v273
        %1262 = vmatpush1.msra.mxu0 %v272
        %1263 = vmatprep.subr.mxu0 %v289
        %1264 = vmatpush1.msra.mxu0 %v288
        %1265 = vmatprep.subr.mxu0 %v305
        %1266 = vmatpush1.msra.mxu0 %v304
        %1267 = vmatprep.subr.mxu0 %v321
        %1268 = vmatpush1.msra.mxu0 %v320
        %1269 = vmatprep.subr.mxu0 %v337
        %1270 = vmatpush1.msra.mxu0 %v336
        %1271 = vmatprep.subr.mxu0 %v353
        %1272 = vmatpush1.msra.mxu0 %v352
        %1273 = vmatprep.subr.mxu0 %v369
        %1274 = vmatpush1.msra.mxu0 %v368
        %1275 = vmatprep.subr.mxu0 %v385
        %1276 = vmatpush1.msra.mxu0 %v384
        %1277 = vmatprep.subr.mxu0 %v401
        %1278 = vmatpush1.msra.mxu0 %v400
        %1279 = vmatprep.subr.mxu0 %v417
        %1280 = vmatpush1.msra.mxu0 %v416
        %1281 = vmatprep.subr.mxu0 %v433
        %1282 = vmatpush1.msra.mxu0 %v432
        %1283 = vmatprep.subr.mxu0 %v449
        %1284 = vmatpush1.msra.mxu0 %v448
        %1285 = vmatprep.subr.mxu0 %v465
        %1286 = vmatpush1.msra.mxu0 %v464
        %1287 = vmatprep.subr.mxu0 0.0
        %1288 = vmatpush1.msra.mxu0 0.0
        %1289 = vmatprep.subr.mxu0 0.0
        %1290 = vmatpush1.msra.mxu0 0.0
        %1291 = vmatprep.subr.mxu0 0.0
        %1292 = vmatpush1.msra.mxu0 0.0
        %1293 = vmatprep.subr.mxu0 0.0
        %1294 = vmatpush1.msra.mxu0 0.0
        %1295 = vmatprep.subr.mxu0 0.0
        %1296 = vmatpush1.msra.mxu0 0.0
        %1297 = vmatprep.subr.mxu0 0.0
        %1298 = vmatpush1.msra.mxu0 0.0
        %1299 = vmatprep.subr.mxu0 0.0
        %1300 = vmatpush1.msra.mxu0 0.0
        %1301 = vmatprep.subr.mxu0 0.0
        %1302 = vmatpush1.msra.mxu0 0.0
        %1303 = vmatprep.subr.mxu0 0.0
        %1304 = vmatpush1.msra.mxu0 0.0
        %1305 = vmatprep.subr.mxu0 0.0
        %1306 = vmatpush1.msra.mxu0 0.0
        %1307 = vmatprep.subr.mxu0 0.0
        %1308 = vmatpush1.msra.mxu0 0.0
        %1309 = vmatprep.subr.mxu0 0.0
        %1310 = vmatpush1.msra.mxu0 0.0
        %1311 = vmatprep.subr.mxu0 0.0
        %1312 = vmatpush1.msra.mxu0 0.0
        %1313 = vmatprep.subr.mxu0 0.0
        %1314 = vmatpush1.msra.mxu0 0.0
        %1315 = vmatprep.subr.mxu0 0.0
        %1316 = vmatpush1.msra.mxu0 0.0
        %1317 = vmatprep.subr.mxu0 0.0
        %1318 = vmatpush1.msra.mxu0 0.0
        %1319 = vmatprep.mubr.f32.mxu0 0.0
        %1320 = vmatmul.mubr.f32.gmra.mrb[0].mxu0 %v217
        %v1321 = vpop.f32.mrb[0].mxu0
        %v1322 = vadd.f32 0.0, %v1321
        %v1323 = vpop.f32.mrb[0].mxu0
        %v1324 = vadd.f32 0.0, %v1323
        %1325 = vdwg.mxu0
        %1326 = vmatprep.subr.mxu0 %v227
        %1327 = vmatpush1.msra.mxu0 %v226
        %1328 = vmatprep.subr.mxu0 %v243
        %1329 = vmatpush1.msra.mxu0 %v242
        %1330 = vmatprep.subr.mxu0 %v259
        %1331 = vmatpush1.msra.mxu0 %v258
        %1332 = vmatprep.subr.mxu0 %v275
        %1333 = vmatpush1.msra.mxu0 %v274
        %1334 = vmatprep.subr.mxu0 %v291
        %1335 = vmatpush1.msra.mxu0 %v290
        %1336 = vmatprep.subr.mxu0 %v307
        %1337 = vmatpush1.msra.mxu0 %v306
        %1338 = vmatprep.subr.mxu0 %v323
        %1339 = vmatpush1.msra.mxu0 %v322
        %1340 = vmatprep.subr.mxu0 %v339
        %1341 = vmatpush1.msra.mxu0 %v338
        %1342 = vmatprep.subr.mxu0 %v355
        %1343 = vmatpush1.msra.mxu0 %v354
        %1344 = vmatprep.subr.mxu0 %v371
        %1345 = vmatpush1.msra.mxu0 %v370
        %1346 = vmatprep.subr.mxu0 %v387
        %1347 = vmatpush1.msra.mxu0 %v386
        %1348 = vmatprep.subr.mxu0 %v403
        %1349 = vmatpush1.msra.mxu0 %v402
        %1350 = vmatprep.subr.mxu0 %v419
        %1351 = vmatpush1.msra.mxu0 %v418
        %1352 = vmatprep.subr.mxu0 %v435
        %1353 = vmatpush1.msra.mxu0 %v434
        %1354 = vmatprep.subr.mxu0 %v451
        %1355 = vmatpush1.msra.mxu0 %v450
        %1356 = vmatprep.subr.mxu0 %v467
        %1357 = vmatpush1.msra.mxu0 %v466
        %1358 = vmatprep.subr.mxu0 0.0
        %1359 = vmatpush1.msra.mxu0 0.0
        %1360 = vmatprep.subr.mxu0 0.0
        %1361 = vmatpush1.msra.mxu0 0.0
        %1362 = vmatprep.subr.mxu0 0.0
        %1363 = vmatpush1.msra.mxu0 0.0
        %1364 = vmatprep.subr.mxu0 0.0
        %1365 = vmatpush1.msra.mxu0 0.0
        %1366 = vmatprep.subr.mxu0 0.0
        %1367 = vmatpush1.msra.mxu0 0.0
        %1368 = vmatprep.subr.mxu0 0.0
        %1369 = vmatpush1.msra.mxu0 0.0
        %1370 = vmatprep.subr.mxu0 0.0
        %1371 = vmatpush1.msra.mxu0 0.0
        %1372 = vmatprep.subr.mxu0 0.0
        %1373 = vmatpush1.msra.mxu0 0.0
        %1374 = vmatprep.subr.mxu0 0.0
        %1375 = vmatpush1.msra.mxu0 0.0
        %1376 = vmatprep.subr.mxu0 0.0
        %1377 = vmatpush1.msra.mxu0 0.0
        %1378 = vmatprep.subr.mxu0 0.0
        %1379 = vmatpush1.msra.mxu0 0.0
        %1380 = vmatprep.subr.mxu0 0.0
        %1381 = vmatpush1.msra.mxu0 0.0
        %1382 = vmatprep.subr.mxu0 0.0
        %1383 = vmatpush1.msra.mxu0 0.0
        %1384 = vmatprep.subr.mxu0 0.0
        %1385 = vmatpush1.msra.mxu0 0.0
        %1386 = vmatprep.subr.mxu0 0.0
        %1387 = vmatpush1.msra.mxu0 0.0
        %1388 = vmatprep.subr.mxu0 0.0
        %1389 = vmatpush1.msra.mxu0 0.0
        %1390 = vmatprep.mubr.f32.mxu0 0.0
        %1391 = vmatmul.mubr.f32.gmra.mrb[0].mxu0 %v217
        %v1392 = vpop.f32.mrb[0].mxu0
        %v1393 = vadd.f32 0.0, %v1392
        %v1394 = vpop.f32.mrb[0].mxu0
        %v1395 = vadd.f32 0.0, %v1394
        %1396 = vdwg.mxu0
        %1397 = vmatprep.subr.mxu0 %v229
        %1398 = vmatpush1.msra.mxu0 %v228
        %1399 = vmatprep.subr.mxu0 %v245
        %1400 = vmatpush1.msra.mxu0 %v244
        %1401 = vmatprep.subr.mxu0 %v261
        %1402 = vmatpush1.msra.mxu0 %v260
        %1403 = vmatprep.subr.mxu0 %v277
        %1404 = vmatpush1.msra.mxu0 %v276
        %1405 = vmatprep.subr.mxu0 %v293
        %1406 = vmatpush1.msra.mxu0 %v292
        %1407 = vmatprep.subr.mxu0 %v309
        %1408 = vmatpush1.msra.mxu0 %v308
        %1409 = vmatprep.subr.mxu0 %v325
        %1410 = vmatpush1.msra.mxu0 %v324
        %1411 = vmatprep.subr.mxu0 %v341
        %1412 = vmatpush1.msra.mxu0 %v340
        %1413 = vmatprep.subr.mxu0 %v357
        %1414 = vmatpush1.msra.mxu0 %v356
        %1415 = vmatprep.subr.mxu0 %v373
        %1416 = vmatpush1.msra.mxu0 %v372
        %1417 = vmatprep.subr.mxu0 %v389
        %1418 = vmatpush1.msra.mxu0 %v388
        %1419 = vmatprep.subr.mxu0 %v405
        %1420 = vmatpush1.msra.mxu0 %v404
        %1421 = vmatprep.subr.mxu0 %v421
        %1422 = vmatpush1.msra.mxu0 %v420
        %1423 = vmatprep.subr.mxu0 %v437
        %1424 = vmatpush1.msra.mxu0 %v436
        %1425 = vmatprep.subr.mxu0 %v453
        %1426 = vmatpush1.msra.mxu0 %v452
        %1427 = vmatprep.subr.mxu0 %v469
        %1428 = vmatpush1.msra.mxu0 %v468
        %1429 = vmatprep.subr.mxu0 0.0
        %1430 = vmatpush1.msra.mxu0 0.0
        %1431 = vmatprep.subr.mxu0 0.0
        %1432 = vmatpush1.msra.mxu0 0.0
        %1433 = vmatprep.subr.mxu0 0.0
        %1434 = vmatpush1.msra.mxu0 0.0
        %1435 = vmatprep.subr.mxu0 0.0
        %1436 = vmatpush1.msra.mxu0 0.0
        %1437 = vmatprep.subr.mxu0 0.0
        %1438 = vmatpush1.msra.mxu0 0.0
        %1439 = vmatprep.subr.mxu0 0.0
        %1440 = vmatpush1.msra.mxu0 0.0
        %1441 = vmatprep.subr.mxu0 0.0
        %1442 = vmatpush1.msra.mxu0 0.0
        %1443 = vmatprep.subr.mxu0 0.0
        %1444 = vmatpush1.msra.mxu0 0.0
        %1445 = vmatprep.subr.mxu0 0.0
        %1446 = vmatpush1.msra.mxu0 0.0
        %1447 = vmatprep.subr.mxu0 0.0
        %1448 = vmatpush1.msra.mxu0 0.0
        %1449 = vmatprep.subr.mxu0 0.0
        %1450 = vmatpush1.msra.mxu0 0.0
        %1451 = vmatprep.subr.mxu0 0.0
        %1452 = vmatpush1.msra.mxu0 0.0
        %1453 = vmatprep.subr.mxu0 0.0
        %1454 = vmatpush1.msra.mxu0 0.0
        %1455 = vmatprep.subr.mxu0 0.0
        %1456 = vmatpush1.msra.mxu0 0.0
        %1457 = vmatprep.subr.mxu0 0.0
        %1458 = vmatpush1.msra.mxu0 0.0
        %1459 = vmatprep.subr.mxu0 0.0
        %1460 = vmatpush1.msra.mxu0 0.0
        %1461 = vmatprep.mubr.f32.mxu0 0.0
        %1462 = vmatmul.mubr.f32.gmra.mrb[0].mxu0 %v217
        %v1463 = vpop.f32.mrb[0].mxu0
        %v1464 = vadd.f32 0.0, %v1463
        %v1465 = vpop.f32.mrb[0].mxu0
        %v1466 = vadd.f32 0.0, %v1465
        %1467 = vdwg.mxu0
        %1468 = vmatprep.subr.mxu0 %v231
        %1469 = vmatpush1.msra.mxu0 %v230
        %1470 = vmatprep.subr.mxu0 %v247
        %1471 = vmatpush1.msra.mxu0 %v246
        %1472 = vmatprep.subr.mxu0 %v263
        %1473 = vmatpush1.msra.mxu0 %v262
        %1474 = vmatprep.subr.mxu0 %v279
        %1475 = vmatpush1.msra.mxu0 %v278
        %1476 = vmatprep.subr.mxu0 %v295
        %1477 = vmatpush1.msra.mxu0 %v294
        %1478 = vmatprep.subr.mxu0 %v311
        %1479 = vmatpush1.msra.mxu0 %v310
        %1480 = vmatprep.subr.mxu0 %v327
        %1481 = vmatpush1.msra.mxu0 %v326
        %1482 = vmatprep.subr.mxu0 %v343
        %1483 = vmatpush1.msra.mxu0 %v342
        %1484 = vmatprep.subr.mxu0 %v359
        %1485 = vmatpush1.msra.mxu0 %v358
        %1486 = vmatprep.subr.mxu0 %v375
        %1487 = vmatpush1.msra.mxu0 %v374
        %1488 = vmatprep.subr.mxu0 %v391
        %1489 = vmatpush1.msra.mxu0 %v390
        %1490 = vmatprep.subr.mxu0 %v407
        %1491 = vmatpush1.msra.mxu0 %v406
        %1492 = vmatprep.subr.mxu0 %v423
        %1493 = vmatpush1.msra.mxu0 %v422
        %1494 = vmatprep.subr.mxu0 %v439
        %1495 = vmatpush1.msra.mxu0 %v438
        %1496 = vmatprep.subr.mxu0 %v455
        %1497 = vmatpush1.msra.mxu0 %v454
        %1498 = vmatprep.subr.mxu0 %v471
        %1499 = vmatpush1.msra.mxu0 %v470
        %1500 = vmatprep.subr.mxu0 0.0
        %1501 = vmatpush1.msra.mxu0 0.0
        %1502 = vmatprep.subr.mxu0 0.0
        %1503 = vmatpush1.msra.mxu0 0.0
        %1504 = vmatprep.subr.mxu0 0.0
        %1505 = vmatpush1.msra.mxu0 0.0
        %1506 = vmatprep.subr.mxu0 0.0
        %1507 = vmatpush1.msra.mxu0 0.0
        %1508 = vmatprep.subr.mxu0 0.0
        %1509 = vmatpush1.msra.mxu0 0.0
        %1510 = vmatprep.subr.mxu0 0.0
        %1511 = vmatpush1.msra.mxu0 0.0
        %1512 = vmatprep.subr.mxu0 0.0
        %1513 = vmatpush1.msra.mxu0 0.0
        %1514 = vmatprep.subr.mxu0 0.0
        %1515 = vmatpush1.msra.mxu0 0.0
        %1516 = vmatprep.subr.mxu0 0.0
        %1517 = vmatpush1.msra.mxu0 0.0
        %1518 = vmatprep.subr.mxu0 0.0
        %1519 = vmatpush1.msra.mxu0 0.0
        %1520 = vmatprep.subr.mxu0 0.0
        %1521 = vmatpush1.msra.mxu0 0.0
        %1522 = vmatprep.subr.mxu0 0.0
        %1523 = vmatpush1.msra.mxu0 0.0
        %1524 = vmatprep.subr.mxu0 0.0
        %1525 = vmatpush1.msra.mxu0 0.0
        %1526 = vmatprep.subr.mxu0 0.0
        %1527 = vmatpush1.msra.mxu0 0.0
        %1528 = vmatprep.subr.mxu0 0.0
        %1529 = vmatpush1.msra.mxu0 0.0
        %1530 = vmatprep.subr.mxu0 0.0
        %1531 = vmatpush1.msra.mxu0 0.0
        %1532 = vmatprep.mubr.f32.mxu0 0.0
        %1533 = vmatmul.mubr.f32.gmra.mrb[0].mxu0 %v217
        %v1534 = vpop.f32.mrb[0].mxu0
        %v1535 = vadd.f32 0.0, %v1534
        %v1536 = vpop.f32.mrb[0].mxu0
        %v1537 = vadd.f32 0.0, %v1536
        %1538 = vdwg.mxu0
        %1539 = vmatprep.subr.mxu0 %v233
        %1540 = vmatpush1.msra.mxu0 %v232
        %1541 = vmatprep.subr.mxu0 %v249
        %1542 = vmatpush1.msra.mxu0 %v248
        %1543 = vmatprep.subr.mxu0 %v265
        %1544 = vmatpush1.msra.mxu0 %v264
        %1545 = vmatprep.subr.mxu0 %v281
        %1546 = vmatpush1.msra.mxu0 %v280
        %1547 = vmatprep.subr.mxu0 %v297
        %1548 = vmatpush1.msra.mxu0 %v296
        %1549 = vmatprep.subr.mxu0 %v313
        %1550 = vmatpush1.msra.mxu0 %v312
        %1551 = vmatprep.subr.mxu0 %v329
        %1552 = vmatpush1.msra.mxu0 %v328
        %1553 = vmatprep.subr.mxu0 %v345
        %1554 = vmatpush1.msra.mxu0 %v344
        %1555 = vmatprep.subr.mxu0 %v361
        %1556 = vmatpush1.msra.mxu0 %v360
        %1557 = vmatprep.subr.mxu0 %v377
        %1558 = vmatpush1.msra.mxu0 %v376
        %1559 = vmatprep.subr.mxu0 %v393
        %1560 = vmatpush1.msra.mxu0 %v392
        %1561 = vmatprep.subr.mxu0 %v409
        %1562 = vmatpush1.msra.mxu0 %v408
        %1563 = vmatprep.subr.mxu0 %v425
        %1564 = vmatpush1.msra.mxu0 %v424
        %1565 = vmatprep.subr.mxu0 %v441
        %1566 = vmatpush1.msra.mxu0 %v440
        %1567 = vmatprep.subr.mxu0 %v457
        %1568 = vmatpush1.msra.mxu0 %v456
        %1569 = vmatprep.subr.mxu0 %v473
        %1570 = vmatpush1.msra.mxu0 %v472
        %1571 = vmatprep.subr.mxu0 0.0
        %1572 = vmatpush1.msra.mxu0 0.0
        %1573 = vmatprep.subr.mxu0 0.0
        %1574 = vmatpush1.msra.mxu0 0.0
        %1575 = vmatprep.subr.mxu0 0.0
        %1576 = vmatpush1.msra.mxu0 0.0
        %1577 = vmatprep.subr.mxu0 0.0
        %1578 = vmatpush1.msra.mxu0 0.0
        %1579 = vmatprep.subr.mxu0 0.0
        %1580 = vmatpush1.msra.mxu0 0.0
        %1581 = vmatprep.subr.mxu0 0.0
        %1582 = vmatpush1.msra.mxu0 0.0
        %1583 = vmatprep.subr.mxu0 0.0
        %1584 = vmatpush1.msra.mxu0 0.0
        %1585 = vmatprep.subr.mxu0 0.0
        %1586 = vmatpush1.msra.mxu0 0.0
        %1587 = vmatprep.subr.mxu0 0.0
        %1588 = vmatpush1.msra.mxu0 0.0
        %1589 = vmatprep.subr.mxu0 0.0
        %1590 = vmatpush1.msra.mxu0 0.0
        %1591 = vmatprep.subr.mxu0 0.0
        %1592 = vmatpush1.msra.mxu0 0.0
        %1593 = vmatprep.subr.mxu0 0.0
        %1594 = vmatpush1.msra.mxu0 0.0
        %1595 = vmatprep.subr.mxu0 0.0
        %1596 = vmatpush1.msra.mxu0 0.0
        %1597 = vmatprep.subr.mxu0 0.0
        %1598 = vmatpush1.msra.mxu0 0.0
        %1599 = vmatprep.subr.mxu0 0.0
        %1600 = vmatpush1.msra.mxu0 0.0
        %1601 = vmatprep.subr.mxu0 0.0
        %1602 = vmatpush1.msra.mxu0 0.0
        %1603 = vmatprep.mubr.f32.mxu0 0.0
        %1604 = vmatmul.mubr.f32.gmra.mrb[0].mxu0 %v217
        %v1605 = vpop.f32.mrb[0].mxu0
        %v1606 = vadd.f32 0.0, %v1605
        %v1607 = vpop.f32.mrb[0].mxu0
        %v1608 = vadd.f32 0.0, %v1607
        %1609 = vdwg.mxu0
        %v1610 = vld [vmem:[#allocation7] sm:$0xff]
        %v1611 = vld [vmem:[#allocation7 + $0x8] sm:$0xff]
        %v1614 = vlaneseq
        %v1615 = vshrl.u32 %v1614, 7
        %v1616 = vsub.s32 0, %v1615
        %v1617 = vrot.slane %v1610, %v1616
        %v1618 = vlaneseq
        %v1619 = vshrl.u32 %v1618, 7
        %v1620 = vsub.s32 1, %v1619
        %v1621 = vrot.slane %v1610, %v1620
        %v1622 = vlaneseq
        %v1623 = vshrl.u32 %v1622, 7
        %v1624 = vsub.s32 2, %v1623
        %v1625 = vrot.slane %v1610, %v1624
        %v1626 = vlaneseq
        %v1627 = vshrl.u32 %v1626, 7
        %v1628 = vsub.s32 3, %v1627
        %v1629 = vrot.slane %v1610, %v1628
        %v1630 = vlaneseq
        %v1631 = vshrl.u32 %v1630, 7
        %v1632 = vsub.s32 4, %v1631
        %v1633 = vrot.slane %v1610, %v1632
        %v1634 = vlaneseq
        %v1635 = vshrl.u32 %v1634, 7
        %v1636 = vsub.s32 5, %v1635
        %v1637 = vrot.slane %v1610, %v1636
        %v1638 = vlaneseq
        %v1639 = vshrl.u32 %v1638, 7
        %v1640 = vsub.s32 6, %v1639
        %v1641 = vrot.slane %v1610, %v1640
        %v1642 = vlaneseq
        %v1643 = vshrl.u32 %v1642, 7
        %v1644 = vsub.s32 7, %v1643
        %v1645 = vrot.slane %v1610, %v1644
        %v1646 = vlaneseq
        %v1647 = vshrl.u32 %v1646, 7
        %v1648 = vsub.s32 0, %v1647
        %v1649 = vrot.slane %v1611, %v1648
        %v1650 = vlaneseq
        %v1651 = vshrl.u32 %v1650, 7
        %v1652 = vsub.s32 1, %v1651
        %v1653 = vrot.slane %v1611, %v1652
        %v1654 = vlaneseq
        %v1655 = vshrl.u32 %v1654, 7
        %v1656 = vsub.s32 2, %v1655
        %v1657 = vrot.slane %v1611, %v1656
        %v1658 = vlaneseq
        %v1659 = vshrl.u32 %v1658, 7
        %v1660 = vsub.s32 3, %v1659
        %v1661 = vrot.slane %v1611, %v1660
        %v1662 = vlaneseq
        %v1663 = vshrl.u32 %v1662, 7
        %v1664 = vsub.s32 4, %v1663
        %v1665 = vrot.slane %v1611, %v1664
        %v1666 = vlaneseq
        %v1667 = vshrl.u32 %v1666, 7
        %v1668 = vsub.s32 5, %v1667
        %v1669 = vrot.slane %v1611, %v1668
        %v1670 = vlaneseq
        %v1671 = vshrl.u32 %v1670, 7
        %v1672 = vsub.s32 6, %v1671
        %v1673 = vrot.slane %v1611, %v1672
        %v1674 = vlaneseq
        %v1675 = vshrl.u32 %v1674, 7
        %v1676 = vsub.s32 7, %v1675
        %v1677 = vrot.slane %v1611, %v1676
        %v1694 = vmul.f32 %v541, %v1617
        %v1695 = vmul.f32 %v543, %v1621
        %v1696 = vmul.f32 %v612, %v1625
        %v1697 = vmul.f32 %v614, %v1629
        %v1698 = vmul.f32 %v683, %v1633
        %v1699 = vmul.f32 %v685, %v1637
        %v1700 = vmul.f32 %v754, %v1641
        %v1701 = vmul.f32 %v756, %v1645
        %v1702 = vmul.f32 %v825, %v1649
        %v1703 = vmul.f32 %v827, %v1653
        %v1704 = vmul.f32 %v896, %v1657
        %v1705 = vmul.f32 %v898, %v1661
        %v1706 = vmul.f32 %v967, %v1665
        %v1707 = vmul.f32 %v969, %v1669
        %v1708 = vmul.f32 %v1038, %v1673
        %v1709 = vmul.f32 %v1040, %v1677
        %v1710 = vand.u32 2147483647, %v1694
        %vm1711 = vcmp.le.f32.partialorder %v1710, 0.7853982
        %vm1712 = vcmp.lt.s32.totalorder %v1694, 0
        %v1713 = vand.u32 %v1694, 2139095040
        %v1714 = vshrl.u32 %v1713, 23
        %v1715 = vsub.s32 %v1714, 127
        %v1716 = vand.u32 2147483647, %v1694
        %v1717 = vand.u32 %v1716, 8388607
        %v1718 = vor.u32 %v1717, 8388608
        %v1719 = vsub.s32 0, %v1718
        %v1720 = vadd.s32 %v1715, 1
        %vm1721 = vcmp.gt.s32.totalorder %v1720, 0
        %v1722 = vsel %vm1721, %v1720, 0
        %v1723 = vshrl.u32 %v1722, 5
        %v1724 = vand.u32 %v1722, 31
        %v1725 = vsub.s32 32, %v1724
        %v1726 = vshrl.u32 683565275, %v1725
        %v1727 = vshll.u32 683565275, %v1724
        %v1728 = vshrl.u32 2475754826, %v1725
        %v1729 = vor.u32 %v1727, %v1728
        %v1730 = vshll.u32 2475754826, %v1724
        %v1731 = vshrl.u32 2131351028, %v1725
        %v1732 = vor.u32 %v1730, %v1731
        %v1733 = vshll.u32 2131351028, %v1724
        %v1734 = vshrl.u32 2102212464, %v1725
        %v1735 = vor.u32 %v1733, %v1734
        %v1736 = vshll.u32 2102212464, %v1724
        %v1737 = vshrl.u32 920167782, %v1725
        %v1738 = vor.u32 %v1736, %v1737
        %v1739 = vshll.u32 920167782, %v1724
        %v1740 = vshrl.u32 1326507024, %v1725
        %v1741 = vor.u32 %v1739, %v1740
        %vm1742 = vcmp.lt.s32.totalorder %v1723, 1
        %vm1743 = vcmp.lt.s32.totalorder %v1723, 2
        %vm1744 = vcmp.lt.s32.totalorder %v1723, 3
        %vm1745 = vcmp.lt.s32.totalorder %v1723, 4
        %v1746 = vsel %vm1742, %v1726, %v1729
        %v1747 = vsel %vm1745, %v1735, 2102212464
        %v1748 = vsel %vm1744, %v1732, %v1747
        %v1749 = vsel %vm1743, %v1746, %v1748
        %v1750 = vsel %vm1742, %v1729, %v1732
        %v1751 = vsel %vm1745, %v1738, 920167782
        %v1752 = vsel %vm1744, %v1735, %v1751
        %v1753 = vsel %vm1743, %v1750, %v1752
        %v1754 = vsel %vm1742, %v1732, %v1735
        %v1755 = vsel %vm1745, %v1741, 1326507024
        %v1756 = vsel %vm1744, %v1738, %v1755
        %v1757 = vsel %vm1743, %v1754, %v1756
        %v1758 = vshll.u32 %v1718, 8
        %v1759 = vmul.u32.u64.compose %v1758, %v1757
        %v1760 = vextract.low.u32 %v1759
        %v1761 = vextract.high.u32 %v1759
        %v1762 = vmul.u32.u64.compose %v1758, %v1753
        %v1763 = vextract.low.u32 %v1762
        %v1764 = vextract.high.u32 %v1762
        %v1765 = vmul.u32 %v1758, %v1749
        %v1766 = vadd.s32 %v1761, %v1763
        %vm1767 = vc.u32 %v1761, %v1763
        %v1768 = vadd.s32 %v1764, 1
        %v1769 = vsel %vm1767, %v1768, %v1764
        %v1770 = vadd.s32 %v1765, %v1769
        %v1771 = vadd.s32 %v1770, 536870912
        %v1772 = vshrl.u32 %v1771, 30
        %v1773 = vshll.u32 %v1772, 30
        %v1774 = vsub.s32 %v1770, %v1773
        %vm1775 = vcmp.lt.s32.totalorder %v1774, 0
        %v1776 = vsub.s32 0, %v1774
        %v1777 = vsel %vm1775, %v1776, %v1774
        %v1778 = vclz %v1777
        %v1779 = vsub.s32 %v1778, 2
        %vm1780 = vcmp.gt.s32.totalorder 0, %v1779
        %v1781 = vsel %vm1780, 0, %v1779
        %v1782 = vsub.s32 32, %v1781
        %v1783 = vshll.u32 %v1774, %v1781
        %v1784 = vshrl.u32 %v1766, %v1782
        %v1785 = vor.u32 %v1783, %v1784
        %v1786 = vsub.s32 4294967266, %v1781
        %v1787 = vadd.s32 %v1786, 127
        %v1788 = vshll.u32 %v1787, 23
        %v1789 = vor.u32 4788187, %v1788
        %v1790 = vand.u32 2147483647, %v1789
        %v1792 = vcvt.s32.f32 %v1785
        %v1793 = vmul.f32 %v1792, %v1790
        %v1794 = vxor.u32 %v1793, 2147483648
        %v1795 = vsel %vm1712, %v1794, %v1793
        %v1796 = vsub.s32 4, %v1772
        %v1797 = vsel %vm1712, %v1796, %v1772
        %v1798 = vsel %vm1711, %v1694, %v1795
        %v1799 = vsel %vm1711, 0, %v1797
        %v1800 = vcosq.f32.pop %v1798
        %v1801 = vsinq.f32.pop %v1798
        %vm1802 = vweird.f32 %v1694
        %v1803 = vadd.s32 %v1799, 3
        %v1804 = vand.u32 %v1803, 3
        %vm1805 = vcmp.lt.s32.totalorder %v1804, 2
        %vm1806 = vcmp.eq.s32.totalorder %v1804, 0
        %v1807 = vxor.u32 %v1801, 2147483648
        %v1808 = vsel %vm1806, %v1800, %v1807
        %vm1809 = vcmp.eq.s32.totalorder %v1804, 2
        %v1810 = vxor.u32 %v1800, 2147483648
        %v1811 = vsel %vm1809, %v1810, %v1801
        %v1812 = vsel %vm1805, %v1808, %v1811
        %v1813 = vsel %vm1802, nan, %v1812
        %v1814 = vand.u32 2147483647, %v1695
        %vm1815 = vcmp.le.f32.partialorder %v1814, 0.7853982
        %vm1816 = vcmp.lt.s32.totalorder %v1695, 0
        %v1817 = vand.u32 %v1695, 2139095040
        %v1818 = vshrl.u32 %v1817, 23
        %v1819 = vsub.s32 %v1818, 127
        %v1820 = vand.u32 2147483647, %v1695
        %v1821 = vand.u32 %v1820, 8388607
        %v1822 = vor.u32 %v1821, 8388608
        %v1823 = vsub.s32 0, %v1822
        %v1824 = vadd.s32 %v1819, 1
        %vm1825 = vcmp.gt.s32.totalorder %v1824, 0
        %v1826 = vsel %vm1825, %v1824, 0
        %v1827 = vshrl.u32 %v1826, 5
        %v1828 = vand.u32 %v1826, 31
        %v1829 = vsub.s32 32, %v1828
        %v1830 = vshrl.u32 683565275, %v1829
        %v1831 = vshll.u32 683565275, %v1828
        %v1832 = vshrl.u32 2475754826, %v1829
        %v1833 = vor.u32 %v1831, %v1832
        %v1834 = vshll.u32 2475754826, %v1828
        %v1835 = vshrl.u32 2131351028, %v1829
        %v1836 = vor.u32 %v1834, %v1835
        %v1837 = vshll.u32 2131351028, %v1828
        %v1838 = vshrl.u32 2102212464, %v1829
        %v1839 = vor.u32 %v1837, %v1838
        %v1840 = vshll.u32 2102212464, %v1828
        %v1841 = vshrl.u32 920167782, %v1829
        %v1842 = vor.u32 %v1840, %v1841
        %v1843 = vshll.u32 920167782, %v1828
        %v1844 = vshrl.u32 1326507024, %v1829
        %v1845 = vor.u32 %v1843, %v1844
        %vm1846 = vcmp.lt.s32.totalorder %v1827, 1
        %vm1847 = vcmp.lt.s32.totalorder %v1827, 2
        %vm1848 = vcmp.lt.s32.totalorder %v1827, 3
        %vm1849 = vcmp.lt.s32.totalorder %v1827, 4
        %v1850 = vsel %vm1846, %v1830, %v1833
        %v1851 = vsel %vm1849, %v1839, 2102212464
        %v1852 = vsel %vm1848, %v1836, %v1851
        %v1853 = vsel %vm1847, %v1850, %v1852
        %v1854 = vsel %vm1846, %v1833, %v1836
        %v1855 = vsel %vm1849, %v1842, 920167782
        %v1856 = vsel %vm1848, %v1839, %v1855
        %v1857 = vsel %vm1847, %v1854, %v1856
        %v1858 = vsel %vm1846, %v1836, %v1839
        %v1859 = vsel %vm1849, %v1845, 1326507024
        %v1860 = vsel %vm1848, %v1842, %v1859
        %v1861 = vsel %vm1847, %v1858, %v1860
        %v1862 = vshll.u32 %v1822, 8
        %v1863 = vmul.u32.u64.compose %v1862, %v1861
        %v1864 = vextract.low.u32 %v1863
        %v1865 = vextract.high.u32 %v1863
        %v1866 = vmul.u32.u64.compose %v1862, %v1857
        %v1867 = vextract.low.u32 %v1866
        %v1868 = vextract.high.u32 %v1866
        %v1869 = vmul.u32 %v1862, %v1853
        %v1870 = vadd.s32 %v1865, %v1867
        %vm1871 = vc.u32 %v1865, %v1867
        %v1872 = vadd.s32 %v1868, 1
        %v1873 = vsel %vm1871, %v1872, %v1868
        %v1874 = vadd.s32 %v1869, %v1873
        %v1875 = vadd.s32 %v1874, 536870912
        %v1876 = vshrl.u32 %v1875, 30
        %v1877 = vshll.u32 %v1876, 30
        %v1878 = vsub.s32 %v1874, %v1877
        %vm1879 = vcmp.lt.s32.totalorder %v1878, 0
        %v1880 = vsub.s32 0, %v1878
        %v1881 = vsel %vm1879, %v1880, %v1878
        %v1882 = vclz %v1881
        %v1883 = vsub.s32 %v1882, 2
        %vm1884 = vcmp.gt.s32.totalorder 0, %v1883
        %v1885 = vsel %vm1884, 0, %v1883
        %v1886 = vsub.s32 32, %v1885
        %v1887 = vshll.u32 %v1878, %v1885
        %v1888 = vshrl.u32 %v1870, %v1886
        %v1889 = vor.u32 %v1887, %v1888
        %v1890 = vsub.s32 4294967266, %v1885
        %v1891 = vadd.s32 %v1890, 127
        %v1892 = vshll.u32 %v1891, 23
        %v1893 = vor.u32 4788187, %v1892
        %v1894 = vand.u32 2147483647, %v1893
        %v1896 = vcvt.s32.f32 %v1889
        %v1897 = vmul.f32 %v1896, %v1894
        %v1898 = vxor.u32 %v1897, 2147483648
        %v1899 = vsel %vm1816, %v1898, %v1897
        %v1900 = vsub.s32 4, %v1876
        %v1901 = vsel %vm1816, %v1900, %v1876
        %v1902 = vsel %vm1815, %v1695, %v1899
        %v1903 = vsel %vm1815, 0, %v1901
        %v1904 = vcosq.f32.pop %v1902
        %v1905 = vsinq.f32.pop %v1902
        %vm1906 = vweird.f32 %v1695
        %v1907 = vadd.s32 %v1903, 3
        %v1908 = vand.u32 %v1907, 3
        %vm1909 = vcmp.lt.s32.totalorder %v1908, 2
        %vm1910 = vcmp.eq.s32.totalorder %v1908, 0
        %v1911 = vxor.u32 %v1905, 2147483648
        %v1912 = vsel %vm1910, %v1904, %v1911
        %vm1913 = vcmp.eq.s32.totalorder %v1908, 2
        %v1914 = vxor.u32 %v1904, 2147483648
        %v1915 = vsel %vm1913, %v1914, %v1905
        %v1916 = vsel %vm1909, %v1912, %v1915
        %v1917 = vsel %vm1906, nan, %v1916
        %v1918 = vand.u32 2147483647, %v1696
        %vm1919 = vcmp.le.f32.partialorder %v1918, 0.7853982
        %vm1920 = vcmp.lt.s32.totalorder %v1696, 0
        %v1921 = vand.u32 %v1696, 2139095040
        %v1922 = vshrl.u32 %v1921, 23
        %v1923 = vsub.s32 %v1922, 127
        %v1924 = vand.u32 2147483647, %v1696
        %v1925 = vand.u32 %v1924, 8388607
        %v1926 = vor.u32 %v1925, 8388608
        %v1927 = vsub.s32 0, %v1926
        %v1928 = vadd.s32 %v1923, 1
        %vm1929 = vcmp.gt.s32.totalorder %v1928, 0
        %v1930 = vsel %vm1929, %v1928, 0
        %v1931 = vshrl.u32 %v1930, 5
        %v1932 = vand.u32 %v1930, 31
        %v1933 = vsub.s32 32, %v1932
        %v1934 = vshrl.u32 683565275, %v1933
        %v1935 = vshll.u32 683565275, %v1932
        %v1936 = vshrl.u32 2475754826, %v1933
        %v1937 = vor.u32 %v1935, %v1936
        %v1938 = vshll.u32 2475754826, %v1932
        %v1939 = vshrl.u32 2131351028, %v1933
        %v1940 = vor.u32 %v1938, %v1939
        %v1941 = vshll.u32 2131351028, %v1932
        %v1942 = vshrl.u32 2102212464, %v1933
        %v1943 = vor.u32 %v1941, %v1942
        %v1944 = vshll.u32 2102212464, %v1932
        %v1945 = vshrl.u32 920167782, %v1933
        %v1946 = vor.u32 %v1944, %v1945
        %v1947 = vshll.u32 920167782, %v1932
        %v1948 = vshrl.u32 1326507024, %v1933
        %v1949 = vor.u32 %v1947, %v1948
        %vm1950 = vcmp.lt.s32.totalorder %v1931, 1
        %vm1951 = vcmp.lt.s32.totalorder %v1931, 2
        %vm1952 = vcmp.lt.s32.totalorder %v1931, 3
        %vm1953 = vcmp.lt.s32.totalorder %v1931, 4
        %v1954 = vsel %vm1950, %v1934, %v1937
        %v1955 = vsel %vm1953, %v1943, 2102212464
        %v1956 = vsel %vm1952, %v1940, %v1955
        %v1957 = vsel %vm1951, %v1954, %v1956
        %v1958 = vsel %vm1950, %v1937, %v1940
        %v1959 = vsel %vm1953, %v1946, 920167782
        %v1960 = vsel %vm1952, %v1943, %v1959
        %v1961 = vsel %vm1951, %v1958, %v1960
        %v1962 = vsel %vm1950, %v1940, %v1943
        %v1963 = vsel %vm1953, %v1949, 1326507024
        %v1964 = vsel %vm1952, %v1946, %v1963
        %v1965 = vsel %vm1951, %v1962, %v1964
        %v1966 = vshll.u32 %v1926, 8
        %v1967 = vmul.u32.u64.compose %v1966, %v1965
        %v1968 = vextract.low.u32 %v1967
        %v1969 = vextract.high.u32 %v1967
        %v1970 = vmul.u32.u64.compose %v1966, %v1961
        %v1971 = vextract.low.u32 %v1970
        %v1972 = vextract.high.u32 %v1970
        %v1973 = vmul.u32 %v1966, %v1957
        %v1974 = vadd.s32 %v1969, %v1971
        %vm1975 = vc.u32 %v1969, %v1971
        %v1976 = vadd.s32 %v1972, 1
        %v1977 = vsel %vm1975, %v1976, %v1972
        %v1978 = vadd.s32 %v1973, %v1977
        %v1979 = vadd.s32 %v1978, 536870912
        %v1980 = vshrl.u32 %v1979, 30
        %v1981 = vshll.u32 %v1980, 30
        %v1982 = vsub.s32 %v1978, %v1981
        %vm1983 = vcmp.lt.s32.totalorder %v1982, 0
        %v1984 = vsub.s32 0, %v1982
        %v1985 = vsel %vm1983, %v1984, %v1982
        %v1986 = vclz %v1985
        %v1987 = vsub.s32 %v1986, 2
        %vm1988 = vcmp.gt.s32.totalorder 0, %v1987
        %v1989 = vsel %vm1988, 0, %v1987
        %v1990 = vsub.s32 32, %v1989
        %v1991 = vshll.u32 %v1982, %v1989
        %v1992 = vshrl.u32 %v1974, %v1990
        %v1993 = vor.u32 %v1991, %v1992
        %v1994 = vsub.s32 4294967266, %v1989
        %v1995 = vadd.s32 %v1994, 127
        %v1996 = vshll.u32 %v1995, 23
        %v1997 = vor.u32 4788187, %v1996
        %v1998 = vand.u32 2147483647, %v1997
        %v2000 = vcvt.s32.f32 %v1993
        %v2001 = vmul.f32 %v2000, %v1998
        %v2002 = vxor.u32 %v2001, 2147483648
        %v2003 = vsel %vm1920, %v2002, %v2001
        %v2004 = vsub.s32 4, %v1980
        %v2005 = vsel %vm1920, %v2004, %v1980
        %v2006 = vsel %vm1919, %v1696, %v2003
        %v2007 = vsel %vm1919, 0, %v2005
        %v2008 = vcosq.f32.pop %v2006
        %v2009 = vsinq.f32.pop %v2006
        %vm2010 = vweird.f32 %v1696
        %v2011 = vadd.s32 %v2007, 3
        %v2012 = vand.u32 %v2011, 3
        %vm2013 = vcmp.lt.s32.totalorder %v2012, 2
        %vm2014 = vcmp.eq.s32.totalorder %v2012, 0
        %v2015 = vxor.u32 %v2009, 2147483648
        %v2016 = vsel %vm2014, %v2008, %v2015
        %vm2017 = vcmp.eq.s32.totalorder %v2012, 2
        %v2018 = vxor.u32 %v2008, 2147483648
        %v2019 = vsel %vm2017, %v2018, %v2009
        %v2020 = vsel %vm2013, %v2016, %v2019
        %v2021 = vsel %vm2010, nan, %v2020
        %v2022 = vand.u32 2147483647, %v1697
        %vm2023 = vcmp.le.f32.partialorder %v2022, 0.7853982
        %vm2024 = vcmp.lt.s32.totalorder %v1697, 0
        %v2025 = vand.u32 %v1697, 2139095040
        %v2026 = vshrl.u32 %v2025, 23
        %v2027 = vsub.s32 %v2026, 127
        %v2028 = vand.u32 2147483647, %v1697
        %v2029 = vand.u32 %v2028, 8388607
        %v2030 = vor.u32 %v2029, 8388608
        %v2031 = vsub.s32 0, %v2030
        %v2032 = vadd.s32 %v2027, 1
        %vm2033 = vcmp.gt.s32.totalorder %v2032, 0
        %v2034 = vsel %vm2033, %v2032, 0
        %v2035 = vshrl.u32 %v2034, 5
        %v2036 = vand.u32 %v2034, 31
        %v2037 = vsub.s32 32, %v2036
        %v2038 = vshrl.u32 683565275, %v2037
        %v2039 = vshll.u32 683565275, %v2036
        %v2040 = vshrl.u32 2475754826, %v2037
        %v2041 = vor.u32 %v2039, %v2040
        %v2042 = vshll.u32 2475754826, %v2036
        %v2043 = vshrl.u32 2131351028, %v2037
        %v2044 = vor.u32 %v2042, %v2043
        %v2045 = vshll.u32 2131351028, %v2036
        %v2046 = vshrl.u32 2102212464, %v2037
        %v2047 = vor.u32 %v2045, %v2046
        %v2048 = vshll.u32 2102212464, %v2036
        %v2049 = vshrl.u32 920167782, %v2037
        %v2050 = vor.u32 %v2048, %v2049
        %v2051 = vshll.u32 920167782, %v2036
        %v2052 = vshrl.u32 1326507024, %v2037
        %v2053 = vor.u32 %v2051, %v2052
        %vm2054 = vcmp.lt.s32.totalorder %v2035, 1
        %vm2055 = vcmp.lt.s32.totalorder %v2035, 2
        %vm2056 = vcmp.lt.s32.totalorder %v2035, 3
        %vm2057 = vcmp.lt.s32.totalorder %v2035, 4
        %v2058 = vsel %vm2054, %v2038, %v2041
        %v2059 = vsel %vm2057, %v2047, 2102212464
        %v2060 = vsel %vm2056, %v2044, %v2059
        %v2061 = vsel %vm2055, %v2058, %v2060
        %v2062 = vsel %vm2054, %v2041, %v2044
        %v2063 = vsel %vm2057, %v2050, 920167782
        %v2064 = vsel %vm2056, %v2047, %v2063
        %v2065 = vsel %vm2055, %v2062, %v2064
        %v2066 = vsel %vm2054, %v2044, %v2047
        %v2067 = vsel %vm2057, %v2053, 1326507024
        %v2068 = vsel %vm2056, %v2050, %v2067
        %v2069 = vsel %vm2055, %v2066, %v2068
        %v2070 = vshll.u32 %v2030, 8
        %v2071 = vmul.u32.u64.compose %v2070, %v2069
        %v2072 = vextract.low.u32 %v2071
        %v2073 = vextract.high.u32 %v2071
        %v2074 = vmul.u32.u64.compose %v2070, %v2065
        %v2075 = vextract.low.u32 %v2074
        %v2076 = vextract.high.u32 %v2074
        %v2077 = vmul.u32 %v2070, %v2061
        %v2078 = vadd.s32 %v2073, %v2075
        %vm2079 = vc.u32 %v2073, %v2075
        %v2080 = vadd.s32 %v2076, 1
        %v2081 = vsel %vm2079, %v2080, %v2076
        %v2082 = vadd.s32 %v2077, %v2081
        %v2083 = vadd.s32 %v2082, 536870912
        %v2084 = vshrl.u32 %v2083, 30
        %v2085 = vshll.u32 %v2084, 30
        %v2086 = vsub.s32 %v2082, %v2085
        %vm2087 = vcmp.lt.s32.totalorder %v2086, 0
        %v2088 = vsub.s32 0, %v2086
        %v2089 = vsel %vm2087, %v2088, %v2086
        %v2090 = vclz %v2089
        %v2091 = vsub.s32 %v2090, 2
        %vm2092 = vcmp.gt.s32.totalorder 0, %v2091
        %v2093 = vsel %vm2092, 0, %v2091
        %v2094 = vsub.s32 32, %v2093
        %v2095 = vshll.u32 %v2086, %v2093
        %v2096 = vshrl.u32 %v2078, %v2094
        %v2097 = vor.u32 %v2095, %v2096
        %v2098 = vsub.s32 4294967266, %v2093
        %v2099 = vadd.s32 %v2098, 127
        %v2100 = vshll.u32 %v2099, 23
        %v2101 = vor.u32 4788187, %v2100
        %v2102 = vand.u32 2147483647, %v2101
        %v2104 = vcvt.s32.f32 %v2097
        %v2105 = vmul.f32 %v2104, %v2102
        %v2106 = vxor.u32 %v2105, 2147483648
        %v2107 = vsel %vm2024, %v2106, %v2105
        %v2108 = vsub.s32 4, %v2084
        %v2109 = vsel %vm2024, %v2108, %v2084
        %v2110 = vsel %vm2023, %v1697, %v2107
        %v2111 = vsel %vm2023, 0, %v2109
        %v2112 = vcosq.f32.pop %v2110
        %v2113 = vsinq.f32.pop %v2110
        %vm2114 = vweird.f32 %v1697
        %v2115 = vadd.s32 %v2111, 3
        %v2116 = vand.u32 %v2115, 3
        %vm2117 = vcmp.lt.s32.totalorder %v2116, 2
        %vm2118 = vcmp.eq.s32.totalorder %v2116, 0
        %v2119 = vxor.u32 %v2113, 2147483648
        %v2120 = vsel %vm2118, %v2112, %v2119
        %vm2121 = vcmp.eq.s32.totalorder %v2116, 2
        %v2122 = vxor.u32 %v2112, 2147483648
        %v2123 = vsel %vm2121, %v2122, %v2113
        %v2124 = vsel %vm2117, %v2120, %v2123
        %v2125 = vsel %vm2114, nan, %v2124
        %v2126 = vand.u32 2147483647, %v1698
        %vm2127 = vcmp.le.f32.partialorder %v2126, 0.7853982
        %vm2128 = vcmp.lt.s32.totalorder %v1698, 0
        %v2129 = vand.u32 %v1698, 2139095040
        %v2130 = vshrl.u32 %v2129, 23
        %v2131 = vsub.s32 %v2130, 127
        %v2132 = vand.u32 2147483647, %v1698
        %v2133 = vand.u32 %v2132, 8388607
        %v2134 = vor.u32 %v2133, 8388608
        %v2135 = vsub.s32 0, %v2134
        %v2136 = vadd.s32 %v2131, 1
        %vm2137 = vcmp.gt.s32.totalorder %v2136, 0
        %v2138 = vsel %vm2137, %v2136, 0
        %v2139 = vshrl.u32 %v2138, 5
        %v2140 = vand.u32 %v2138, 31
        %v2141 = vsub.s32 32, %v2140
        %v2142 = vshrl.u32 683565275, %v2141
        %v2143 = vshll.u32 683565275, %v2140
        %v2144 = vshrl.u32 2475754826, %v2141
        %v2145 = vor.u32 %v2143, %v2144
        %v2146 = vshll.u32 2475754826, %v2140
        %v2147 = vshrl.u32 2131351028, %v2141
        %v2148 = vor.u32 %v2146, %v2147
        %v2149 = vshll.u32 2131351028, %v2140
        %v2150 = vshrl.u32 2102212464, %v2141
        %v2151 = vor.u32 %v2149, %v2150
        %v2152 = vshll.u32 2102212464, %v2140
        %v2153 = vshrl.u32 920167782, %v2141
        %v2154 = vor.u32 %v2152, %v2153
        %v2155 = vshll.u32 920167782, %v2140
        %v2156 = vshrl.u32 1326507024, %v2141
        %v2157 = vor.u32 %v2155, %v2156
        %vm2158 = vcmp.lt.s32.totalorder %v2139, 1
        %vm2159 = vcmp.lt.s32.totalorder %v2139, 2
        %vm2160 = vcmp.lt.s32.totalorder %v2139, 3
        %vm2161 = vcmp.lt.s32.totalorder %v2139, 4
        %v2162 = vsel %vm2158, %v2142, %v2145
        %v2163 = vsel %vm2161, %v2151, 2102212464
        %v2164 = vsel %vm2160, %v2148, %v2163
        %v2165 = vsel %vm2159, %v2162, %v2164
        %v2166 = vsel %vm2158, %v2145, %v2148
        %v2167 = vsel %vm2161, %v2154, 920167782
        %v2168 = vsel %vm2160, %v2151, %v2167
        %v2169 = vsel %vm2159, %v2166, %v2168
        %v2170 = vsel %vm2158, %v2148, %v2151
        %v2171 = vsel %vm2161, %v2157, 1326507024
        %v2172 = vsel %vm2160, %v2154, %v2171
        %v2173 = vsel %vm2159, %v2170, %v2172
        %v2174 = vshll.u32 %v2134, 8
        %v2175 = vmul.u32.u64.compose %v2174, %v2173
        %v2176 = vextract.low.u32 %v2175
        %v2177 = vextract.high.u32 %v2175
        %v2178 = vmul.u32.u64.compose %v2174, %v2169
        %v2179 = vextract.low.u32 %v2178
        %v2180 = vextract.high.u32 %v2178
        %v2181 = vmul.u32 %v2174, %v2165
        %v2182 = vadd.s32 %v2177, %v2179
        %vm2183 = vc.u32 %v2177, %v2179
        %v2184 = vadd.s32 %v2180, 1
        %v2185 = vsel %vm2183, %v2184, %v2180
        %v2186 = vadd.s32 %v2181, %v2185
        %v2187 = vadd.s32 %v2186, 536870912
        %v2188 = vshrl.u32 %v2187, 30
        %v2189 = vshll.u32 %v2188, 30
        %v2190 = vsub.s32 %v2186, %v2189
        %vm2191 = vcmp.lt.s32.totalorder %v2190, 0
        %v2192 = vsub.s32 0, %v2190
        %v2193 = vsel %vm2191, %v2192, %v2190
        %v2194 = vclz %v2193
        %v2195 = vsub.s32 %v2194, 2
        %vm2196 = vcmp.gt.s32.totalorder 0, %v2195
        %v2197 = vsel %vm2196, 0, %v2195
        %v2198 = vsub.s32 32, %v2197
        %v2199 = vshll.u32 %v2190, %v2197
        %v2200 = vshrl.u32 %v2182, %v2198
        %v2201 = vor.u32 %v2199, %v2200
        %v2202 = vsub.s32 4294967266, %v2197
        %v2203 = vadd.s32 %v2202, 127
        %v2204 = vshll.u32 %v2203, 23
        %v2205 = vor.u32 4788187, %v2204
        %v2206 = vand.u32 2147483647, %v2205
        %v2208 = vcvt.s32.f32 %v2201
        %v2209 = vmul.f32 %v2208, %v2206
        %v2210 = vxor.u32 %v2209, 2147483648
        %v2211 = vsel %vm2128, %v2210, %v2209
        %v2212 = vsub.s32 4, %v2188
        %v2213 = vsel %vm2128, %v2212, %v2188
        %v2214 = vsel %vm2127, %v1698, %v2211
        %v2215 = vsel %vm2127, 0, %v2213
        %v2216 = vcosq.f32.pop %v2214
        %v2217 = vsinq.f32.pop %v2214
        %vm2218 = vweird.f32 %v1698
        %v2219 = vadd.s32 %v2215, 3
        %v2220 = vand.u32 %v2219, 3
        %vm2221 = vcmp.lt.s32.totalorder %v2220, 2
        %vm2222 = vcmp.eq.s32.totalorder %v2220, 0
        %v2223 = vxor.u32 %v2217, 2147483648
        %v2224 = vsel %vm2222, %v2216, %v2223
        %vm2225 = vcmp.eq.s32.totalorder %v2220, 2
        %v2226 = vxor.u32 %v2216, 2147483648
        %v2227 = vsel %vm2225, %v2226, %v2217
        %v2228 = vsel %vm2221, %v2224, %v2227
        %v2229 = vsel %vm2218, nan, %v2228
        %v2230 = vand.u32 2147483647, %v1699
        %vm2231 = vcmp.le.f32.partialorder %v2230, 0.7853982
        %vm2232 = vcmp.lt.s32.totalorder %v1699, 0
        %v2233 = vand.u32 %v1699, 2139095040
        %v2234 = vshrl.u32 %v2233, 23
        %v2235 = vsub.s32 %v2234, 127
        %v2236 = vand.u32 2147483647, %v1699
        %v2237 = vand.u32 %v2236, 8388607
        %v2238 = vor.u32 %v2237, 8388608
        %v2239 = vsub.s32 0, %v2238
        %v2240 = vadd.s32 %v2235, 1
        %vm2241 = vcmp.gt.s32.totalorder %v2240, 0
        %v2242 = vsel %vm2241, %v2240, 0
        %v2243 = vshrl.u32 %v2242, 5
        %v2244 = vand.u32 %v2242, 31
        %v2245 = vsub.s32 32, %v2244
        %v2246 = vshrl.u32 683565275, %v2245
        %v2247 = vshll.u32 683565275, %v2244
        %v2248 = vshrl.u32 2475754826, %v2245
        %v2249 = vor.u32 %v2247, %v2248
        %v2250 = vshll.u32 2475754826, %v2244
        %v2251 = vshrl.u32 2131351028, %v2245
        %v2252 = vor.u32 %v2250, %v2251
        %v2253 = vshll.u32 2131351028, %v2244
        %v2254 = vshrl.u32 2102212464, %v2245
        %v2255 = vor.u32 %v2253, %v2254
        %v2256 = vshll.u32 2102212464, %v2244
        %v2257 = vshrl.u32 920167782, %v2245
        %v2258 = vor.u32 %v2256, %v2257
        %v2259 = vshll.u32 920167782, %v2244
        %v2260 = vshrl.u32 1326507024, %v2245
        %v2261 = vor.u32 %v2259, %v2260
        %vm2262 = vcmp.lt.s32.totalorder %v2243, 1
        %vm2263 = vcmp.lt.s32.totalorder %v2243, 2
        %vm2264 = vcmp.lt.s32.totalorder %v2243, 3
        %vm2265 = vcmp.lt.s32.totalorder %v2243, 4
        %v2266 = vsel %vm2262, %v2246, %v2249
        %v2267 = vsel %vm2265, %v2255, 2102212464
        %v2268 = vsel %vm2264, %v2252, %v2267
        %v2269 = vsel %vm2263, %v2266, %v2268
        %v2270 = vsel %vm2262, %v2249, %v2252
        %v2271 = vsel %vm2265, %v2258, 920167782
        %v2272 = vsel %vm2264, %v2255, %v2271
        %v2273 = vsel %vm2263, %v2270, %v2272
        %v2274 = vsel %vm2262, %v2252, %v2255
        %v2275 = vsel %vm2265, %v2261, 1326507024
        %v2276 = vsel %vm2264, %v2258, %v2275
        %v2277 = vsel %vm2263, %v2274, %v2276
        %v2278 = vshll.u32 %v2238, 8
        %v2279 = vmul.u32.u64.compose %v2278, %v2277
        %v2280 = vextract.low.u32 %v2279
        %v2281 = vextract.high.u32 %v2279
        %v2282 = vmul.u32.u64.compose %v2278, %v2273
        %v2283 = vextract.low.u32 %v2282
        %v2284 = vextract.high.u32 %v2282
        %v2285 = vmul.u32 %v2278, %v2269
        %v2286 = vadd.s32 %v2281, %v2283
        %vm2287 = vc.u32 %v2281, %v2283
        %v2288 = vadd.s32 %v2284, 1
        %v2289 = vsel %vm2287, %v2288, %v2284
        %v2290 = vadd.s32 %v2285, %v2289
        %v2291 = vadd.s32 %v2290, 536870912
        %v2292 = vshrl.u32 %v2291, 30
        %v2293 = vshll.u32 %v2292, 30
        %v2294 = vsub.s32 %v2290, %v2293
        %vm2295 = vcmp.lt.s32.totalorder %v2294, 0
        %v2296 = vsub.s32 0, %v2294
        %v2297 = vsel %vm2295, %v2296, %v2294
        %v2298 = vclz %v2297
        %v2299 = vsub.s32 %v2298, 2
        %vm2300 = vcmp.gt.s32.totalorder 0, %v2299
        %v2301 = vsel %vm2300, 0, %v2299
        %v2302 = vsub.s32 32, %v2301
        %v2303 = vshll.u32 %v2294, %v2301
        %v2304 = vshrl.u32 %v2286, %v2302
        %v2305 = vor.u32 %v2303, %v2304
        %v2306 = vsub.s32 4294967266, %v2301
        %v2307 = vadd.s32 %v2306, 127
        %v2308 = vshll.u32 %v2307, 23
        %v2309 = vor.u32 4788187, %v2308
        %v2310 = vand.u32 2147483647, %v2309
        %v2312 = vcvt.s32.f32 %v2305
        %v2313 = vmul.f32 %v2312, %v2310
        %v2314 = vxor.u32 %v2313, 2147483648
        %v2315 = vsel %vm2232, %v2314, %v2313
        %v2316 = vsub.s32 4, %v2292
        %v2317 = vsel %vm2232, %v2316, %v2292
        %v2318 = vsel %vm2231, %v1699, %v2315
        %v2319 = vsel %vm2231, 0, %v2317
        %v2320 = vcosq.f32.pop %v2318
        %v2321 = vsinq.f32.pop %v2318
        %vm2322 = vweird.f32 %v1699
        %v2323 = vadd.s32 %v2319, 3
        %v2324 = vand.u32 %v2323, 3
        %vm2325 = vcmp.lt.s32.totalorder %v2324, 2
        %vm2326 = vcmp.eq.s32.totalorder %v2324, 0
        %v2327 = vxor.u32 %v2321, 2147483648
        %v2328 = vsel %vm2326, %v2320, %v2327
        %vm2329 = vcmp.eq.s32.totalorder %v2324, 2
        %v2330 = vxor.u32 %v2320, 2147483648
        %v2331 = vsel %vm2329, %v2330, %v2321
        %v2332 = vsel %vm2325, %v2328, %v2331
        %v2333 = vsel %vm2322, nan, %v2332
        %v2334 = vand.u32 2147483647, %v1700
        %vm2335 = vcmp.le.f32.partialorder %v2334, 0.7853982
        %vm2336 = vcmp.lt.s32.totalorder %v1700, 0
        %v2337 = vand.u32 %v1700, 2139095040
        %v2338 = vshrl.u32 %v2337, 23
        %v2339 = vsub.s32 %v2338, 127
        %v2340 = vand.u32 2147483647, %v1700
        %v2341 = vand.u32 %v2340, 8388607
        %v2342 = vor.u32 %v2341, 8388608
        %v2343 = vsub.s32 0, %v2342
        %v2344 = vadd.s32 %v2339, 1
        %vm2345 = vcmp.gt.s32.totalorder %v2344, 0
        %v2346 = vsel %vm2345, %v2344, 0
        %v2347 = vshrl.u32 %v2346, 5
        %v2348 = vand.u32 %v2346, 31
        %v2349 = vsub.s32 32, %v2348
        %v2350 = vshrl.u32 683565275, %v2349
        %v2351 = vshll.u32 683565275, %v2348
        %v2352 = vshrl.u32 2475754826, %v2349
        %v2353 = vor.u32 %v2351, %v2352
        %v2354 = vshll.u32 2475754826, %v2348
        %v2355 = vshrl.u32 2131351028, %v2349
        %v2356 = vor.u32 %v2354, %v2355
        %v2357 = vshll.u32 2131351028, %v2348
        %v2358 = vshrl.u32 2102212464, %v2349
        %v2359 = vor.u32 %v2357, %v2358
        %v2360 = vshll.u32 2102212464, %v2348
        %v2361 = vshrl.u32 920167782, %v2349
        %v2362 = vor.u32 %v2360, %v2361
        %v2363 = vshll.u32 920167782, %v2348
        %v2364 = vshrl.u32 1326507024, %v2349
        %v2365 = vor.u32 %v2363, %v2364
        %vm2366 = vcmp.lt.s32.totalorder %v2347, 1
        %vm2367 = vcmp.lt.s32.totalorder %v2347, 2
        %vm2368 = vcmp.lt.s32.totalorder %v2347, 3
        %vm2369 = vcmp.lt.s32.totalorder %v2347, 4
        %v2370 = vsel %vm2366, %v2350, %v2353
        %v2371 = vsel %vm2369, %v2359, 2102212464
        %v2372 = vsel %vm2368, %v2356, %v2371
        %v2373 = vsel %vm2367, %v2370, %v2372
        %v2374 = vsel %vm2366, %v2353, %v2356
        %v2375 = vsel %vm2369, %v2362, 920167782
        %v2376 = vsel %vm2368, %v2359, %v2375
        %v2377 = vsel %vm2367, %v2374, %v2376
        %v2378 = vsel %vm2366, %v2356, %v2359
        %v2379 = vsel %vm2369, %v2365, 1326507024
        %v2380 = vsel %vm2368, %v2362, %v2379
        %v2381 = vsel %vm2367, %v2378, %v2380
        %v2382 = vshll.u32 %v2342, 8
        %v2383 = vmul.u32.u64.compose %v2382, %v2381
        %v2384 = vextract.low.u32 %v2383
        %v2385 = vextract.high.u32 %v2383
        %v2386 = vmul.u32.u64.compose %v2382, %v2377
        %v2387 = vextract.low.u32 %v2386
        %v2388 = vextract.high.u32 %v2386
        %v2389 = vmul.u32 %v2382, %v2373
        %v2390 = vadd.s32 %v2385, %v2387
        %vm2391 = vc.u32 %v2385, %v2387
        %v2392 = vadd.s32 %v2388, 1
        %v2393 = vsel %vm2391, %v2392, %v2388
        %v2394 = vadd.s32 %v2389, %v2393
        %v2395 = vadd.s32 %v2394, 536870912
        %v2396 = vshrl.u32 %v2395, 30
        %v2397 = vshll.u32 %v2396, 30
        %v2398 = vsub.s32 %v2394, %v2397
        %vm2399 = vcmp.lt.s32.totalorder %v2398, 0
        %v2400 = vsub.s32 0, %v2398
        %v2401 = vsel %vm2399, %v2400, %v2398
        %v2402 = vclz %v2401
        %v2403 = vsub.s32 %v2402, 2
        %vm2404 = vcmp.gt.s32.totalorder 0, %v2403
        %v2405 = vsel %vm2404, 0, %v2403
        %v2406 = vsub.s32 32, %v2405
        %v2407 = vshll.u32 %v2398, %v2405
        %v2408 = vshrl.u32 %v2390, %v2406
        %v2409 = vor.u32 %v2407, %v2408
        %v2410 = vsub.s32 4294967266, %v2405
        %v2411 = vadd.s32 %v2410, 127
        %v2412 = vshll.u32 %v2411, 23
        %v2413 = vor.u32 4788187, %v2412
        %v2414 = vand.u32 2147483647, %v2413
        %v2416 = vcvt.s32.f32 %v2409
        %v2417 = vmul.f32 %v2416, %v2414
        %v2418 = vxor.u32 %v2417, 2147483648
        %v2419 = vsel %vm2336, %v2418, %v2417
        %v2420 = vsub.s32 4, %v2396
        %v2421 = vsel %vm2336, %v2420, %v2396
        %v2422 = vsel %vm2335, %v1700, %v2419
        %v2423 = vsel %vm2335, 0, %v2421
        %v2424 = vcosq.f32.pop %v2422
        %v2425 = vsinq.f32.pop %v2422
        %vm2426 = vweird.f32 %v1700
        %v2427 = vadd.s32 %v2423, 3
        %v2428 = vand.u32 %v2427, 3
        %vm2429 = vcmp.lt.s32.totalorder %v2428, 2
        %vm2430 = vcmp.eq.s32.totalorder %v2428, 0
        %v2431 = vxor.u32 %v2425, 2147483648
        %v2432 = vsel %vm2430, %v2424, %v2431
        %vm2433 = vcmp.eq.s32.totalorder %v2428, 2
        %v2434 = vxor.u32 %v2424, 2147483648
        %v2435 = vsel %vm2433, %v2434, %v2425
        %v2436 = vsel %vm2429, %v2432, %v2435
        %v2437 = vsel %vm2426, nan, %v2436
        %v2438 = vand.u32 2147483647, %v1701
        %vm2439 = vcmp.le.f32.partialorder %v2438, 0.7853982
        %vm2440 = vcmp.lt.s32.totalorder %v1701, 0
        %v2441 = vand.u32 %v1701, 2139095040
        %v2442 = vshrl.u32 %v2441, 23
        %v2443 = vsub.s32 %v2442, 127
        %v2444 = vand.u32 2147483647, %v1701
        %v2445 = vand.u32 %v2444, 8388607
        %v2446 = vor.u32 %v2445, 8388608
        %v2447 = vsub.s32 0, %v2446
        %v2448 = vadd.s32 %v2443, 1
        %vm2449 = vcmp.gt.s32.totalorder %v2448, 0
        %v2450 = vsel %vm2449, %v2448, 0
        %v2451 = vshrl.u32 %v2450, 5
        %v2452 = vand.u32 %v2450, 31
        %v2453 = vsub.s32 32, %v2452
        %v2454 = vshrl.u32 683565275, %v2453
        %v2455 = vshll.u32 683565275, %v2452
        %v2456 = vshrl.u32 2475754826, %v2453
        %v2457 = vor.u32 %v2455, %v2456
        %v2458 = vshll.u32 2475754826, %v2452
        %v2459 = vshrl.u32 2131351028, %v2453
        %v2460 = vor.u32 %v2458, %v2459
        %v2461 = vshll.u32 2131351028, %v2452
        %v2462 = vshrl.u32 2102212464, %v2453
        %v2463 = vor.u32 %v2461, %v2462
        %v2464 = vshll.u32 2102212464, %v2452
        %v2465 = vshrl.u32 920167782, %v2453
        %v2466 = vor.u32 %v2464, %v2465
        %v2467 = vshll.u32 920167782, %v2452
        %v2468 = vshrl.u32 1326507024, %v2453
        %v2469 = vor.u32 %v2467, %v2468
        %vm2470 = vcmp.lt.s32.totalorder %v2451, 1
        %vm2471 = vcmp.lt.s32.totalorder %v2451, 2
        %vm2472 = vcmp.lt.s32.totalorder %v2451, 3
        %vm2473 = vcmp.lt.s32.totalorder %v2451, 4
        %v2474 = vsel %vm2470, %v2454, %v2457
        %v2475 = vsel %vm2473, %v2463, 2102212464
        %v2476 = vsel %vm2472, %v2460, %v2475
        %v2477 = vsel %vm2471, %v2474, %v2476
        %v2478 = vsel %vm2470, %v2457, %v2460
        %v2479 = vsel %vm2473, %v2466, 920167782
        %v2480 = vsel %vm2472, %v2463, %v2479
        %v2481 = vsel %vm2471, %v2478, %v2480
        %v2482 = vsel %vm2470, %v2460, %v2463
        %v2483 = vsel %vm2473, %v2469, 1326507024
        %v2484 = vsel %vm2472, %v2466, %v2483
        %v2485 = vsel %vm2471, %v2482, %v2484
        %v2486 = vshll.u32 %v2446, 8
        %v2487 = vmul.u32.u64.compose %v2486, %v2485
        %v2488 = vextract.low.u32 %v2487
        %v2489 = vextract.high.u32 %v2487
        %v2490 = vmul.u32.u64.compose %v2486, %v2481
        %v2491 = vextract.low.u32 %v2490
        %v2492 = vextract.high.u32 %v2490
        %v2493 = vmul.u32 %v2486, %v2477
        %v2494 = vadd.s32 %v2489, %v2491
        %vm2495 = vc.u32 %v2489, %v2491
        %v2496 = vadd.s32 %v2492, 1
        %v2497 = vsel %vm2495, %v2496, %v2492
        %v2498 = vadd.s32 %v2493, %v2497
        %v2499 = vadd.s32 %v2498, 536870912
        %v2500 = vshrl.u32 %v2499, 30
        %v2501 = vshll.u32 %v2500, 30
        %v2502 = vsub.s32 %v2498, %v2501
        %vm2503 = vcmp.lt.s32.totalorder %v2502, 0
        %v2504 = vsub.s32 0, %v2502
        %v2505 = vsel %vm2503, %v2504, %v2502
        %v2506 = vclz %v2505
        %v2507 = vsub.s32 %v2506, 2
        %vm2508 = vcmp.gt.s32.totalorder 0, %v2507
        %v2509 = vsel %vm2508, 0, %v2507
        %v2510 = vsub.s32 32, %v2509
        %v2511 = vshll.u32 %v2502, %v2509
        %v2512 = vshrl.u32 %v2494, %v2510
        %v2513 = vor.u32 %v2511, %v2512
        %v2514 = vsub.s32 4294967266, %v2509
        %v2515 = vadd.s32 %v2514, 127
        %v2516 = vshll.u32 %v2515, 23
        %v2517 = vor.u32 4788187, %v2516
        %v2518 = vand.u32 2147483647, %v2517
        %v2520 = vcvt.s32.f32 %v2513
        %v2521 = vmul.f32 %v2520, %v2518
        %v2522 = vxor.u32 %v2521, 2147483648
        %v2523 = vsel %vm2440, %v2522, %v2521
        %v2524 = vsub.s32 4, %v2500
        %v2525 = vsel %vm2440, %v2524, %v2500
        %v2526 = vsel %vm2439, %v1701, %v2523
        %v2527 = vsel %vm2439, 0, %v2525
        %v2528 = vcosq.f32.pop %v2526
        %v2529 = vsinq.f32.pop %v2526
        %vm2530 = vweird.f32 %v1701
        %v2531 = vadd.s32 %v2527, 3
        %v2532 = vand.u32 %v2531, 3
        %vm2533 = vcmp.lt.s32.totalorder %v2532, 2
        %vm2534 = vcmp.eq.s32.totalorder %v2532, 0
        %v2535 = vxor.u32 %v2529, 2147483648
        %v2536 = vsel %vm2534, %v2528, %v2535
        %vm2537 = vcmp.eq.s32.totalorder %v2532, 2
        %v2538 = vxor.u32 %v2528, 2147483648
        %v2539 = vsel %vm2537, %v2538, %v2529
        %v2540 = vsel %vm2533, %v2536, %v2539
        %v2541 = vsel %vm2530, nan, %v2540
        %v2542 = vand.u32 2147483647, %v1702
        %vm2543 = vcmp.le.f32.partialorder %v2542, 0.7853982
        %vm2544 = vcmp.lt.s32.totalorder %v1702, 0
        %v2545 = vand.u32 %v1702, 2139095040
        %v2546 = vshrl.u32 %v2545, 23
        %v2547 = vsub.s32 %v2546, 127
        %v2548 = vand.u32 2147483647, %v1702
        %v2549 = vand.u32 %v2548, 8388607
        %v2550 = vor.u32 %v2549, 8388608
        %v2551 = vsub.s32 0, %v2550
        %v2552 = vadd.s32 %v2547, 1
        %vm2553 = vcmp.gt.s32.totalorder %v2552, 0
        %v2554 = vsel %vm2553, %v2552, 0
        %v2555 = vshrl.u32 %v2554, 5
        %v2556 = vand.u32 %v2554, 31
        %v2557 = vsub.s32 32, %v2556
        %v2558 = vshrl.u32 683565275, %v2557
        %v2559 = vshll.u32 683565275, %v2556
        %v2560 = vshrl.u32 2475754826, %v2557
        %v2561 = vor.u32 %v2559, %v2560
        %v2562 = vshll.u32 2475754826, %v2556
        %v2563 = vshrl.u32 2131351028, %v2557
        %v2564 = vor.u32 %v2562, %v2563
        %v2565 = vshll.u32 2131351028, %v2556
        %v2566 = vshrl.u32 2102212464, %v2557
        %v2567 = vor.u32 %v2565, %v2566
        %v2568 = vshll.u32 2102212464, %v2556
        %v2569 = vshrl.u32 920167782, %v2557
        %v2570 = vor.u32 %v2568, %v2569
        %v2571 = vshll.u32 920167782, %v2556
        %v2572 = vshrl.u32 1326507024, %v2557
        %v2573 = vor.u32 %v2571, %v2572
        %vm2574 = vcmp.lt.s32.totalorder %v2555, 1
        %vm2575 = vcmp.lt.s32.totalorder %v2555, 2
        %vm2576 = vcmp.lt.s32.totalorder %v2555, 3
        %vm2577 = vcmp.lt.s32.totalorder %v2555, 4
        %v2578 = vsel %vm2574, %v2558, %v2561
        %v2579 = vsel %vm2577, %v2567, 2102212464
        %v2580 = vsel %vm2576, %v2564, %v2579
        %v2581 = vsel %vm2575, %v2578, %v2580
        %v2582 = vsel %vm2574, %v2561, %v2564
        %v2583 = vsel %vm2577, %v2570, 920167782
        %v2584 = vsel %vm2576, %v2567, %v2583
        %v2585 = vsel %vm2575, %v2582, %v2584
        %v2586 = vsel %vm2574, %v2564, %v2567
        %v2587 = vsel %vm2577, %v2573, 1326507024
        %v2588 = vsel %vm2576, %v2570, %v2587
        %v2589 = vsel %vm2575, %v2586, %v2588
        %v2590 = vshll.u32 %v2550, 8
        %v2591 = vmul.u32.u64.compose %v2590, %v2589
        %v2592 = vextract.low.u32 %v2591
        %v2593 = vextract.high.u32 %v2591
        %v2594 = vmul.u32.u64.compose %v2590, %v2585
        %v2595 = vextract.low.u32 %v2594
        %v2596 = vextract.high.u32 %v2594
        %v2597 = vmul.u32 %v2590, %v2581
        %v2598 = vadd.s32 %v2593, %v2595
        %vm2599 = vc.u32 %v2593, %v2595
        %v2600 = vadd.s32 %v2596, 1
        %v2601 = vsel %vm2599, %v2600, %v2596
        %v2602 = vadd.s32 %v2597, %v2601
        %v2603 = vadd.s32 %v2602, 536870912
        %v2604 = vshrl.u32 %v2603, 30
        %v2605 = vshll.u32 %v2604, 30
        %v2606 = vsub.s32 %v2602, %v2605
        %vm2607 = vcmp.lt.s32.totalorder %v2606, 0
        %v2608 = vsub.s32 0, %v2606
        %v2609 = vsel %vm2607, %v2608, %v2606
        %v2610 = vclz %v2609
        %v2611 = vsub.s32 %v2610, 2
        %vm2612 = vcmp.gt.s32.totalorder 0, %v2611
        %v2613 = vsel %vm2612, 0, %v2611
        %v2614 = vsub.s32 32, %v2613
        %v2615 = vshll.u32 %v2606, %v2613
        %v2616 = vshrl.u32 %v2598, %v2614
        %v2617 = vor.u32 %v2615, %v2616
        %v2618 = vsub.s32 4294967266, %v2613
        %v2619 = vadd.s32 %v2618, 127
        %v2620 = vshll.u32 %v2619, 23
        %v2621 = vor.u32 4788187, %v2620
        %v2622 = vand.u32 2147483647, %v2621
        %v2624 = vcvt.s32.f32 %v2617
        %v2625 = vmul.f32 %v2624, %v2622
        %v2626 = vxor.u32 %v2625, 2147483648
        %v2627 = vsel %vm2544, %v2626, %v2625
        %v2628 = vsub.s32 4, %v2604
        %v2629 = vsel %vm2544, %v2628, %v2604
        %v2630 = vsel %vm2543, %v1702, %v2627
        %v2631 = vsel %vm2543, 0, %v2629
        %v2632 = vcosq.f32.pop %v2630
        %v2633 = vsinq.f32.pop %v2630
        %vm2634 = vweird.f32 %v1702
        %v2635 = vadd.s32 %v2631, 3
        %v2636 = vand.u32 %v2635, 3
        %vm2637 = vcmp.lt.s32.totalorder %v2636, 2
        %vm2638 = vcmp.eq.s32.totalorder %v2636, 0
        %v2639 = vxor.u32 %v2633, 2147483648
        %v2640 = vsel %vm2638, %v2632, %v2639
        %vm2641 = vcmp.eq.s32.totalorder %v2636, 2
        %v2642 = vxor.u32 %v2632, 2147483648
        %v2643 = vsel %vm2641, %v2642, %v2633
        %v2644 = vsel %vm2637, %v2640, %v2643
        %v2645 = vsel %vm2634, nan, %v2644
        %v2646 = vand.u32 2147483647, %v1703
        %vm2647 = vcmp.le.f32.partialorder %v2646, 0.7853982
        %vm2648 = vcmp.lt.s32.totalorder %v1703, 0
        %v2649 = vand.u32 %v1703, 2139095040
        %v2650 = vshrl.u32 %v2649, 23
        %v2651 = vsub.s32 %v2650, 127
        %v2652 = vand.u32 2147483647, %v1703
        %v2653 = vand.u32 %v2652, 8388607
        %v2654 = vor.u32 %v2653, 8388608
        %v2655 = vsub.s32 0, %v2654
        %v2656 = vadd.s32 %v2651, 1
        %vm2657 = vcmp.gt.s32.totalorder %v2656, 0
        %v2658 = vsel %vm2657, %v2656, 0
        %v2659 = vshrl.u32 %v2658, 5
        %v2660 = vand.u32 %v2658, 31
        %v2661 = vsub.s32 32, %v2660
        %v2662 = vshrl.u32 683565275, %v2661
        %v2663 = vshll.u32 683565275, %v2660
        %v2664 = vshrl.u32 2475754826, %v2661
        %v2665 = vor.u32 %v2663, %v2664
        %v2666 = vshll.u32 2475754826, %v2660
        %v2667 = vshrl.u32 2131351028, %v2661
        %v2668 = vor.u32 %v2666, %v2667
        %v2669 = vshll.u32 2131351028, %v2660
        %v2670 = vshrl.u32 2102212464, %v2661
        %v2671 = vor.u32 %v2669, %v2670
        %v2672 = vshll.u32 2102212464, %v2660
        %v2673 = vshrl.u32 920167782, %v2661
        %v2674 = vor.u32 %v2672, %v2673
        %v2675 = vshll.u32 920167782, %v2660
        %v2676 = vshrl.u32 1326507024, %v2661
        %v2677 = vor.u32 %v2675, %v2676
        %vm2678 = vcmp.lt.s32.totalorder %v2659, 1
        %vm2679 = vcmp.lt.s32.totalorder %v2659, 2
        %vm2680 = vcmp.lt.s32.totalorder %v2659, 3
        %vm2681 = vcmp.lt.s32.totalorder %v2659, 4
        %v2682 = vsel %vm2678, %v2662, %v2665
        %v2683 = vsel %vm2681, %v2671, 2102212464
        %v2684 = vsel %vm2680, %v2668, %v2683
        %v2685 = vsel %vm2679, %v2682, %v2684
        %v2686 = vsel %vm2678, %v2665, %v2668
        %v2687 = vsel %vm2681, %v2674, 920167782
        %v2688 = vsel %vm2680, %v2671, %v2687
        %v2689 = vsel %vm2679, %v2686, %v2688
        %v2690 = vsel %vm2678, %v2668, %v2671
        %v2691 = vsel %vm2681, %v2677, 1326507024
        %v2692 = vsel %vm2680, %v2674, %v2691
        %v2693 = vsel %vm2679, %v2690, %v2692
        %v2694 = vshll.u32 %v2654, 8
        %v2695 = vmul.u32.u64.compose %v2694, %v2693
        %v2696 = vextract.low.u32 %v2695
        %v2697 = vextract.high.u32 %v2695
        %v2698 = vmul.u32.u64.compose %v2694, %v2689
        %v2699 = vextract.low.u32 %v2698
        %v2700 = vextract.high.u32 %v2698
        %v2701 = vmul.u32 %v2694, %v2685
        %v2702 = vadd.s32 %v2697, %v2699
        %vm2703 = vc.u32 %v2697, %v2699
        %v2704 = vadd.s32 %v2700, 1
        %v2705 = vsel %vm2703, %v2704, %v2700
        %v2706 = vadd.s32 %v2701, %v2705
        %v2707 = vadd.s32 %v2706, 536870912
        %v2708 = vshrl.u32 %v2707, 30
        %v2709 = vshll.u32 %v2708, 30
        %v2710 = vsub.s32 %v2706, %v2709
        %vm2711 = vcmp.lt.s32.totalorder %v2710, 0
        %v2712 = vsub.s32 0, %v2710
        %v2713 = vsel %vm2711, %v2712, %v2710
        %v2714 = vclz %v2713
        %v2715 = vsub.s32 %v2714, 2
        %vm2716 = vcmp.gt.s32.totalorder 0, %v2715
        %v2717 = vsel %vm2716, 0, %v2715
        %v2718 = vsub.s32 32, %v2717
        %v2719 = vshll.u32 %v2710, %v2717
        %v2720 = vshrl.u32 %v2702, %v2718
        %v2721 = vor.u32 %v2719, %v2720
        %v2722 = vsub.s32 4294967266, %v2717
        %v2723 = vadd.s32 %v2722, 127
        %v2724 = vshll.u32 %v2723, 23
        %v2725 = vor.u32 4788187, %v2724
        %v2726 = vand.u32 2147483647, %v2725
        %v2728 = vcvt.s32.f32 %v2721
        %v2729 = vmul.f32 %v2728, %v2726
        %v2730 = vxor.u32 %v2729, 2147483648
        %v2731 = vsel %vm2648, %v2730, %v2729
        %v2732 = vsub.s32 4, %v2708
        %v2733 = vsel %vm2648, %v2732, %v2708
        %v2734 = vsel %vm2647, %v1703, %v2731
        %v2735 = vsel %vm2647, 0, %v2733
        %v2736 = vcosq.f32.pop %v2734
        %v2737 = vsinq.f32.pop %v2734
        %vm2738 = vweird.f32 %v1703
        %v2739 = vadd.s32 %v2735, 3
        %v2740 = vand.u32 %v2739, 3
        %vm2741 = vcmp.lt.s32.totalorder %v2740, 2
        %vm2742 = vcmp.eq.s32.totalorder %v2740, 0
        %v2743 = vxor.u32 %v2737, 2147483648
        %v2744 = vsel %vm2742, %v2736, %v2743
        %vm2745 = vcmp.eq.s32.totalorder %v2740, 2
        %v2746 = vxor.u32 %v2736, 2147483648
        %v2747 = vsel %vm2745, %v2746, %v2737
        %v2748 = vsel %vm2741, %v2744, %v2747
        %v2749 = vsel %vm2738, nan, %v2748
        %v2750 = vand.u32 2147483647, %v1704
        %vm2751 = vcmp.le.f32.partialorder %v2750, 0.7853982
        %vm2752 = vcmp.lt.s32.totalorder %v1704, 0
        %v2753 = vand.u32 %v1704, 2139095040
        %v2754 = vshrl.u32 %v2753, 23
        %v2755 = vsub.s32 %v2754, 127
        %v2756 = vand.u32 2147483647, %v1704
        %v2757 = vand.u32 %v2756, 8388607
        %v2758 = vor.u32 %v2757, 8388608
        %v2759 = vsub.s32 0, %v2758
        %v2760 = vadd.s32 %v2755, 1
        %vm2761 = vcmp.gt.s32.totalorder %v2760, 0
        %v2762 = vsel %vm2761, %v2760, 0
        %v2763 = vshrl.u32 %v2762, 5
        %v2764 = vand.u32 %v2762, 31
        %v2765 = vsub.s32 32, %v2764
        %v2766 = vshrl.u32 683565275, %v2765
        %v2767 = vshll.u32 683565275, %v2764
        %v2768 = vshrl.u32 2475754826, %v2765
        %v2769 = vor.u32 %v2767, %v2768
        %v2770 = vshll.u32 2475754826, %v2764
        %v2771 = vshrl.u32 2131351028, %v2765
        %v2772 = vor.u32 %v2770, %v2771
        %v2773 = vshll.u32 2131351028, %v2764
        %v2774 = vshrl.u32 2102212464, %v2765
        %v2775 = vor.u32 %v2773, %v2774
        %v2776 = vshll.u32 2102212464, %v2764
        %v2777 = vshrl.u32 920167782, %v2765
        %v2778 = vor.u32 %v2776, %v2777
        %v2779 = vshll.u32 920167782, %v2764
        %v2780 = vshrl.u32 1326507024, %v2765
        %v2781 = vor.u32 %v2779, %v2780
        %vm2782 = vcmp.lt.s32.totalorder %v2763, 1
        %vm2783 = vcmp.lt.s32.totalorder %v2763, 2
        %vm2784 = vcmp.lt.s32.totalorder %v2763, 3
        %vm2785 = vcmp.lt.s32.totalorder %v2763, 4
        %v2786 = vsel %vm2782, %v2766, %v2769
        %v2787 = vsel %vm2785, %v2775, 2102212464
        %v2788 = vsel %vm2784, %v2772, %v2787
        %v2789 = vsel %vm2783, %v2786, %v2788
        %v2790 = vsel %vm2782, %v2769, %v2772
        %v2791 = vsel %vm2785, %v2778, 920167782
        %v2792 = vsel %vm2784, %v2775, %v2791
        %v2793 = vsel %vm2783, %v2790, %v2792
        %v2794 = vsel %vm2782, %v2772, %v2775
        %v2795 = vsel %vm2785, %v2781, 1326507024
        %v2796 = vsel %vm2784, %v2778, %v2795
        %v2797 = vsel %vm2783, %v2794, %v2796
        %v2798 = vshll.u32 %v2758, 8
        %v2799 = vmul.u32.u64.compose %v2798, %v2797
        %v2800 = vextract.low.u32 %v2799
        %v2801 = vextract.high.u32 %v2799
        %v2802 = vmul.u32.u64.compose %v2798, %v2793
        %v2803 = vextract.low.u32 %v2802
        %v2804 = vextract.high.u32 %v2802
        %v2805 = vmul.u32 %v2798, %v2789
        %v2806 = vadd.s32 %v2801, %v2803
        %vm2807 = vc.u32 %v2801, %v2803
        %v2808 = vadd.s32 %v2804, 1
        %v2809 = vsel %vm2807, %v2808, %v2804
        %v2810 = vadd.s32 %v2805, %v2809
        %v2811 = vadd.s32 %v2810, 536870912
        %v2812 = vshrl.u32 %v2811, 30
        %v2813 = vshll.u32 %v2812, 30
        %v2814 = vsub.s32 %v2810, %v2813
        %vm2815 = vcmp.lt.s32.totalorder %v2814, 0
        %v2816 = vsub.s32 0, %v2814
        %v2817 = vsel %vm2815, %v2816, %v2814
        %v2818 = vclz %v2817
        %v2819 = vsub.s32 %v2818, 2
        %vm2820 = vcmp.gt.s32.totalorder 0, %v2819
        %v2821 = vsel %vm2820, 0, %v2819
        %v2822 = vsub.s32 32, %v2821
        %v2823 = vshll.u32 %v2814, %v2821
        %v2824 = vshrl.u32 %v2806, %v2822
        %v2825 = vor.u32 %v2823, %v2824
        %v2826 = vsub.s32 4294967266, %v2821
        %v2827 = vadd.s32 %v2826, 127
        %v2828 = vshll.u32 %v2827, 23
        %v2829 = vor.u32 4788187, %v2828
        %v2830 = vand.u32 2147483647, %v2829
        %v2832 = vcvt.s32.f32 %v2825
        %v2833 = vmul.f32 %v2832, %v2830
        %v2834 = vxor.u32 %v2833, 2147483648
        %v2835 = vsel %vm2752, %v2834, %v2833
        %v2836 = vsub.s32 4, %v2812
        %v2837 = vsel %vm2752, %v2836, %v2812
        %v2838 = vsel %vm2751, %v1704, %v2835
        %v2839 = vsel %vm2751, 0, %v2837
        %v2840 = vcosq.f32.pop %v2838
        %v2841 = vsinq.f32.pop %v2838
        %vm2842 = vweird.f32 %v1704
        %v2843 = vadd.s32 %v2839, 3
        %v2844 = vand.u32 %v2843, 3
        %vm2845 = vcmp.lt.s32.totalorder %v2844, 2
        %vm2846 = vcmp.eq.s32.totalorder %v2844, 0
        %v2847 = vxor.u32 %v2841, 2147483648
        %v2848 = vsel %vm2846, %v2840, %v2847
        %vm2849 = vcmp.eq.s32.totalorder %v2844, 2
        %v2850 = vxor.u32 %v2840, 2147483648
        %v2851 = vsel %vm2849, %v2850, %v2841
        %v2852 = vsel %vm2845, %v2848, %v2851
        %v2853 = vsel %vm2842, nan, %v2852
        %v2854 = vand.u32 2147483647, %v1705
        %vm2855 = vcmp.le.f32.partialorder %v2854, 0.7853982
        %vm2856 = vcmp.lt.s32.totalorder %v1705, 0
        %v2857 = vand.u32 %v1705, 2139095040
        %v2858 = vshrl.u32 %v2857, 23
        %v2859 = vsub.s32 %v2858, 127
        %v2860 = vand.u32 2147483647, %v1705
        %v2861 = vand.u32 %v2860, 8388607
        %v2862 = vor.u32 %v2861, 8388608
        %v2863 = vsub.s32 0, %v2862
        %v2864 = vadd.s32 %v2859, 1
        %vm2865 = vcmp.gt.s32.totalorder %v2864, 0
        %v2866 = vsel %vm2865, %v2864, 0
        %v2867 = vshrl.u32 %v2866, 5
        %v2868 = vand.u32 %v2866, 31
        %v2869 = vsub.s32 32, %v2868
        %v2870 = vshrl.u32 683565275, %v2869
        %v2871 = vshll.u32 683565275, %v2868
        %v2872 = vshrl.u32 2475754826, %v2869
        %v2873 = vor.u32 %v2871, %v2872
        %v2874 = vshll.u32 2475754826, %v2868
        %v2875 = vshrl.u32 2131351028, %v2869
        %v2876 = vor.u32 %v2874, %v2875
        %v2877 = vshll.u32 2131351028, %v2868
        %v2878 = vshrl.u32 2102212464, %v2869
        %v2879 = vor.u32 %v2877, %v2878
        %v2880 = vshll.u32 2102212464, %v2868
        %v2881 = vshrl.u32 920167782, %v2869
        %v2882 = vor.u32 %v2880, %v2881
        %v2883 = vshll.u32 920167782, %v2868
        %v2884 = vshrl.u32 1326507024, %v2869
        %v2885 = vor.u32 %v2883, %v2884
        %vm2886 = vcmp.lt.s32.totalorder %v2867, 1
        %vm2887 = vcmp.lt.s32.totalorder %v2867, 2
        %vm2888 = vcmp.lt.s32.totalorder %v2867, 3
        %vm2889 = vcmp.lt.s32.totalorder %v2867, 4
        %v2890 = vsel %vm2886, %v2870, %v2873
        %v2891 = vsel %vm2889, %v2879, 2102212464
        %v2892 = vsel %vm2888, %v2876, %v2891
        %v2893 = vsel %vm2887, %v2890, %v2892
        %v2894 = vsel %vm2886, %v2873, %v2876
        %v2895 = vsel %vm2889, %v2882, 920167782
        %v2896 = vsel %vm2888, %v2879, %v2895
        %v2897 = vsel %vm2887, %v2894, %v2896
        %v2898 = vsel %vm2886, %v2876, %v2879
        %v2899 = vsel %vm2889, %v2885, 1326507024
        %v2900 = vsel %vm2888, %v2882, %v2899
        %v2901 = vsel %vm2887, %v2898, %v2900
        %v2902 = vshll.u32 %v2862, 8
        %v2903 = vmul.u32.u64.compose %v2902, %v2901
        %v2904 = vextract.low.u32 %v2903
        %v2905 = vextract.high.u32 %v2903
        %v2906 = vmul.u32.u64.compose %v2902, %v2897
        %v2907 = vextract.low.u32 %v2906
        %v2908 = vextract.high.u32 %v2906
        %v2909 = vmul.u32 %v2902, %v2893
        %v2910 = vadd.s32 %v2905, %v2907
        %vm2911 = vc.u32 %v2905, %v2907
        %v2912 = vadd.s32 %v2908, 1
        %v2913 = vsel %vm2911, %v2912, %v2908
        %v2914 = vadd.s32 %v2909, %v2913
        %v2915 = vadd.s32 %v2914, 536870912
        %v2916 = vshrl.u32 %v2915, 30
        %v2917 = vshll.u32 %v2916, 30
        %v2918 = vsub.s32 %v2914, %v2917
        %vm2919 = vcmp.lt.s32.totalorder %v2918, 0
        %v2920 = vsub.s32 0, %v2918
        %v2921 = vsel %vm2919, %v2920, %v2918
        %v2922 = vclz %v2921
        %v2923 = vsub.s32 %v2922, 2
        %vm2924 = vcmp.gt.s32.totalorder 0, %v2923
        %v2925 = vsel %vm2924, 0, %v2923
        %v2926 = vsub.s32 32, %v2925
        %v2927 = vshll.u32 %v2918, %v2925
        %v2928 = vshrl.u32 %v2910, %v2926
        %v2929 = vor.u32 %v2927, %v2928
        %v2930 = vsub.s32 4294967266, %v2925
        %v2931 = vadd.s32 %v2930, 127
        %v2932 = vshll.u32 %v2931, 23
        %v2933 = vor.u32 4788187, %v2932
        %v2934 = vand.u32 2147483647, %v2933
        %v2936 = vcvt.s32.f32 %v2929
        %v2937 = vmul.f32 %v2936, %v2934
        %v2938 = vxor.u32 %v2937, 2147483648
        %v2939 = vsel %vm2856, %v2938, %v2937
        %v2940 = vsub.s32 4, %v2916
        %v2941 = vsel %vm2856, %v2940, %v2916
        %v2942 = vsel %vm2855, %v1705, %v2939
        %v2943 = vsel %vm2855, 0, %v2941
        %v2944 = vcosq.f32.pop %v2942
        %v2945 = vsinq.f32.pop %v2942
        %vm2946 = vweird.f32 %v1705
        %v2947 = vadd.s32 %v2943, 3
        %v2948 = vand.u32 %v2947, 3
        %vm2949 = vcmp.lt.s32.totalorder %v2948, 2
        %vm2950 = vcmp.eq.s32.totalorder %v2948, 0
        %v2951 = vxor.u32 %v2945, 2147483648
        %v2952 = vsel %vm2950, %v2944, %v2951
        %vm2953 = vcmp.eq.s32.totalorder %v2948, 2
        %v2954 = vxor.u32 %v2944, 2147483648
        %v2955 = vsel %vm2953, %v2954, %v2945
        %v2956 = vsel %vm2949, %v2952, %v2955
        %v2957 = vsel %vm2946, nan, %v2956
        %v2958 = vand.u32 2147483647, %v1706
        %vm2959 = vcmp.le.f32.partialorder %v2958, 0.7853982
        %vm2960 = vcmp.lt.s32.totalorder %v1706, 0
        %v2961 = vand.u32 %v1706, 2139095040
        %v2962 = vshrl.u32 %v2961, 23
        %v2963 = vsub.s32 %v2962, 127
        %v2964 = vand.u32 2147483647, %v1706
        %v2965 = vand.u32 %v2964, 8388607
        %v2966 = vor.u32 %v2965, 8388608
        %v2967 = vsub.s32 0, %v2966
        %v2968 = vadd.s32 %v2963, 1
        %vm2969 = vcmp.gt.s32.totalorder %v2968, 0
        %v2970 = vsel %vm2969, %v2968, 0
        %v2971 = vshrl.u32 %v2970, 5
        %v2972 = vand.u32 %v2970, 31
        %v2973 = vsub.s32 32, %v2972
        %v2974 = vshrl.u32 683565275, %v2973
        %v2975 = vshll.u32 683565275, %v2972
        %v2976 = vshrl.u32 2475754826, %v2973
        %v2977 = vor.u32 %v2975, %v2976
        %v2978 = vshll.u32 2475754826, %v2972
        %v2979 = vshrl.u32 2131351028, %v2973
        %v2980 = vor.u32 %v2978, %v2979
        %v2981 = vshll.u32 2131351028, %v2972
        %v2982 = vshrl.u32 2102212464, %v2973
        %v2983 = vor.u32 %v2981, %v2982
        %v2984 = vshll.u32 2102212464, %v2972
        %v2985 = vshrl.u32 920167782, %v2973
        %v2986 = vor.u32 %v2984, %v2985
        %v2987 = vshll.u32 920167782, %v2972
        %v2988 = vshrl.u32 1326507024, %v2973
        %v2989 = vor.u32 %v2987, %v2988
        %vm2990 = vcmp.lt.s32.totalorder %v2971, 1
        %vm2991 = vcmp.lt.s32.totalorder %v2971, 2
        %vm2992 = vcmp.lt.s32.totalorder %v2971, 3
        %vm2993 = vcmp.lt.s32.totalorder %v2971, 4
        %v2994 = vsel %vm2990, %v2974, %v2977
        %v2995 = vsel %vm2993, %v2983, 2102212464
        %v2996 = vsel %vm2992, %v2980, %v2995
        %v2997 = vsel %vm2991, %v2994, %v2996
        %v2998 = vsel %vm2990, %v2977, %v2980
        %v2999 = vsel %vm2993, %v2986, 920167782
        %v3000 = vsel %vm2992, %v2983, %v2999
        %v3001 = vsel %vm2991, %v2998, %v3000
        %v3002 = vsel %vm2990, %v2980, %v2983
        %v3003 = vsel %vm2993, %v2989, 1326507024
        %v3004 = vsel %vm2992, %v2986, %v3003
        %v3005 = vsel %vm2991, %v3002, %v3004
        %v3006 = vshll.u32 %v2966, 8
        %v3007 = vmul.u32.u64.compose %v3006, %v3005
        %v3008 = vextract.low.u32 %v3007
        %v3009 = vextract.high.u32 %v3007
        %v3010 = vmul.u32.u64.compose %v3006, %v3001
        %v3011 = vextract.low.u32 %v3010
        %v3012 = vextract.high.u32 %v3010
        %v3013 = vmul.u32 %v3006, %v2997
        %v3014 = vadd.s32 %v3009, %v3011
        %vm3015 = vc.u32 %v3009, %v3011
        %v3016 = vadd.s32 %v3012, 1
        %v3017 = vsel %vm3015, %v3016, %v3012
        %v3018 = vadd.s32 %v3013, %v3017
        %v3019 = vadd.s32 %v3018, 536870912
        %v3020 = vshrl.u32 %v3019, 30
        %v3021 = vshll.u32 %v3020, 30
        %v3022 = vsub.s32 %v3018, %v3021
        %vm3023 = vcmp.lt.s32.totalorder %v3022, 0
        %v3024 = vsub.s32 0, %v3022
        %v3025 = vsel %vm3023, %v3024, %v3022
        %v3026 = vclz %v3025
        %v3027 = vsub.s32 %v3026, 2
        %vm3028 = vcmp.gt.s32.totalorder 0, %v3027
        %v3029 = vsel %vm3028, 0, %v3027
        %v3030 = vsub.s32 32, %v3029
        %v3031 = vshll.u32 %v3022, %v3029
        %v3032 = vshrl.u32 %v3014, %v3030
        %v3033 = vor.u32 %v3031, %v3032
        %v3034 = vsub.s32 4294967266, %v3029
        %v3035 = vadd.s32 %v3034, 127
        %v3036 = vshll.u32 %v3035, 23
        %v3037 = vor.u32 4788187, %v3036
        %v3038 = vand.u32 2147483647, %v3037
        %v3040 = vcvt.s32.f32 %v3033
        %v3041 = vmul.f32 %v3040, %v3038
        %v3042 = vxor.u32 %v3041, 2147483648
        %v3043 = vsel %vm2960, %v3042, %v3041
        %v3044 = vsub.s32 4, %v3020
        %v3045 = vsel %vm2960, %v3044, %v3020
        %v3046 = vsel %vm2959, %v1706, %v3043
        %v3047 = vsel %vm2959, 0, %v3045
        %v3048 = vcosq.f32.pop %v3046
        %v3049 = vsinq.f32.pop %v3046
        %vm3050 = vweird.f32 %v1706
        %v3051 = vadd.s32 %v3047, 3
        %v3052 = vand.u32 %v3051, 3
        %vm3053 = vcmp.lt.s32.totalorder %v3052, 2
        %vm3054 = vcmp.eq.s32.totalorder %v3052, 0
        %v3055 = vxor.u32 %v3049, 2147483648
        %v3056 = vsel %vm3054, %v3048, %v3055
        %vm3057 = vcmp.eq.s32.totalorder %v3052, 2
        %v3058 = vxor.u32 %v3048, 2147483648
        %v3059 = vsel %vm3057, %v3058, %v3049
        %v3060 = vsel %vm3053, %v3056, %v3059
        %v3061 = vsel %vm3050, nan, %v3060
        %v3062 = vand.u32 2147483647, %v1707
        %vm3063 = vcmp.le.f32.partialorder %v3062, 0.7853982
        %vm3064 = vcmp.lt.s32.totalorder %v1707, 0
        %v3065 = vand.u32 %v1707, 2139095040
        %v3066 = vshrl.u32 %v3065, 23
        %v3067 = vsub.s32 %v3066, 127
        %v3068 = vand.u32 2147483647, %v1707
        %v3069 = vand.u32 %v3068, 8388607
        %v3070 = vor.u32 %v3069, 8388608
        %v3071 = vsub.s32 0, %v3070
        %v3072 = vadd.s32 %v3067, 1
        %vm3073 = vcmp.gt.s32.totalorder %v3072, 0
        %v3074 = vsel %vm3073, %v3072, 0
        %v3075 = vshrl.u32 %v3074, 5
        %v3076 = vand.u32 %v3074, 31
        %v3077 = vsub.s32 32, %v3076
        %v3078 = vshrl.u32 683565275, %v3077
        %v3079 = vshll.u32 683565275, %v3076
        %v3080 = vshrl.u32 2475754826, %v3077
        %v3081 = vor.u32 %v3079, %v3080
        %v3082 = vshll.u32 2475754826, %v3076
        %v3083 = vshrl.u32 2131351028, %v3077
        %v3084 = vor.u32 %v3082, %v3083
        %v3085 = vshll.u32 2131351028, %v3076
        %v3086 = vshrl.u32 2102212464, %v3077
        %v3087 = vor.u32 %v3085, %v3086
        %v3088 = vshll.u32 2102212464, %v3076
        %v3089 = vshrl.u32 920167782, %v3077
        %v3090 = vor.u32 %v3088, %v3089
        %v3091 = vshll.u32 920167782, %v3076
        %v3092 = vshrl.u32 1326507024, %v3077
        %v3093 = vor.u32 %v3091, %v3092
        %vm3094 = vcmp.lt.s32.totalorder %v3075, 1
        %vm3095 = vcmp.lt.s32.totalorder %v3075, 2
        %vm3096 = vcmp.lt.s32.totalorder %v3075, 3
        %vm3097 = vcmp.lt.s32.totalorder %v3075, 4
        %v3098 = vsel %vm3094, %v3078, %v3081
        %v3099 = vsel %vm3097, %v3087, 2102212464
        %v3100 = vsel %vm3096, %v3084, %v3099
        %v3101 = vsel %vm3095, %v3098, %v3100
        %v3102 = vsel %vm3094, %v3081, %v3084
        %v3103 = vsel %vm3097, %v3090, 920167782
        %v3104 = vsel %vm3096, %v3087, %v3103
        %v3105 = vsel %vm3095, %v3102, %v3104
        %v3106 = vsel %vm3094, %v3084, %v3087
        %v3107 = vsel %vm3097, %v3093, 1326507024
        %v3108 = vsel %vm3096, %v3090, %v3107
        %v3109 = vsel %vm3095, %v3106, %v3108
        %v3110 = vshll.u32 %v3070, 8
        %v3111 = vmul.u32.u64.compose %v3110, %v3109
        %v3112 = vextract.low.u32 %v3111
        %v3113 = vextract.high.u32 %v3111
        %v3114 = vmul.u32.u64.compose %v3110, %v3105
        %v3115 = vextract.low.u32 %v3114
        %v3116 = vextract.high.u32 %v3114
        %v3117 = vmul.u32 %v3110, %v3101
        %v3118 = vadd.s32 %v3113, %v3115
        %vm3119 = vc.u32 %v3113, %v3115
        %v3120 = vadd.s32 %v3116, 1
        %v3121 = vsel %vm3119, %v3120, %v3116
        %v3122 = vadd.s32 %v3117, %v3121
        %v3123 = vadd.s32 %v3122, 536870912
        %v3124 = vshrl.u32 %v3123, 30
        %v3125 = vshll.u32 %v3124, 30
        %v3126 = vsub.s32 %v3122, %v3125
        %vm3127 = vcmp.lt.s32.totalorder %v3126, 0
        %v3128 = vsub.s32 0, %v3126
        %v3129 = vsel %vm3127, %v3128, %v3126
        %v3130 = vclz %v3129
        %v3131 = vsub.s32 %v3130, 2
        %vm3132 = vcmp.gt.s32.totalorder 0, %v3131
        %v3133 = vsel %vm3132, 0, %v3131
        %v3134 = vsub.s32 32, %v3133
        %v3135 = vshll.u32 %v3126, %v3133
        %v3136 = vshrl.u32 %v3118, %v3134
        %v3137 = vor.u32 %v3135, %v3136
        %v3138 = vsub.s32 4294967266, %v3133
        %v3139 = vadd.s32 %v3138, 127
        %v3140 = vshll.u32 %v3139, 23
        %v3141 = vor.u32 4788187, %v3140
        %v3142 = vand.u32 2147483647, %v3141
        %v3144 = vcvt.s32.f32 %v3137
        %v3145 = vmul.f32 %v3144, %v3142
        %v3146 = vxor.u32 %v3145, 2147483648
        %v3147 = vsel %vm3064, %v3146, %v3145
        %v3148 = vsub.s32 4, %v3124
        %v3149 = vsel %vm3064, %v3148, %v3124
        %v3150 = vsel %vm3063, %v1707, %v3147
        %v3151 = vsel %vm3063, 0, %v3149
        %v3152 = vcosq.f32.pop %v3150
        %v3153 = vsinq.f32.pop %v3150
        %vm3154 = vweird.f32 %v1707
        %v3155 = vadd.s32 %v3151, 3
        %v3156 = vand.u32 %v3155, 3
        %vm3157 = vcmp.lt.s32.totalorder %v3156, 2
        %vm3158 = vcmp.eq.s32.totalorder %v3156, 0
        %v3159 = vxor.u32 %v3153, 2147483648
        %v3160 = vsel %vm3158, %v3152, %v3159
        %vm3161 = vcmp.eq.s32.totalorder %v3156, 2
        %v3162 = vxor.u32 %v3152, 2147483648
        %v3163 = vsel %vm3161, %v3162, %v3153
        %v3164 = vsel %vm3157, %v3160, %v3163
        %v3165 = vsel %vm3154, nan, %v3164
        %v3166 = vand.u32 2147483647, %v1708
        %vm3167 = vcmp.le.f32.partialorder %v3166, 0.7853982
        %vm3168 = vcmp.lt.s32.totalorder %v1708, 0
        %v3169 = vand.u32 %v1708, 2139095040
        %v3170 = vshrl.u32 %v3169, 23
        %v3171 = vsub.s32 %v3170, 127
        %v3172 = vand.u32 2147483647, %v1708
        %v3173 = vand.u32 %v3172, 8388607
        %v3174 = vor.u32 %v3173, 8388608
        %v3175 = vsub.s32 0, %v3174
        %v3176 = vadd.s32 %v3171, 1
        %vm3177 = vcmp.gt.s32.totalorder %v3176, 0
        %v3178 = vsel %vm3177, %v3176, 0
        %v3179 = vshrl.u32 %v3178, 5
        %v3180 = vand.u32 %v3178, 31
        %v3181 = vsub.s32 32, %v3180
        %v3182 = vshrl.u32 683565275, %v3181
        %v3183 = vshll.u32 683565275, %v3180
        %v3184 = vshrl.u32 2475754826, %v3181
        %v3185 = vor.u32 %v3183, %v3184
        %v3186 = vshll.u32 2475754826, %v3180
        %v3187 = vshrl.u32 2131351028, %v3181
        %v3188 = vor.u32 %v3186, %v3187
        %v3189 = vshll.u32 2131351028, %v3180
        %v3190 = vshrl.u32 2102212464, %v3181
        %v3191 = vor.u32 %v3189, %v3190
        %v3192 = vshll.u32 2102212464, %v3180
        %v3193 = vshrl.u32 920167782, %v3181
        %v3194 = vor.u32 %v3192, %v3193
        %v3195 = vshll.u32 920167782, %v3180
        %v3196 = vshrl.u32 1326507024, %v3181
        %v3197 = vor.u32 %v3195, %v3196
        %vm3198 = vcmp.lt.s32.totalorder %v3179, 1
        %vm3199 = vcmp.lt.s32.totalorder %v3179, 2
        %vm3200 = vcmp.lt.s32.totalorder %v3179, 3
        %vm3201 = vcmp.lt.s32.totalorder %v3179, 4
        %v3202 = vsel %vm3198, %v3182, %v3185
        %v3203 = vsel %vm3201, %v3191, 2102212464
        %v3204 = vsel %vm3200, %v3188, %v3203
        %v3205 = vsel %vm3199, %v3202, %v3204
        %v3206 = vsel %vm3198, %v3185, %v3188
        %v3207 = vsel %vm3201, %v3194, 920167782
        %v3208 = vsel %vm3200, %v3191, %v3207
        %v3209 = vsel %vm3199, %v3206, %v3208
        %v3210 = vsel %vm3198, %v3188, %v3191
        %v3211 = vsel %vm3201, %v3197, 1326507024
        %v3212 = vsel %vm3200, %v3194, %v3211
        %v3213 = vsel %vm3199, %v3210, %v3212
        %v3214 = vshll.u32 %v3174, 8
        %v3215 = vmul.u32.u64.compose %v3214, %v3213
        %v3216 = vextract.low.u32 %v3215
        %v3217 = vextract.high.u32 %v3215
        %v3218 = vmul.u32.u64.compose %v3214, %v3209
        %v3219 = vextract.low.u32 %v3218
        %v3220 = vextract.high.u32 %v3218
        %v3221 = vmul.u32 %v3214, %v3205
        %v3222 = vadd.s32 %v3217, %v3219
        %vm3223 = vc.u32 %v3217, %v3219
        %v3224 = vadd.s32 %v3220, 1
        %v3225 = vsel %vm3223, %v3224, %v3220
        %v3226 = vadd.s32 %v3221, %v3225
        %v3227 = vadd.s32 %v3226, 536870912
        %v3228 = vshrl.u32 %v3227, 30
        %v3229 = vshll.u32 %v3228, 30
        %v3230 = vsub.s32 %v3226, %v3229
        %vm3231 = vcmp.lt.s32.totalorder %v3230, 0
        %v3232 = vsub.s32 0, %v3230
        %v3233 = vsel %vm3231, %v3232, %v3230
        %v3234 = vclz %v3233
        %v3235 = vsub.s32 %v3234, 2
        %vm3236 = vcmp.gt.s32.totalorder 0, %v3235
        %v3237 = vsel %vm3236, 0, %v3235
        %v3238 = vsub.s32 32, %v3237
        %v3239 = vshll.u32 %v3230, %v3237
        %v3240 = vshrl.u32 %v3222, %v3238
        %v3241 = vor.u32 %v3239, %v3240
        %v3242 = vsub.s32 4294967266, %v3237
        %v3243 = vadd.s32 %v3242, 127
        %v3244 = vshll.u32 %v3243, 23
        %v3245 = vor.u32 4788187, %v3244
        %v3246 = vand.u32 2147483647, %v3245
        %v3248 = vcvt.s32.f32 %v3241
        %v3249 = vmul.f32 %v3248, %v3246
        %v3250 = vxor.u32 %v3249, 2147483648
        %v3251 = vsel %vm3168, %v3250, %v3249
        %v3252 = vsub.s32 4, %v3228
        %v3253 = vsel %vm3168, %v3252, %v3228
        %v3254 = vsel %vm3167, %v1708, %v3251
        %v3255 = vsel %vm3167, 0, %v3253
        %v3256 = vcosq.f32.pop %v3254
        %v3257 = vsinq.f32.pop %v3254
        %vm3258 = vweird.f32 %v1708
        %v3259 = vadd.s32 %v3255, 3
        %v3260 = vand.u32 %v3259, 3
        %vm3261 = vcmp.lt.s32.totalorder %v3260, 2
        %vm3262 = vcmp.eq.s32.totalorder %v3260, 0
        %v3263 = vxor.u32 %v3257, 2147483648
        %v3264 = vsel %vm3262, %v3256, %v3263
        %vm3265 = vcmp.eq.s32.totalorder %v3260, 2
        %v3266 = vxor.u32 %v3256, 2147483648
        %v3267 = vsel %vm3265, %v3266, %v3257
        %v3268 = vsel %vm3261, %v3264, %v3267
        %v3269 = vsel %vm3258, nan, %v3268
        %v3270 = vand.u32 2147483647, %v1709
        %vm3271 = vcmp.le.f32.partialorder %v3270, 0.7853982
        %vm3272 = vcmp.lt.s32.totalorder %v1709, 0
        %v3273 = vand.u32 %v1709, 2139095040
        %v3274 = vshrl.u32 %v3273, 23
        %v3275 = vsub.s32 %v3274, 127
        %v3276 = vand.u32 2147483647, %v1709
        %v3277 = vand.u32 %v3276, 8388607
        %v3278 = vor.u32 %v3277, 8388608
        %v3279 = vsub.s32 0, %v3278
        %v3280 = vadd.s32 %v3275, 1
        %vm3281 = vcmp.gt.s32.totalorder %v3280, 0
        %v3282 = vsel %vm3281, %v3280, 0
        %v3283 = vshrl.u32 %v3282, 5
        %v3284 = vand.u32 %v3282, 31
        %v3285 = vsub.s32 32, %v3284
        %v3286 = vshrl.u32 683565275, %v3285
        %v3287 = vshll.u32 683565275, %v3284
        %v3288 = vshrl.u32 2475754826, %v3285
        %v3289 = vor.u32 %v3287, %v3288
        %v3290 = vshll.u32 2475754826, %v3284
        %v3291 = vshrl.u32 2131351028, %v3285
        %v3292 = vor.u32 %v3290, %v3291
        %v3293 = vshll.u32 2131351028, %v3284
        %v3294 = vshrl.u32 2102212464, %v3285
        %v3295 = vor.u32 %v3293, %v3294
        %v3296 = vshll.u32 2102212464, %v3284
        %v3297 = vshrl.u32 920167782, %v3285
        %v3298 = vor.u32 %v3296, %v3297
        %v3299 = vshll.u32 920167782, %v3284
        %v3300 = vshrl.u32 1326507024, %v3285
        %v3301 = vor.u32 %v3299, %v3300
        %vm3302 = vcmp.lt.s32.totalorder %v3283, 1
        %vm3303 = vcmp.lt.s32.totalorder %v3283, 2
        %vm3304 = vcmp.lt.s32.totalorder %v3283, 3
        %vm3305 = vcmp.lt.s32.totalorder %v3283, 4
        %v3306 = vsel %vm3302, %v3286, %v3289
        %v3307 = vsel %vm3305, %v3295, 2102212464
        %v3308 = vsel %vm3304, %v3292, %v3307
        %v3309 = vsel %vm3303, %v3306, %v3308
        %v3310 = vsel %vm3302, %v3289, %v3292
        %v3311 = vsel %vm3305, %v3298, 920167782
        %v3312 = vsel %vm3304, %v3295, %v3311
        %v3313 = vsel %vm3303, %v3310, %v3312
        %v3314 = vsel %vm3302, %v3292, %v3295
        %v3315 = vsel %vm3305, %v3301, 1326507024
        %v3316 = vsel %vm3304, %v3298, %v3315
        %v3317 = vsel %vm3303, %v3314, %v3316
        %v3318 = vshll.u32 %v3278, 8
        %v3319 = vmul.u32.u64.compose %v3318, %v3317
        %v3320 = vextract.low.u32 %v3319
        %v3321 = vextract.high.u32 %v3319
        %v3322 = vmul.u32.u64.compose %v3318, %v3313
        %v3323 = vextract.low.u32 %v3322
        %v3324 = vextract.high.u32 %v3322
        %v3325 = vmul.u32 %v3318, %v3309
        %v3326 = vadd.s32 %v3321, %v3323
        %vm3327 = vc.u32 %v3321, %v3323
        %v3328 = vadd.s32 %v3324, 1
        %v3329 = vsel %vm3327, %v3328, %v3324
        %v3330 = vadd.s32 %v3325, %v3329
        %v3331 = vadd.s32 %v3330, 536870912
        %v3332 = vshrl.u32 %v3331, 30
        %v3333 = vshll.u32 %v3332, 30
        %v3334 = vsub.s32 %v3330, %v3333
        %vm3335 = vcmp.lt.s32.totalorder %v3334, 0
        %v3336 = vsub.s32 0, %v3334
        %v3337 = vsel %vm3335, %v3336, %v3334
        %v3338 = vclz %v3337
        %v3339 = vsub.s32 %v3338, 2
        %vm3340 = vcmp.gt.s32.totalorder 0, %v3339
        %v3341 = vsel %vm3340, 0, %v3339
        %v3342 = vsub.s32 32, %v3341
        %v3343 = vshll.u32 %v3334, %v3341
        %v3344 = vshrl.u32 %v3326, %v3342
        %v3345 = vor.u32 %v3343, %v3344
        %v3346 = vsub.s32 4294967266, %v3341
        %v3347 = vadd.s32 %v3346, 127
        %v3348 = vshll.u32 %v3347, 23
        %v3349 = vor.u32 4788187, %v3348
        %v3350 = vand.u32 2147483647, %v3349
        %v3352 = vcvt.s32.f32 %v3345
        %v3353 = vmul.f32 %v3352, %v3350
        %v3354 = vxor.u32 %v3353, 2147483648
        %v3355 = vsel %vm3272, %v3354, %v3353
        %v3356 = vsub.s32 4, %v3332
        %v3357 = vsel %vm3272, %v3356, %v3332
        %v3358 = vsel %vm3271, %v1709, %v3355
        %v3359 = vsel %vm3271, 0, %v3357
        %v3360 = vcosq.f32.pop %v3358
        %v3361 = vsinq.f32.pop %v3358
        %vm3362 = vweird.f32 %v1709
        %v3363 = vadd.s32 %v3359, 3
        %v3364 = vand.u32 %v3363, 3
        %vm3365 = vcmp.lt.s32.totalorder %v3364, 2
        %vm3366 = vcmp.eq.s32.totalorder %v3364, 0
        %v3367 = vxor.u32 %v3361, 2147483648
        %v3368 = vsel %vm3366, %v3360, %v3367
        %vm3369 = vcmp.eq.s32.totalorder %v3364, 2
        %v3370 = vxor.u32 %v3360, 2147483648
        %v3371 = vsel %vm3369, %v3370, %v3361
        %v3372 = vsel %vm3365, %v3368, %v3371
        %v3373 = vsel %vm3362, nan, %v3372
        %v3374 = vmul.f32 %v1813, %v1109
        %v3375 = vmul.f32 %v1917, %v1111
        %v3376 = vmul.f32 %v2021, %v1180
        %v3377 = vmul.f32 %v2125, %v1182
        %v3378 = vmul.f32 %v2229, %v1251
        %v3379 = vmul.f32 %v2333, %v1253
        %v3380 = vmul.f32 %v2437, %v1322
        %v3381 = vmul.f32 %v2541, %v1324
        %v3382 = vmul.f32 %v2645, %v1393
        %v3383 = vmul.f32 %v2749, %v1395
        %v3384 = vmul.f32 %v2853, %v1464
        %v3385 = vmul.f32 %v2957, %v1466
        %v3386 = vmul.f32 %v3061, %v1535
        %v3387 = vmul.f32 %v3165, %v1537
        %v3388 = vmul.f32 %v3269, %v1606
        %v3389 = vmul.f32 %v3373, %v1608
        %3390 = vst [vmem:[%s212] sm:$0xff] %v3374
        %3391 = vst [vmem:[%s212 + $0x8] sm:$0xff] %v3375
        %3392 = vst [vmem:[%s212 + $0x10] sm:$0xff] %v3376
        %3393 = vst [vmem:[%s212 + $0x18] sm:$0xff] %v3377
        %3394 = vst [vmem:[%s212 + $0x20] sm:$0xff] %v3378
        %3395 = vst [vmem:[%s212 + $0x28] sm:$0xff] %v3379
        %3396 = vst [vmem:[%s212 + $0x30] sm:$0xff] %v3380
        %3397 = vst [vmem:[%s212 + $0x38] sm:$0xff] %v3381
        %3398 = vst [vmem:[%s212 + $0x40] sm:$0xff] %v3382
        %3399 = vst [vmem:[%s212 + $0x48] sm:$0xff] %v3383
        %3400 = vst [vmem:[%s212 + $0x50] sm:$0xff] %v3384
        %3401 = vst [vmem:[%s212 + $0x58] sm:$0xff] %v3385
        %3402 = vst [vmem:[%s212 + $0x60] sm:$0xff] %v3386
        %3403 = vst [vmem:[%s212 + $0x68] sm:$0xff] %v3387
        %3404 = vst [vmem:[%s212 + $0x70] sm:$0xff] %v3388
        %3405 = vst [vmem:[%s212 + $0x78] sm:$0xff] %v3389
        %s3406 = sand.u32 %s97, 1
        %s3407 = scalar_lea.sflag [#allocation4], %s3406
        %s3408 = sand.u32 %s97, 1
        %s3409 = smul.addr %s3408, 128
        %s3410 = scalar_lea.vmem [#allocation8], %s3409
        // Predicated region
        $region45: #{tpu_custom_call.1} parent=31 // pred_check
          %p3411 = pneg %p107
        $region46: #{tpu_custom_call.1} parent=31 // pred_check_branch
          %3413 = sbr.rel (%p3411) target = $region48
        $region47: #{tpu_custom_call.1} parent=31 // pred_region
          %s3415 = ssub.s32 2048, 2048
          %3416 = vsyncadd %s3407, %s3415
          %s3417 = smul.addr %s21, 16
          %s3418 = smul.addr %s3417, 128
          %s3419 = scalar_lea.hbm %s3, %s3418
          %s3421 = sshll.u32 %s3410, 4
          %s3422 = int_to_ptr.vmem [resolvable:$true] %s3421
          %3424 = dma.vmem_to_hbm [thread:$0]  %s3422, 2048, %s3419, %s3407
        $region48: #{tpu_custom_call.1} parent=31 // pred_fallthru
          _
      $region32: #{tpu_custom_call.1} parent=5 // pred_fallthru
        _
      %p3425 = scmp.le.s32.totalorder 2, %s16
      // Predicated region
      $region49: #{tpu_custom_call.1} parent=5 // pred_check
        %p3426 = pneg %p3425
      $region50: #{tpu_custom_call.1} parent=5 // pred_check_branch
        %3428 = sbr.rel (%p3426) target = $region52
      $region51: #{tpu_custom_call.1} parent=5 // pred_region
        %s3429 = ssub.s32 %s16, 2
        // Predicated region
        $region53: #{tpu_custom_call.1} parent=51 // pred_check
          %p3430 = pneg %p113
        $region54: #{tpu_custom_call.1} parent=51 // pred_check_branch
          %3432 = sbr.rel (%p3430) target = $region56
        $region55: #{tpu_custom_call.1} parent=51 // pred_region
          %s3433 = sand.u32 %s98, 1
          %s3434 = scalar_lea.sflag [#allocation4], %s3433
          %s3435 = sand.u32 %s98, 1
          %s3436 = smul.addr %s3435, 128
          %s3437 = scalar_lea.vmem [#allocation8], %s3436
          %3438 = dma.done %s3434, 2048
        $region56: #{tpu_custom_call.1} parent=51 // pred_fallthru
          _
      $region52: #{tpu_custom_call.1} parent=5 // pred_fallthru
        _
    $region6: #{tpu_custom_call.1} parent=1 // loop_footer
      %s20 = sadd.s32 1, %s16
    $region7: #{tpu_custom_call.1} parent=1 // loop_footer_branch
      %15 = sbr.rel target = $region3
    $region8: #{tpu_custom_call.1} parent=1 // loop_exit
      _
    %3439 = vsyncpa [#allocation3], 1
    %s3440 = scalar_lea.sflag [#allocation3], 1
    %3441 = vsyncpa %s3440, 1
    %3442 = vsyncpa [#allocation6], 1
    %3443 = vsyncpa [#allocation4], 1
    %s3444 = scalar_lea.sflag [#allocation4], 1
    %3445 = vsyncpa %s3444, 1

</llo_original>
